<compile_context>
chip_gen: v7x
topology: tpu7x:2x2x1
jax: 0.10.0
libtpu: 0.0.40
codegen_flags: <defaults>
</compile_context>

<pallas_src>
import functools
import numpy as np
import jax
import jax.numpy as jnp
from jax.experimental import pallas as pl
from jax.experimental.pallas import tpu as pltpu

EPS = 1.19e-07        # torch clamp epsilon used in the module
BN_EPS = 1e-5         # torch.nn.BatchNorm1d default eps
N_LOC = 252           # nn.Embedding(252, loc_embedding)
N_LOC_PAD = 256       # embedding rows padded to a multiple of 8 (zero rows)
MM_PREC = jax.lax.Precision.HIGHEST


def _recip(x):
    """EUP approximate reciprocal + one Newton step (~f32 accurate, 2 VALU ops)."""
    r = pl.reciprocal(x, approx=True)
    return r * (2.0 - x * r)


def _lgamma_pos(x):
    """Lanczos (Numerical-Recipes gammln) lgamma for x > 0.

    The six series reciprocals are independent (no serial y += 1 chain) so they
    pipeline through the EUP; the contributions are tree-summed; the final
    log(sqrt(2*pi)*ser/x) is split into two independent logs."""
    c = (76.18009172947146, -86.50532032941677, 24.01409824083091,
         -1.231739572450155, 0.1208650973866179e-2, -0.5395239384953e-5)
    tmp = x + 5.5
    tmp = tmp - (x + 0.5) * jnp.log(tmp)
    t0 = c[0] * _recip(x + 1.0)
    t1 = c[1] * _recip(x + 2.0)
    t2 = c[2] * _recip(x + 3.0)
    t3 = c[3] * _recip(x + 4.0)
    t4 = c[4] * _recip(x + 5.0)
    t5 = c[5] * _recip(x + 6.0)
    ser = 1.000000000190015 + ((t0 + t1) + (t2 + t3)) + (t4 + t5)
    return -tmp + jnp.log(2.5066282746310005 * ser) - jnp.log(x)


def _softplus(x):
    """torch.nn.Softplus(beta=1, threshold=20) with an accurate log1p
    (Goldberg trick); the divide is an EUP approx reciprocal + Newton step."""
    t = jnp.exp(jnp.minimum(x, 20.0))
    u = 1.0 + t
    lp = jnp.where(u == 1.0, t, jnp.log(u) * (t * _recip(u - 1.0)))
    return jnp.where(x > 20.0, x, lp)


def _bn_train(h, gamma, beta):
    """BatchNorm1d training mode, single-pass batch stats (mean / mean-of-square
    reduce independently and overlap)."""
    mu = jnp.mean(h, axis=0, keepdims=True)
    ms = jnp.mean(h * h, axis=0, keepdims=True)
    var = jnp.maximum(ms - mu * mu, 0.0)
    return (h - mu) * jax.lax.rsqrt(var + BN_EPS) * gamma + beta


def beta_kernel(x_ref, w_ref, pv_ref, kt_ref, loss_ref, *,
                dim, loc_col, d_out, h1, h2, width,
                o_emb, o_w1x, o_w1e, o_w2, o_wh):
    x = x_ref[...]                                       # (B, F) f32
    B, F = x.shape

    # -------- in-kernel feature glue (no activation concats) --------
    y = x[:, dim:dim + 1]                                # (B, 1) target column
    loc_idx = x[:, loc_col:loc_col + 1].astype(jnp.int32)  # torch-style trunc cast
    iota = jax.lax.broadcasted_iota(jnp.int32, (B, N_LOC_PAD), 1)
    onehot = (iota == loc_idx).astype(jnp.float32)       # (B, 256)

    # Embedding lookup as a one-hot matmul on the (otherwise idle) MXU.
    # Columns >= loc_embedding of the slab block are zero, so emb is (B, width)
    # with zero padding lanes — it multiplies the padded w1e block directly.
    emb = jnp.dot(onehot, w_ref[o_emb:o_emb + N_LOC_PAD, :],
                  precision=MM_PREC, preferred_element_type=jnp.float32)

    # -------- trunk: linear -> batchnorm(train) -> relu, twice --------
    # linear1 is split: w1x has zero rows at the target and loc columns of x,
    # so no column-select / concat of the activations is needed.
    h = (jnp.dot(x, w_ref[o_w1x:o_w1x + F, 0:h1],
                 precision=MM_PREC, preferred_element_type=jnp.float32)
         + jnp.dot(emb, w_ref[o_w1e:o_w1e + width, 0:h1],
                   precision=MM_PREC, preferred_element_type=jnp.float32)
         + pv_ref[0:1, 0:h1])
    h = jnp.maximum(_bn_train(h, pv_ref[1:2, 0:h1], pv_ref[2:3, 0:h1]), 0.0)

    h = (jnp.dot(h, w_ref[o_w2:o_w2 + h1, 0:h2],
                 precision=MM_PREC, preferred_element_type=jnp.float32)
         + pv_ref[3:4, 0:h2])
    h = jnp.maximum(_bn_train(h, pv_ref[4:5, 0:h2], pv_ref[5:6, 0:h2]), 0.0)

    # -------- fused head: [k | theta] in one matmul --------
    kt = _softplus(jnp.dot(h, w_ref[o_wh:o_wh + h2, 0:2 * d_out],
                           precision=MM_PREC, preferred_element_type=jnp.float32)
                   + pv_ref[6:7, 0:2 * d_out])
    kt = jnp.maximum(kt, EPS)
    kt_ref[...] = kt                                     # (B, 2*D_out)

    # -------- Beta(k, theta) negative mean log-prob --------
    # Two independent lgamma calls (their chains overlap); no [k|t|k+t] concat.
    k_plus_t = kt[:, :d_out] + kt[:, d_out:]             # (B, D_out)
    lg_kt = _lgamma_pos(kt)                              # lgamma(k) | lgamma(theta)
    lg_s = _lgamma_pos(k_plus_t)                         # lgamma(k + theta)

    yv = jnp.clip(y, EPS, 1.0 - EPS)                     # (B, 1)
    lane = jax.lax.broadcasted_iota(jnp.int32, (B, 2 * d_out), 1)
    logy = jnp.where(lane < d_out, jnp.log(yv), jnp.log(1.0 - yv))  # [log y | log(1-y)]

    total = (jnp.sum((kt - 1.0) * logy - lg_kt, axis=(0, 1), keepdims=True)
             + jnp.sum(lg_s, axis=(0, 1), keepdims=True))            # (1, 1)
    # (1,1) VMEM output; negligible at this size — switch to an SMEM scalar
    # output on the scale-up path.
    loss_ref[...] = -total * (1.0 / (B * d_out))


def init_params(key, D_in, H1, H2, D_out, loc_embedding):
    """PyTorch-style init: uniform fan-in for linears, N(0,1) embedding."""
    ks = jax.random.split(key, 5)

    def lin(k, fan_in, fan_out):
        bound = 1.0 / np.sqrt(fan_in)
        kw, kb = jax.random.split(k)
        w = jax.random.uniform(kw, (fan_in, fan_out), jnp.float32, -bound, bound)
        b = jax.random.uniform(kb, (1, fan_out), jnp.float32, -bound, bound)
        return w, b

    p = {}
    p["w1"], p["b1"] = lin(ks[0], D_in, H1)
    p["w2"], p["b2"] = lin(ks[1], H1, H2)
    p["wk"], p["bk"] = lin(ks[2], H2, D_out)
    p["wt"], p["bt"] = lin(ks[3], H2, D_out)
    p["g1"] = jnp.ones((1, H1), jnp.float32)
    p["be1"] = jnp.zeros((1, H1), jnp.float32)
    p["g2"] = jnp.ones((1, H2), jnp.float32)
    p["be2"] = jnp.zeros((1, H2), jnp.float32)
    p["emb"] = jax.random.normal(ks[4], (N_LOC, loc_embedding), jnp.float32)
    return p


def _rup(n, m=8):
    return ((n + m - 1) // m) * m


def pack_params(p, F, dim):
    """Pack all parameters into TWO kernel refs (minimal DMA descriptors):
       * weight slab (R, W): emb / w1x / w1e / w2 / wh row blocks at 8-aligned
         row offsets, zero padded;
       * vector slab (8, W): biases, BN gammas/betas, head bias as rows."""
    E = p["emb"].shape[1]
    D_in, H1 = p["w1"].shape
    H2 = p["w2"].shape[1]
    D_out = p["wk"].shape[1]
    n_feats = F - 2
    assert D_in == n_feats + E, "D_in must equal (F - 2) + loc_embedding"
    W = max(H1, H2, 2 * D_out, E)
    loc_col = F - 2 if dim == F - 1 else F - 1

    w1_np = np.asarray(p["w1"], np.float32)
    # linear1 feature-part weight re-indexed to act on raw x columns: zero rows
    # at the target column `dim` and the loc-index column.
    w1x = np.zeros((F, H1), np.float32)
    feat_cols = [c for c in range(F) if c != dim and c != loc_col]
    for pos, c in enumerate(feat_cols):
        w1x[c] = w1_np[pos]
    # linear1 embedding-part weight, row-padded to W so the (B, W) embedding
    # output multiplies it without any lane slicing.
    w1e = np.zeros((W, H1), np.float32)
    w1e[:E] = w1_np[n_feats:n_feats + E]

    emb = np.asarray(p["emb"], np.float32)
    w2 = np.asarray(p["w2"], np.float32)
    wh = np.concatenate([np.asarray(p["wk"], np.float32),
                         np.asarray(p["wt"], np.float32)], axis=1)

    blocks = [("emb", emb, N_LOC_PAD), ("w1x", w1x, _rup(F)), ("w1e", w1e, _rup(W)),
              ("w2", w2, _rup(H1)), ("wh", wh, _rup(H2))]
    offs, rows = {}, 0
    for name, _, nr in blocks:
        offs[name] = rows
        rows += nr
    slab = np.zeros((rows, W), np.float32)
    for name, arr, _ in blocks:
        r, c = arr.shape
        slab[offs[name]:offs[name] + r, :c] = arr

    pv = np.zeros((8, W), np.float32)
    pv[0, :H1] = np.asarray(p["b1"]).reshape(-1)
    pv[1, :H1] = np.asarray(p["g1"]).reshape(-1)
    pv[2, :H1] = np.asarray(p["be1"]).reshape(-1)
    pv[3, :H2] = np.asarray(p["b2"]).reshape(-1)
    pv[4, :H2] = np.asarray(p["g2"]).reshape(-1)
    pv[5, :H2] = np.asarray(p["be2"]).reshape(-1)
    pv[6, :2 * D_out] = np.concatenate([np.asarray(p["bk"]).reshape(-1),
                                        np.asarray(p["bt"]).reshape(-1)])

    meta = dict(H1=H1, H2=H2, D_out=D_out, E=E, W=W, loc_col=loc_col, offs=offs)
    return jnp.asarray(slab), jnp.asarray(pv), meta


def beta_forward(x, wslab, pvec, *, meta, dim):
    B, F = x.shape
    H1, H2, D_out, W = meta["H1"], meta["H2"], meta["D_out"], meta["W"]
    offs = meta["offs"]

    vmem = pl.BlockSpec(memory_space=pltpu.MemorySpace.VMEM)

    # Advisory cost estimate so XLA schedules neighbouring ops around the call.
    flops = int(2 * B * (N_LOC_PAD * W + F * H1 + W * H1 + H1 * H2 + H2 * 2 * D_out)
                + 20 * B * (H1 + H2))
    transcendentals = int(B * (10 * 3 * D_out + 4 * 2 * D_out + 2) + 2 * (H1 + H2))
    bytes_accessed = int(4 * (x.size + wslab.size + pvec.size + B * 2 * D_out + 1))

    kernel = functools.partial(
        beta_kernel, dim=dim, loc_col=meta["loc_col"], d_out=D_out,
        h1=H1, h2=H2, width=W,
        o_emb=offs["emb"], o_w1x=offs["w1x"], o_w1e=offs["w1e"],
        o_w2=offs["w2"], o_wh=offs["wh"])

    kt, loss = pl.pallas_call(
        kernel,
        out_shape=(jax.ShapeDtypeStruct((B, 2 * D_out), jnp.float32),   # [k | theta]
                   jax.ShapeDtypeStruct((1, 1), jnp.float32)),          # loss
        in_specs=[vmem, vmem, vmem],
        out_specs=(vmem, vmem),
        compiler_params=pltpu.CompilerParams(vmem_limit_bytes=32 * 1024 * 1024),
        cost_estimate=pl.CostEstimate(flops=flops, transcendentals=transcendentals,
                                      bytes_accessed=bytes_accessed),
    )(x, wslab, pvec)

    # "distribution" is represented by its parameters (k, theta).
    return (kt[:, :D_out], kt[:, D_out:]), loss[0, 0]


if __name__ == "__main__":
    # Small shapes consistent with the module: column `dim` of x is the target
    # y, the last remaining column is the location index.
    B, F = 8, 6
    dim = 0
    loc_embedding = 8
    D_in = (F - 2) + loc_embedding
    H1, H2, D_out = 32, 32, 2

    key = jax.random.PRNGKey(0)
    kx, ky, kl, kp = jax.random.split(key, 4)
    y_col = jax.random.uniform(ky, (B, 1), jnp.float32, 0.05, 0.95)
    feats = jax.random.normal(kx, (B, F - 2), jnp.float32)
    loc = jax.random.randint(kl, (B, 1), 0, N_LOC).astype(jnp.float32)
    x = jnp.concatenate([y_col, feats, loc], axis=1)          # (B, F)

    params = init_params(kp, D_in, H1, H2, D_out, loc_embedding)
    wslab, pvec, meta = pack_params(params, F=F, dim=dim)

    fwd = jax.jit(functools.partial(beta_forward, meta=meta, dim=dim))
    (k, theta), loss = fwd(x, wslab, pvec)
    jax.block_until_ready((k, theta, loss))

    assert k.shape == (B, D_out) and theta.shape == (B, D_out)
    assert bool(jnp.isfinite(loss)) and bool(jnp.all(k >= EPS)) and bool(jnp.all(theta >= EPS))
    print("KERNEL_OK")
</pallas_src>

<mosaic_0001>
module attributes {stable_mosaic.version = 11 : i64} {
  func.func @beta_kernel(%arg0: memref<8x6xf32, #tpu.memory_space<vmem>>, %arg1: memref<360x32xf32, #tpu.memory_space<vmem>>, %arg2: memref<8x32xf32, #tpu.memory_space<vmem>>, %arg3: memref<8x4xf32, #tpu.memory_space<vmem>>, %arg4: memref<1x1xf32, #tpu.memory_space<vmem>>) attributes {dimension_semantics = [], scalar_prefetch = 0 : i64, scratch_operands = 0 : i64, tpu.core_type = #tpu.core_type<tc>} {
    %c0 = arith.constant 0 : index
    %c0_0 = arith.constant 0 : index
    %0 = vector.load %arg0[%c0, %c0_0] : memref<8x6xf32, #tpu.memory_space<vmem>>, vector<8x6xf32>
    %1 = vector.extract_strided_slice %0 {offsets = [0, 0], sizes = [8, 1], strides = [1, 1]} : vector<8x6xf32> to vector<8x1xf32>
    %2 = vector.extract_strided_slice %0 {offsets = [0, 5], sizes = [8, 1], strides = [1, 1]} : vector<8x6xf32> to vector<8x1xf32>
    %3 = arith.fptosi %2 : vector<8x1xf32> to vector<8x1xi32>
    %4 = tpu.iota {dimensions = array<i32: 1>} : vector<8x256xi32>
    %5 = vector.broadcast %3 : vector<8x1xi32> to vector<8x256xi32>
    %6 = arith.cmpi eq, %4, %5 : vector<8x256xi32>
    %7 = arith.extui %6 : vector<8x256xi1> to vector<8x256xi32>
    %8 = arith.sitofp %7 : vector<8x256xi32> to vector<8x256xf32>
    %c0_1 = arith.constant 0 : index
    %c0_2 = arith.constant 0 : index
    %9 = vector.load %arg1[%c0_1, %c0_2] : memref<360x32xf32, #tpu.memory_space<vmem>>, vector<256x32xf32>
    %cst = arith.constant dense<0.000000e+00> : vector<8x32xf32>
    %10 = tpu.matmul %8, %9, %cst {dimension_numbers = #tpu.dot_dimension_numbers<[1], [0], [0], [1], [0, 0, 1, 1], [], []>, precision = #tpu.contract_precision<fp32>} : vector<8x256xf32>, vector<256x32xf32>, vector<8x32xf32> -> vector<8x32xf32>
    %c256 = arith.constant 256 : index
    %c0_3 = arith.constant 0 : index
    %11 = vector.load %arg1[%c256, %c0_3] : memref<360x32xf32, #tpu.memory_space<vmem>>, vector<6x32xf32>
    %cst_4 = arith.constant dense<0.000000e+00> : vector<8x32xf32>
    %12 = tpu.matmul %0, %11, %cst_4 {dimension_numbers = #tpu.dot_dimension_numbers<[1], [0], [0], [1], [0, 0, 1, 1], [], []>, precision = #tpu.contract_precision<fp32>} : vector<8x6xf32>, vector<6x32xf32>, vector<8x32xf32> -> vector<8x32xf32>
    %c264 = arith.constant 264 : index
    %c0_5 = arith.constant 0 : index
    %13 = vector.load %arg1[%c264, %c0_5] : memref<360x32xf32, #tpu.memory_space<vmem>>, vector<32x32xf32>
    %cst_6 = arith.constant dense<0.000000e+00> : vector<8x32xf32>
    %14 = tpu.matmul %10, %13, %cst_6 {dimension_numbers = #tpu.dot_dimension_numbers<[1], [0], [0], [1], [0, 0, 1, 1], [], []>, precision = #tpu.contract_precision<fp32>} : vector<8x32xf32>, vector<32x32xf32>, vector<8x32xf32> -> vector<8x32xf32>
    %15 = arith.addf %12, %14 : vector<8x32xf32>
    %c0_7 = arith.constant 0 : index
    %c0_8 = arith.constant 0 : index
    %16 = vector.load %arg2[%c0_7, %c0_8] : memref<8x32xf32, #tpu.memory_space<vmem>>, vector<1x32xf32>
    %17 = vector.broadcast %16 : vector<1x32xf32> to vector<8x32xf32>
    %18 = arith.addf %15, %17 : vector<8x32xf32>
    %c1 = arith.constant 1 : index
    %c0_9 = arith.constant 0 : index
    %19 = vector.load %arg2[%c1, %c0_9] : memref<8x32xf32, #tpu.memory_space<vmem>>, vector<1x32xf32>
    %c2 = arith.constant 2 : index
    %c0_10 = arith.constant 0 : index
    %20 = vector.load %arg2[%c2, %c0_10] : memref<8x32xf32, #tpu.memory_space<vmem>>, vector<1x32xf32>
    %cst_11 = arith.constant dense<0.000000e+00> : vector<32xf32>
    %21 = vector.multi_reduction <add>, %18, %cst_11 [0] : vector<8x32xf32> to vector<32xf32>
    %22 = vector.shape_cast %21 : vector<32xf32> to vector<1x32xf32>
    %cst_12 = arith.constant 8.000000e+00 : f32
    %23 = vector.broadcast %cst_12 : f32 to vector<1x32xf32>
    %24 = arith.divf %22, %23 : vector<1x32xf32>
    %25 = arith.mulf %18, %18 : vector<8x32xf32>
    %cst_13 = arith.constant dense<0.000000e+00> : vector<32xf32>
    %26 = vector.multi_reduction <add>, %25, %cst_13 [0] : vector<8x32xf32> to vector<32xf32>
    %27 = vector.shape_cast %26 : vector<32xf32> to vector<1x32xf32>
    %cst_14 = arith.constant 8.000000e+00 : f32
    %28 = vector.broadcast %cst_14 : f32 to vector<1x32xf32>
    %29 = arith.divf %27, %28 : vector<1x32xf32>
    %30 = arith.mulf %24, %24 : vector<1x32xf32>
    %31 = arith.subf %29, %30 : vector<1x32xf32>
    %cst_15 = arith.constant 0.000000e+00 : f32
    %32 = vector.broadcast %cst_15 : f32 to vector<1x32xf32>
    %33 = arith.maximumf %31, %32 : vector<1x32xf32>
    %34 = vector.broadcast %24 : vector<1x32xf32> to vector<8x32xf32>
    %35 = arith.subf %18, %34 : vector<8x32xf32>
    %cst_16 = arith.constant 9.99999974E-6 : f32
    %36 = vector.broadcast %cst_16 : f32 to vector<1x32xf32>
    %37 = arith.addf %33, %36 : vector<1x32xf32>
    %38 = math.rsqrt %37 : vector<1x32xf32>
    %39 = vector.broadcast %38 : vector<1x32xf32> to vector<8x32xf32>
    %40 = arith.mulf %35, %39 : vector<8x32xf32>
    %41 = vector.broadcast %19 : vector<1x32xf32> to vector<8x32xf32>
    %42 = arith.mulf %40, %41 : vector<8x32xf32>
    %43 = vector.broadcast %20 : vector<1x32xf32> to vector<8x32xf32>
    %44 = arith.addf %42, %43 : vector<8x32xf32>
    %cst_17 = arith.constant 0.000000e+00 : f32
    %45 = vector.broadcast %cst_17 : f32 to vector<8x32xf32>
    %46 = arith.maximumf %44, %45 : vector<8x32xf32>
    %c296 = arith.constant 296 : index
    %c0_18 = arith.constant 0 : index
    %47 = vector.load %arg1[%c296, %c0_18] : memref<360x32xf32, #tpu.memory_space<vmem>>, vector<32x32xf32>
    %cst_19 = arith.constant dense<0.000000e+00> : vector<8x32xf32>
    %48 = tpu.matmul %46, %47, %cst_19 {dimension_numbers = #tpu.dot_dimension_numbers<[1], [0], [0], [1], [0, 0, 1, 1], [], []>, precision = #tpu.contract_precision<fp32>} : vector<8x32xf32>, vector<32x32xf32>, vector<8x32xf32> -> vector<8x32xf32>
    %c3 = arith.constant 3 : index
    %c0_20 = arith.constant 0 : index
    %49 = vector.load %arg2[%c3, %c0_20] : memref<8x32xf32, #tpu.memory_space<vmem>>, vector<1x32xf32>
    %50 = vector.broadcast %49 : vector<1x32xf32> to vector<8x32xf32>
    %51 = arith.addf %48, %50 : vector<8x32xf32>
    %c4 = arith.constant 4 : index
    %c0_21 = arith.constant 0 : index
    %52 = vector.load %arg2[%c4, %c0_21] : memref<8x32xf32, #tpu.memory_space<vmem>>, vector<1x32xf32>
    %c5 = arith.constant 5 : index
    %c0_22 = arith.constant 0 : index
    %53 = vector.load %arg2[%c5, %c0_22] : memref<8x32xf32, #tpu.memory_space<vmem>>, vector<1x32xf32>
    %cst_23 = arith.constant dense<0.000000e+00> : vector<32xf32>
    %54 = vector.multi_reduction <add>, %51, %cst_23 [0] : vector<8x32xf32> to vector<32xf32>
    %55 = vector.shape_cast %54 : vector<32xf32> to vector<1x32xf32>
    %cst_24 = arith.constant 8.000000e+00 : f32
    %56 = vector.broadcast %cst_24 : f32 to vector<1x32xf32>
    %57 = arith.divf %55, %56 : vector<1x32xf32>
    %58 = arith.mulf %51, %51 : vector<8x32xf32>
    %cst_25 = arith.constant dense<0.000000e+00> : vector<32xf32>
    %59 = vector.multi_reduction <add>, %58, %cst_25 [0] : vector<8x32xf32> to vector<32xf32>
    %60 = vector.shape_cast %59 : vector<32xf32> to vector<1x32xf32>
    %cst_26 = arith.constant 8.000000e+00 : f32
    %61 = vector.broadcast %cst_26 : f32 to vector<1x32xf32>
    %62 = arith.divf %60, %61 : vector<1x32xf32>
    %63 = arith.mulf %57, %57 : vector<1x32xf32>
    %64 = arith.subf %62, %63 : vector<1x32xf32>
    %cst_27 = arith.constant 0.000000e+00 : f32
    %65 = vector.broadcast %cst_27 : f32 to vector<1x32xf32>
    %66 = arith.maximumf %64, %65 : vector<1x32xf32>
    %67 = vector.broadcast %57 : vector<1x32xf32> to vector<8x32xf32>
    %68 = arith.subf %51, %67 : vector<8x32xf32>
    %cst_28 = arith.constant 9.99999974E-6 : f32
    %69 = vector.broadcast %cst_28 : f32 to vector<1x32xf32>
    %70 = arith.addf %66, %69 : vector<1x32xf32>
    %71 = math.rsqrt %70 : vector<1x32xf32>
    %72 = vector.broadcast %71 : vector<1x32xf32> to vector<8x32xf32>
    %73 = arith.mulf %68, %72 : vector<8x32xf32>
    %74 = vector.broadcast %52 : vector<1x32xf32> to vector<8x32xf32>
    %75 = arith.mulf %73, %74 : vector<8x32xf32>
    %76 = vector.broadcast %53 : vector<1x32xf32> to vector<8x32xf32>
    %77 = arith.addf %75, %76 : vector<8x32xf32>
    %cst_29 = arith.constant 0.000000e+00 : f32
    %78 = vector.broadcast %cst_29 : f32 to vector<8x32xf32>
    %79 = arith.maximumf %77, %78 : vector<8x32xf32>
    %c328 = arith.constant 328 : index
    %c0_30 = arith.constant 0 : index
    %80 = vector.load %arg1[%c328, %c0_30] : memref<360x32xf32, #tpu.memory_space<vmem>>, vector<32x4xf32>
    %cst_31 = arith.constant dense<0.000000e+00> : vector<8x4xf32>
    %81 = tpu.matmul %79, %80, %cst_31 {dimension_numbers = #tpu.dot_dimension_numbers<[1], [0], [0], [1], [0, 0, 1, 1], [], []>, precision = #tpu.contract_precision<fp32>} : vector<8x32xf32>, vector<32x4xf32>, vector<8x4xf32> -> vector<8x4xf32>
    %c6 = arith.constant 6 : index
    %c0_32 = arith.constant 0 : index
    %82 = vector.load %arg2[%c6, %c0_32] : memref<8x32xf32, #tpu.memory_space<vmem>>, vector<1x4xf32>
    %83 = vector.broadcast %82 : vector<1x4xf32> to vector<8x4xf32>
    %84 = arith.addf %81, %83 : vector<8x4xf32>
    %cst_33 = arith.constant 2.000000e+01 : f32
    %85 = vector.broadcast %cst_33 : f32 to vector<8x4xf32>
    %86 = arith.minimumf %84, %85 : vector<8x4xf32>
    %87 = math.exp %86 : vector<8x4xf32>
    %cst_34 = arith.constant 1.000000e+00 : f32
    %88 = vector.broadcast %cst_34 : f32 to vector<8x4xf32>
    %89 = arith.addf %88, %87 : vector<8x4xf32>
    %cst_35 = arith.constant 1.000000e+00 : f32
    %90 = vector.broadcast %cst_35 : f32 to vector<8x4xf32>
    %91 = arith.cmpf oeq, %89, %90 : vector<8x4xf32>
    %92 = math.log %89 : vector<8x4xf32>
    %cst_36 = arith.constant 1.000000e+00 : f32
    %93 = vector.broadcast %cst_36 : f32 to vector<8x4xf32>
    %94 = arith.subf %89, %93 : vector<8x4xf32>
    %95 = tpu.reciprocal %94 {approx = true} : vector<8x4xf32> -> vector<8x4xf32>
    %96 = arith.mulf %94, %95 : vector<8x4xf32>
    %cst_37 = arith.constant 2.000000e+00 : f32
    %97 = vector.broadcast %cst_37 : f32 to vector<8x4xf32>
    %98 = arith.subf %97, %96 : vector<8x4xf32>
    %99 = arith.mulf %95, %98 : vector<8x4xf32>
    %100 = arith.mulf %87, %99 : vector<8x4xf32>
    %101 = arith.mulf %92, %100 : vector<8x4xf32>
    %102 = arith.select %91, %87, %101 : vector<8x4xi1>, vector<8x4xf32>
    %cst_38 = arith.constant 2.000000e+01 : f32
    %103 = vector.broadcast %cst_38 : f32 to vector<8x4xf32>
    %104 = arith.cmpf ogt, %84, %103 : vector<8x4xf32>
    %105 = arith.select %104, %84, %102 : vector<8x4xi1>, vector<8x4xf32>
    %cst_39 = arith.constant 1.190000e-07 : f32
    %106 = vector.broadcast %cst_39 : f32 to vector<8x4xf32>
    %107 = arith.maximumf %105, %106 : vector<8x4xf32>
    %c0_40 = arith.constant 0 : index
    %c0_41 = arith.constant 0 : index
    %108 = vector.load %arg3[%c0_40, %c0_41] : memref<8x4xf32, #tpu.memory_space<vmem>>, vector<8x4xf32>
    tpu.vector_store %arg3[%c0_40, %c0_41], %107 {strides = array<i32>} : memref<8x4xf32, #tpu.memory_space<vmem>>, vector<8x4xf32>,
    %109 = vector.extract_strided_slice %107 {offsets = [0, 0], sizes = [8, 2], strides = [1, 1]} : vector<8x4xf32> to vector<8x2xf32>
    %110 = vector.extract_strided_slice %107 {offsets = [0, 2], sizes = [8, 2], strides = [1, 1]} : vector<8x4xf32> to vector<8x2xf32>
    %111 = arith.addf %109, %110 : vector<8x2xf32>
    %cst_42 = arith.constant 5.500000e+00 : f32
    %112 = vector.broadcast %cst_42 : f32 to vector<8x4xf32>
    %113 = arith.addf %107, %112 : vector<8x4xf32>
    %cst_43 = arith.constant 5.000000e-01 : f32
    %114 = vector.broadcast %cst_43 : f32 to vector<8x4xf32>
    %115 = arith.addf %107, %114 : vector<8x4xf32>
    %116 = math.log %113 : vector<8x4xf32>
    %117 = arith.mulf %115, %116 : vector<8x4xf32>
    %118 = arith.subf %113, %117 : vector<8x4xf32>
    %cst_44 = arith.constant 1.000000e+00 : f32
    %119 = vector.broadcast %cst_44 : f32 to vector<8x4xf32>
    %120 = arith.addf %107, %119 : vector<8x4xf32>
    %121 = tpu.reciprocal %120 {approx = true} : vector<8x4xf32> -> vector<8x4xf32>
    %122 = arith.mulf %120, %121 : vector<8x4xf32>
    %cst_45 = arith.constant 2.000000e+00 : f32
    %123 = vector.broadcast %cst_45 : f32 to vector<8x4xf32>
    %124 = arith.subf %123, %122 : vector<8x4xf32>
    %125 = arith.mulf %121, %124 : vector<8x4xf32>
    %cst_46 = arith.constant 76.1800919 : f32
    %126 = vector.broadcast %cst_46 : f32 to vector<8x4xf32>
    %127 = arith.mulf %126, %125 : vector<8x4xf32>
    %cst_47 = arith.constant 2.000000e+00 : f32
    %128 = vector.broadcast %cst_47 : f32 to vector<8x4xf32>
    %129 = arith.addf %107, %128 : vector<8x4xf32>
    %130 = tpu.reciprocal %129 {approx = true} : vector<8x4xf32> -> vector<8x4xf32>
    %131 = arith.mulf %129, %130 : vector<8x4xf32>
    %cst_48 = arith.constant 2.000000e+00 : f32
    %132 = vector.broadcast %cst_48 : f32 to vector<8x4xf32>
    %133 = arith.subf %132, %131 : vector<8x4xf32>
    %134 = arith.mulf %130, %133 : vector<8x4xf32>
    %cst_49 = arith.constant -86.5053177 : f32
    %135 = vector.broadcast %cst_49 : f32 to vector<8x4xf32>
    %136 = arith.mulf %135, %134 : vector<8x4xf32>
    %cst_50 = arith.constant 3.000000e+00 : f32
    %137 = vector.broadcast %cst_50 : f32 to vector<8x4xf32>
    %138 = arith.addf %107, %137 : vector<8x4xf32>
    %139 = tpu.reciprocal %138 {approx = true} : vector<8x4xf32> -> vector<8x4xf32>
    %140 = arith.mulf %138, %139 : vector<8x4xf32>
    %cst_51 = arith.constant 2.000000e+00 : f32
    %141 = vector.broadcast %cst_51 : f32 to vector<8x4xf32>
    %142 = arith.subf %141, %140 : vector<8x4xf32>
    %143 = arith.mulf %139, %142 : vector<8x4xf32>
    %cst_52 = arith.constant 2.401410e+01 : f32
    %144 = vector.broadcast %cst_52 : f32 to vector<8x4xf32>
    %145 = arith.mulf %144, %143 : vector<8x4xf32>
    %cst_53 = arith.constant 4.000000e+00 : f32
    %146 = vector.broadcast %cst_53 : f32 to vector<8x4xf32>
    %147 = arith.addf %107, %146 : vector<8x4xf32>
    %148 = tpu.reciprocal %147 {approx = true} : vector<8x4xf32> -> vector<8x4xf32>
    %149 = arith.mulf %147, %148 : vector<8x4xf32>
    %cst_54 = arith.constant 2.000000e+00 : f32
    %150 = vector.broadcast %cst_54 : f32 to vector<8x4xf32>
    %151 = arith.subf %150, %149 : vector<8x4xf32>
    %152 = arith.mulf %148, %151 : vector<8x4xf32>
    %cst_55 = arith.constant -1.23173952 : f32
    %153 = vector.broadcast %cst_55 : f32 to vector<8x4xf32>
    %154 = arith.mulf %153, %152 : vector<8x4xf32>
    %cst_56 = arith.constant 5.000000e+00 : f32
    %155 = vector.broadcast %cst_56 : f32 to vector<8x4xf32>
    %156 = arith.addf %107, %155 : vector<8x4xf32>
    %157 = tpu.reciprocal %156 {approx = true} : vector<8x4xf32> -> vector<8x4xf32>
    %158 = arith.mulf %156, %157 : vector<8x4xf32>
    %cst_57 = arith.constant 2.000000e+00 : f32
    %159 = vector.broadcast %cst_57 : f32 to vector<8x4xf32>
    %160 = arith.subf %159, %158 : vector<8x4xf32>
    %161 = arith.mulf %157, %160 : vector<8x4xf32>
    %cst_58 = arith.constant 0.001208651 : f32
    %162 = vector.broadcast %cst_58 : f32 to vector<8x4xf32>
    %163 = arith.mulf %162, %161 : vector<8x4xf32>
    %cst_59 = arith.constant 6.000000e+00 : f32
    %164 = vector.broadcast %cst_59 : f32 to vector<8x4xf32>
    %165 = arith.addf %107, %164 : vector<8x4xf32>
    %166 = tpu.reciprocal %165 {approx = true} : vector<8x4xf32> -> vector<8x4xf32>
    %167 = arith.mulf %165, %166 : vector<8x4xf32>
    %cst_60 = arith.constant 2.000000e+00 : f32
    %168 = vector.broadcast %cst_60 : f32 to vector<8x4xf32>
    %169 = arith.subf %168, %167 : vector<8x4xf32>
    %170 = arith.mulf %166, %169 : vector<8x4xf32>
    %cst_61 = arith.constant -5.39523944E-6 : f32
    %171 = vector.broadcast %cst_61 : f32 to vector<8x4xf32>
    %172 = arith.mulf %171, %170 : vector<8x4xf32>
    %173 = arith.addf %127, %136 : vector<8x4xf32>
    %174 = arith.addf %145, %154 : vector<8x4xf32>
    %175 = arith.addf %173, %174 : vector<8x4xf32>
    %cst_62 = arith.constant 1.000000e+00 : f32
    %176 = vector.broadcast %cst_62 : f32 to vector<8x4xf32>
    %177 = arith.addf %176, %175 : vector<8x4xf32>
    %178 = arith.addf %163, %172 : vector<8x4xf32>
    %179 = arith.addf %177, %178 : vector<8x4xf32>
    %cst_63 = arith.constant 0.000000e+00 : f32
    %180 = vector.broadcast %cst_63 : f32 to vector<8x4xf32>
    %181 = arith.subf %180, %118 : vector<8x4xf32>
    %cst_64 = arith.constant 2.50662827 : f32
    %182 = vector.broadcast %cst_64 : f32 to vector<8x4xf32>
    %183 = arith.mulf %182, %179 : vector<8x4xf32>
    %184 = math.log %183 : vector<8x4xf32>
    %185 = arith.addf %181, %184 : vector<8x4xf32>
    %186 = math.log %107 : vector<8x4xf32>
    %187 = arith.subf %185, %186 : vector<8x4xf32>
    %cst_65 = arith.constant 5.500000e+00 : f32
    %188 = vector.broadcast %cst_65 : f32 to vector<8x2xf32>
    %189 = arith.addf %111, %188 : vector<8x2xf32>
    %cst_66 = arith.constant 5.000000e-01 : f32
    %190 = vector.broadcast %cst_66 : f32 to vector<8x2xf32>
    %191 = arith.addf %111, %190 : vector<8x2xf32>
    %192 = math.log %189 : vector<8x2xf32>
    %193 = arith.mulf %191, %192 : vector<8x2xf32>
    %194 = arith.subf %189, %193 : vector<8x2xf32>
    %cst_67 = arith.constant 1.000000e+00 : f32
    %195 = vector.broadcast %cst_67 : f32 to vector<8x2xf32>
    %196 = arith.addf %111, %195 : vector<8x2xf32>
    %197 = tpu.reciprocal %196 {approx = true} : vector<8x2xf32> -> vector<8x2xf32>
    %198 = arith.mulf %196, %197 : vector<8x2xf32>
    %cst_68 = arith.constant 2.000000e+00 : f32
    %199 = vector.broadcast %cst_68 : f32 to vector<8x2xf32>
    %200 = arith.subf %199, %198 : vector<8x2xf32>
    %201 = arith.mulf %197, %200 : vector<8x2xf32>
    %cst_69 = arith.constant 76.1800919 : f32
    %202 = vector.broadcast %cst_69 : f32 to vector<8x2xf32>
    %203 = arith.mulf %202, %201 : vector<8x2xf32>
    %cst_70 = arith.constant 2.000000e+00 : f32
    %204 = vector.broadcast %cst_70 : f32 to vector<8x2xf32>
    %205 = arith.addf %111, %204 : vector<8x2xf32>
    %206 = tpu.reciprocal %205 {approx = true} : vector<8x2xf32> -> vector<8x2xf32>
    %207 = arith.mulf %205, %206 : vector<8x2xf32>
    %cst_71 = arith.constant 2.000000e+00 : f32
    %208 = vector.broadcast %cst_71 : f32 to vector<8x2xf32>
    %209 = arith.subf %208, %207 : vector<8x2xf32>
    %210 = arith.mulf %206, %209 : vector<8x2xf32>
    %cst_72 = arith.constant -86.5053177 : f32
    %211 = vector.broadcast %cst_72 : f32 to vector<8x2xf32>
    %212 = arith.mulf %211, %210 : vector<8x2xf32>
    %cst_73 = arith.constant 3.000000e+00 : f32
    %213 = vector.broadcast %cst_73 : f32 to vector<8x2xf32>
    %214 = arith.addf %111, %213 : vector<8x2xf32>
    %215 = tpu.reciprocal %214 {approx = true} : vector<8x2xf32> -> vector<8x2xf32>
    %216 = arith.mulf %214, %215 : vector<8x2xf32>
    %cst_74 = arith.constant 2.000000e+00 : f32
    %217 = vector.broadcast %cst_74 : f32 to vector<8x2xf32>
    %218 = arith.subf %217, %216 : vector<8x2xf32>
    %219 = arith.mulf %215, %218 : vector<8x2xf32>
    %cst_75 = arith.constant 2.401410e+01 : f32
    %220 = vector.broadcast %cst_75 : f32 to vector<8x2xf32>
    %221 = arith.mulf %220, %219 : vector<8x2xf32>
    %cst_76 = arith.constant 4.000000e+00 : f32
    %222 = vector.broadcast %cst_76 : f32 to vector<8x2xf32>
    %223 = arith.addf %111, %222 : vector<8x2xf32>
    %224 = tpu.reciprocal %223 {approx = true} : vector<8x2xf32> -> vector<8x2xf32>
    %225 = arith.mulf %223, %224 : vector<8x2xf32>
    %cst_77 = arith.constant 2.000000e+00 : f32
    %226 = vector.broadcast %cst_77 : f32 to vector<8x2xf32>
    %227 = arith.subf %226, %225 : vector<8x2xf32>
    %228 = arith.mulf %224, %227 : vector<8x2xf32>
    %cst_78 = arith.constant -1.23173952 : f32
    %229 = vector.broadcast %cst_78 : f32 to vector<8x2xf32>
    %230 = arith.mulf %229, %228 : vector<8x2xf32>
    %cst_79 = arith.constant 5.000000e+00 : f32
    %231 = vector.broadcast %cst_79 : f32 to vector<8x2xf32>
    %232 = arith.addf %111, %231 : vector<8x2xf32>
    %233 = tpu.reciprocal %232 {approx = true} : vector<8x2xf32> -> vector<8x2xf32>
    %234 = arith.mulf %232, %233 : vector<8x2xf32>
    %cst_80 = arith.constant 2.000000e+00 : f32
    %235 = vector.broadcast %cst_80 : f32 to vector<8x2xf32>
    %236 = arith.subf %235, %234 : vector<8x2xf32>
    %237 = arith.mulf %233, %236 : vector<8x2xf32>
    %cst_81 = arith.constant 0.001208651 : f32
    %238 = vector.broadcast %cst_81 : f32 to vector<8x2xf32>
    %239 = arith.mulf %238, %237 : vector<8x2xf32>
    %cst_82 = arith.constant 6.000000e+00 : f32
    %240 = vector.broadcast %cst_82 : f32 to vector<8x2xf32>
    %241 = arith.addf %111, %240 : vector<8x2xf32>
    %242 = tpu.reciprocal %241 {approx = true} : vector<8x2xf32> -> vector<8x2xf32>
    %243 = arith.mulf %241, %242 : vector<8x2xf32>
    %cst_83 = arith.constant 2.000000e+00 : f32
    %244 = vector.broadcast %cst_83 : f32 to vector<8x2xf32>
    %245 = arith.subf %244, %243 : vector<8x2xf32>
    %246 = arith.mulf %242, %245 : vector<8x2xf32>
    %cst_84 = arith.constant -5.39523944E-6 : f32
    %247 = vector.broadcast %cst_84 : f32 to vector<8x2xf32>
    %248 = arith.mulf %247, %246 : vector<8x2xf32>
    %249 = arith.addf %203, %212 : vector<8x2xf32>
    %250 = arith.addf %221, %230 : vector<8x2xf32>
    %251 = arith.addf %249, %250 : vector<8x2xf32>
    %cst_85 = arith.constant 1.000000e+00 : f32
    %252 = vector.broadcast %cst_85 : f32 to vector<8x2xf32>
    %253 = arith.addf %252, %251 : vector<8x2xf32>
    %254 = arith.addf %239, %248 : vector<8x2xf32>
    %255 = arith.addf %253, %254 : vector<8x2xf32>
    %cst_86 = arith.constant 0.000000e+00 : f32
    %256 = vector.broadcast %cst_86 : f32 to vector<8x2xf32>
    %257 = arith.subf %256, %194 : vector<8x2xf32>
    %cst_87 = arith.constant 2.50662827 : f32
    %258 = vector.broadcast %cst_87 : f32 to vector<8x2xf32>
    %259 = arith.mulf %258, %255 : vector<8x2xf32>
    %260 = math.log %259 : vector<8x2xf32>
    %261 = arith.addf %257, %260 : vector<8x2xf32>
    %262 = math.log %111 : vector<8x2xf32>
    %263 = arith.subf %261, %262 : vector<8x2xf32>
    %cst_88 = arith.constant 1.190000e-07 : f32
    %cst_89 = arith.constant 0.99999988 : f32
    %264 = vector.broadcast %cst_88 : f32 to vector<8x1xf32>
    %265 = arith.maximumf %264, %1 : vector<8x1xf32>
    %266 = vector.broadcast %cst_89 : f32 to vector<8x1xf32>
    %267 = arith.minimumf %266, %265 : vector<8x1xf32>
    %268 = tpu.iota {dimensions = array<i32: 1>} : vector<8x4xi32>
    %c2_i32 = arith.constant 2 : i32
    %269 = vector.broadcast %c2_i32 : i32 to vector<8x4xi32>
    %270 = arith.cmpi slt, %268, %269 : vector<8x4xi32>
    %271 = math.log %267 : vector<8x1xf32>
    %cst_90 = arith.constant 1.000000e+00 : f32
    %272 = vector.broadcast %cst_90 : f32 to vector<8x1xf32>
    %273 = arith.subf %272, %267 : vector<8x1xf32>
    %274 = math.log %273 : vector<8x1xf32>
    %275 = vector.shape_cast %271 : vector<8x1xf32> to vector<8x1xf32>
    %276 = vector.broadcast %275 : vector<8x1xf32> to vector<8x4xf32>
    %277 = vector.shape_cast %274 : vector<8x1xf32> to vector<8x1xf32>
    %278 = vector.broadcast %277 : vector<8x1xf32> to vector<8x4xf32>
    %279 = arith.select %270, %276, %278 : vector<8x4xi1>, vector<8x4xf32>
    %cst_91 = arith.constant 1.000000e+00 : f32
    %280 = vector.broadcast %cst_91 : f32 to vector<8x4xf32>
    %281 = arith.subf %107, %280 : vector<8x4xf32>
    %282 = arith.mulf %281, %279 : vector<8x4xf32>
    %283 = arith.subf %282, %187 : vector<8x4xf32>
    %284 = vector.shape_cast %283 : vector<8x4xf32> to vector<1x8x4xf32>
    %cst_92 = arith.constant dense<0.000000e+00> : vector<1xf32>
    %285 = vector.multi_reduction <add>, %284, %cst_92 [1, 2] : vector<1x8x4xf32> to vector<1xf32>
    %286 = vector.shape_cast %285 : vector<1xf32> to vector<1x1x1xf32>
    %287 = vector.extract %286[0, 0, 0] : f32 from vector<1x1x1xf32>
    %288 = vector.broadcast %287 : f32 to vector<1x1xf32>
    %289 = vector.shape_cast %263 : vector<8x2xf32> to vector<1x8x2xf32>
    %cst_93 = arith.constant dense<0.000000e+00> : vector<1xf32>
    %290 = vector.multi_reduction <add>, %289, %cst_93 [1, 2] : vector<1x8x2xf32> to vector<1xf32>
    %291 = vector.shape_cast %290 : vector<1xf32> to vector<1x1x1xf32>
    %292 = vector.extract %291[0, 0, 0] : f32 from vector<1x1x1xf32>
    %293 = vector.broadcast %292 : f32 to vector<1x1xf32>
    %294 = arith.addf %288, %293 : vector<1x1xf32>
    %cst_94 = arith.constant 0.000000e+00 : f32
    %295 = vector.broadcast %cst_94 : f32 to vector<1x1xf32>
    %296 = arith.subf %295, %294 : vector<1x1xf32>
    %cst_95 = arith.constant 6.250000e-02 : f32
    %297 = vector.broadcast %cst_95 : f32 to vector<1x1xf32>
    %298 = arith.mulf %296, %297 : vector<1x1xf32>
    %c0_96 = arith.constant 0 : index
    %c0_97 = arith.constant 0 : index
    %299 = vector.load %arg4[%c0_96, %c0_97] : memref<1x1xf32, #tpu.memory_space<vmem>>, vector<1x1xf32>
    tpu.vector_store %arg4[%c0_96, %c0_97], %298 {strides = array<i32>} : memref<1x1xf32, #tpu.memory_space<vmem>>, vector<1x1xf32>,
    return
  }
}

</mosaic_0001>

<llo_original>
// kernel: beta_forward.1
$region0: #{beta_forward.1}
  #allocation0 [shape = 'u32[]', space=smem, size = 0x4, offset = 0x4, fixed_abs, tag = 'smem constant byte address 0x4 - core index']
  #allocation1 [shape = 'u32[144,128]{1,0:T(1,128)}', space=vmem, size = 0x12000, scoped, tag = 'internal scratch']
  %s0 = inlined_call_operand.vmem [shape: f32[8,6], index: 0, kind: input, shape index: {}]
  %s1 = inlined_call_operand.vmem [shape: f32[360,32], index: 1, kind: input, shape index: {}]
  %s2 = inlined_call_operand.vmem [shape: f32[8,32], index: 2, kind: input, shape index: {}]
  %s3 = inlined_call_operand.vmem [shape: f32[8,4], index: 3, kind: output, shape index: {0}]
  %s4 = inlined_call_operand.hbm [shape: f32[1,1], index: 4, kind: output, shape index: {1}]
  %5 = xla_tuple %s3, %s4
  %s6 = sld [smem:[#allocation0]]
  $region30: #{beta_forward.1} parent=0
    _
  %s8 = ssub.s32 1, %s6
  %s9 = scalar_select 0, %s8, %s6
  $region1: #{beta_forward.1} parent=0
    #allocation2 [shape = 'u8[512]{0}', space=vmem, size = 0x400, scoped, tag = 'output window, operand 1, single buffered']
    #allocation3 [shape = 's32[1]{0}', space=sflag, size = 0x4, scoped, tag = 'scoped memory for beta_forward.1']
    %10 = vsyncpa [#allocation3], 0
    // Predicated region
    $region2: #{beta_forward.1} parent=1 // pred_check
      _
    $region3: #{beta_forward.1} parent=1 // pred_check_branch
      %12 = sbr.rel (0) target = $region5
    $region4: #{beta_forward.1} parent=1 // pred_region
      _
    $region5: #{beta_forward.1} parent=1 // pred_fallthru
      _
    // Predicated region
    $region6: #{beta_forward.1} parent=1 // pred_check
      _
    $region7: #{beta_forward.1} parent=1 // pred_check_branch
      %14 = sbr.rel (0) target = $region9
    $region8: #{beta_forward.1} parent=1 // pred_region
      _
    $region9: #{beta_forward.1} parent=1 // pred_fallthru
      _
    // Predicated region
    $region10: #{beta_forward.1} parent=1 // pred_check
      _
    $region11: #{beta_forward.1} parent=1 // pred_check_branch
      %16 = sbr.rel (0) target = $region13
    $region12: #{beta_forward.1} parent=1 // pred_region
      _
    $region13: #{beta_forward.1} parent=1 // pred_fallthru
      _
    %v17 = vld [vmem:[%s0] sm:$0xff]
    %v18 = vcvt.f32.s32.to.zero.pseudo %v17
    %v19 = vlaneseq
    %v20 = vand.u32 %v19, 127
    %v21 = vadd.s32 %v20, 128
    %22 = vset.pattern.permute.xlu0 5
    %23 = vperm.xlu0 %22, %v18
    %v24 = vpop.permute.xlu0 %23
    %vm25 = vcmp.eq.s32.totalorder %v20, %v24
    %vm26 = vcmp.eq.s32.totalorder %v21, %v24
    %v27 = vsel %vm25, 1, 0
    %v28 = vsel %vm26, 1, 0
    %v29 = vcvt.s32.f32 %v27
    %v30 = vcvt.s32.f32 %v28
    %v31 = vld [vmem:[%s1] sm:$0xff]
    %v32 = vld [vmem:[%s1 + $0x8] sm:$0xff]
    %v33 = vld [vmem:[%s1 + $0x10] sm:$0xff]
    %v34 = vld [vmem:[%s1 + $0x18] sm:$0xff]
    %v35 = vld [vmem:[%s1 + $0x20] sm:$0xff]
    %v36 = vld [vmem:[%s1 + $0x28] sm:$0xff]
    %v37 = vld [vmem:[%s1 + $0x30] sm:$0xff]
    %v38 = vld [vmem:[%s1 + $0x38] sm:$0xff]
    %v39 = vld [vmem:[%s1 + $0x40] sm:$0xff]
    %v40 = vld [vmem:[%s1 + $0x48] sm:$0xff]
    %v41 = vld [vmem:[%s1 + $0x50] sm:$0xff]
    %v42 = vld [vmem:[%s1 + $0x58] sm:$0xff]
    %v43 = vld [vmem:[%s1 + $0x60] sm:$0xff]
    %v44 = vld [vmem:[%s1 + $0x68] sm:$0xff]
    %v45 = vld [vmem:[%s1 + $0x70] sm:$0xff]
    %v46 = vld [vmem:[%s1 + $0x78] sm:$0xff]
    %v47 = vld [vmem:[%s1 + $0x80] sm:$0xff]
    %v48 = vld [vmem:[%s1 + $0x88] sm:$0xff]
    %v49 = vld [vmem:[%s1 + $0x90] sm:$0xff]
    %v50 = vld [vmem:[%s1 + $0x98] sm:$0xff]
    %v51 = vld [vmem:[%s1 + $0xa0] sm:$0xff]
    %v52 = vld [vmem:[%s1 + $0xa8] sm:$0xff]
    %v53 = vld [vmem:[%s1 + $0xb0] sm:$0xff]
    %v54 = vld [vmem:[%s1 + $0xb8] sm:$0xff]
    %v55 = vld [vmem:[%s1 + $0xc0] sm:$0xff]
    %v56 = vld [vmem:[%s1 + $0xc8] sm:$0xff]
    %v57 = vld [vmem:[%s1 + $0xd0] sm:$0xff]
    %v58 = vld [vmem:[%s1 + $0xd8] sm:$0xff]
    %v59 = vld [vmem:[%s1 + $0xe0] sm:$0xff]
    %v60 = vld [vmem:[%s1 + $0xe8] sm:$0xff]
    %v61 = vld [vmem:[%s1 + $0xf0] sm:$0xff]
    %v62 = vld [vmem:[%s1 + $0xf8] sm:$0xff]
    %63 = vmatprep.subr.mxu0 0.0
    %v64 = vand.u32 %v31, 4294901760
    %65 = vmatpush1.msra.mxu0 %v64
    %66 = vmatprep.subr.mxu0 0.0
    %v67 = vand.u32 %v32, 4294901760
    %68 = vmatpush1.msra.mxu0 %v67
    %69 = vmatprep.subr.mxu0 0.0
    %v70 = vand.u32 %v33, 4294901760
    %71 = vmatpush1.msra.mxu0 %v70
    %72 = vmatprep.subr.mxu0 0.0
    %v73 = vand.u32 %v34, 4294901760
    %74 = vmatpush1.msra.mxu0 %v73
    %75 = vmatprep.subr.mxu0 0.0
    %v76 = vand.u32 %v35, 4294901760
    %77 = vmatpush1.msra.mxu0 %v76
    %78 = vmatprep.subr.mxu0 0.0
    %v79 = vand.u32 %v36, 4294901760
    %80 = vmatpush1.msra.mxu0 %v79
    %81 = vmatprep.subr.mxu0 0.0
    %v82 = vand.u32 %v37, 4294901760
    %83 = vmatpush1.msra.mxu0 %v82
    %84 = vmatprep.subr.mxu0 0.0
    %v85 = vand.u32 %v38, 4294901760
    %86 = vmatpush1.msra.mxu0 %v85
    %87 = vmatprep.subr.mxu0 0.0
    %v88 = vand.u32 %v39, 4294901760
    %89 = vmatpush1.msra.mxu0 %v88
    %90 = vmatprep.subr.mxu0 0.0
    %v91 = vand.u32 %v40, 4294901760
    %92 = vmatpush1.msra.mxu0 %v91
    %93 = vmatprep.subr.mxu0 0.0
    %v94 = vand.u32 %v41, 4294901760
    %95 = vmatpush1.msra.mxu0 %v94
    %96 = vmatprep.subr.mxu0 0.0
    %v97 = vand.u32 %v42, 4294901760
    %98 = vmatpush1.msra.mxu0 %v97
    %99 = vmatprep.subr.mxu0 0.0
    %v100 = vand.u32 %v43, 4294901760
    %101 = vmatpush1.msra.mxu0 %v100
    %102 = vmatprep.subr.mxu0 0.0
    %v103 = vand.u32 %v44, 4294901760
    %104 = vmatpush1.msra.mxu0 %v103
    %105 = vmatprep.subr.mxu0 0.0
    %v106 = vand.u32 %v45, 4294901760
    %107 = vmatpush1.msra.mxu0 %v106
    %108 = vmatprep.subr.mxu0 0.0
    %v109 = vand.u32 %v46, 4294901760
    %110 = vmatpush1.msra.mxu0 %v109
    %111 = vmatprep.subr.mxu0 0.0
    %v112 = vand.u32 %v47, 4294901760
    %113 = vmatpush1.msra.mxu0 %v112
    %114 = vmatprep.subr.mxu0 0.0
    %v115 = vand.u32 %v48, 4294901760
    %116 = vmatpush1.msra.mxu0 %v115
    %117 = vmatprep.subr.mxu0 0.0
    %v118 = vand.u32 %v49, 4294901760
    %119 = vmatpush1.msra.mxu0 %v118
    %120 = vmatprep.subr.mxu0 0.0
    %v121 = vand.u32 %v50, 4294901760
    %122 = vmatpush1.msra.mxu0 %v121
    %123 = vmatprep.subr.mxu0 0.0
    %v124 = vand.u32 %v51, 4294901760
    %125 = vmatpush1.msra.mxu0 %v124
    %126 = vmatprep.subr.mxu0 0.0
    %v127 = vand.u32 %v52, 4294901760
    %128 = vmatpush1.msra.mxu0 %v127
    %129 = vmatprep.subr.mxu0 0.0
    %v130 = vand.u32 %v53, 4294901760
    %131 = vmatpush1.msra.mxu0 %v130
    %132 = vmatprep.subr.mxu0 0.0
    %v133 = vand.u32 %v54, 4294901760
    %134 = vmatpush1.msra.mxu0 %v133
    %135 = vmatprep.subr.mxu0 0.0
    %v136 = vand.u32 %v55, 4294901760
    %137 = vmatpush1.msra.mxu0 %v136
    %138 = vmatprep.subr.mxu0 0.0
    %v139 = vand.u32 %v56, 4294901760
    %140 = vmatpush1.msra.mxu0 %v139
    %141 = vmatprep.subr.mxu0 0.0
    %v142 = vand.u32 %v57, 4294901760
    %143 = vmatpush1.msra.mxu0 %v142
    %144 = vmatprep.subr.mxu0 0.0
    %v145 = vand.u32 %v58, 4294901760
    %146 = vmatpush1.msra.mxu0 %v145
    %147 = vmatprep.subr.mxu0 0.0
    %v148 = vand.u32 %v59, 4294901760
    %149 = vmatpush1.msra.mxu0 %v148
    %150 = vmatprep.subr.mxu0 0.0
    %v151 = vand.u32 %v60, 4294901760
    %152 = vmatpush1.msra.mxu0 %v151
    %153 = vmatprep.subr.mxu0 0.0
    %v154 = vand.u32 %v61, 4294901760
    %155 = vmatpush1.msra.mxu0 %v154
    %156 = vmatprep.subr.mxu0 0.0
    %v157 = vand.u32 %v62, 4294901760
    %158 = vmatpush1.msra.mxu0 %v157
    %v159 = vand.u32 %v30, 4294901760
    %v160 = vsub.f32 %v30, %v159
    %v161 = vand.u32 %v160, 4294901760
    %v162 = vsub.f32 %v160, %v161
    %v163 = vand.u32 %v162, 4294901760
    %164 = vmatprep.mubr.f32.mxu0 %v163
    %v165 = vand.u32 %v29, 4294901760
    %v166 = vsub.f32 %v29, %v165
    %v167 = vand.u32 %v166, 4294901760
    %v168 = vsub.f32 %v166, %v167
    %v169 = vand.u32 %v168, 4294901760
    %170 = vmatmul.mubr.f32.gmra.mrb[0].mxu0 %v169
    %v171 = vpop.f32.mrb[0].mxu0
    %v172 = vadd.f32 0.0, %v171
    %v173 = vpop.f32.mrb[0].mxu0
    %174 = vdwg.mxu0
    %175 = vmatprep.subr.mxu0 0.0
    %v176 = vand.u32 %v31, 4294901760
    %v177 = vsub.f32 %v31, %v176
    %v178 = vand.u32 %v177, 4294901760
    %v179 = vsub.f32 %v177, %v178
    %v180 = vand.u32 %v179, 4294901760
    %181 = vmatpush1.msra.mxu0 %v180
    %182 = vmatprep.subr.mxu0 0.0
    %v183 = vand.u32 %v32, 4294901760
    %v184 = vsub.f32 %v32, %v183
    %v185 = vand.u32 %v184, 4294901760
    %v186 = vsub.f32 %v184, %v185
    %v187 = vand.u32 %v186, 4294901760
    %188 = vmatpush1.msra.mxu0 %v187
    %189 = vmatprep.subr.mxu0 0.0
    %v190 = vand.u32 %v33, 4294901760
    %v191 = vsub.f32 %v33, %v190
    %v192 = vand.u32 %v191, 4294901760
    %v193 = vsub.f32 %v191, %v192
    %v194 = vand.u32 %v193, 4294901760
    %195 = vmatpush1.msra.mxu0 %v194
    %196 = vmatprep.subr.mxu0 0.0
    %v197 = vand.u32 %v34, 4294901760
    %v198 = vsub.f32 %v34, %v197
    %v199 = vand.u32 %v198, 4294901760
    %v200 = vsub.f32 %v198, %v199
    %v201 = vand.u32 %v200, 4294901760
    %202 = vmatpush1.msra.mxu0 %v201
    %203 = vmatprep.subr.mxu0 0.0
    %v204 = vand.u32 %v35, 4294901760
    %v205 = vsub.f32 %v35, %v204
    %v206 = vand.u32 %v205, 4294901760
    %v207 = vsub.f32 %v205, %v206
    %v208 = vand.u32 %v207, 4294901760
    %209 = vmatpush1.msra.mxu0 %v208
    %210 = vmatprep.subr.mxu0 0.0
    %v211 = vand.u32 %v36, 4294901760
    %v212 = vsub.f32 %v36, %v211
    %v213 = vand.u32 %v212, 4294901760
    %v214 = vsub.f32 %v212, %v213
    %v215 = vand.u32 %v214, 4294901760
    %216 = vmatpush1.msra.mxu0 %v215
    %217 = vmatprep.subr.mxu0 0.0
    %v218 = vand.u32 %v37, 4294901760
    %v219 = vsub.f32 %v37, %v218
    %v220 = vand.u32 %v219, 4294901760
    %v221 = vsub.f32 %v219, %v220
    %v222 = vand.u32 %v221, 4294901760
    %223 = vmatpush1.msra.mxu0 %v222
    %224 = vmatprep.subr.mxu0 0.0
    %v225 = vand.u32 %v38, 4294901760
    %v226 = vsub.f32 %v38, %v225
    %v227 = vand.u32 %v226, 4294901760
    %v228 = vsub.f32 %v226, %v227
    %v229 = vand.u32 %v228, 4294901760
    %230 = vmatpush1.msra.mxu0 %v229
    %231 = vmatprep.subr.mxu0 0.0
    %v232 = vand.u32 %v39, 4294901760
    %v233 = vsub.f32 %v39, %v232
    %v234 = vand.u32 %v233, 4294901760
    %v235 = vsub.f32 %v233, %v234
    %v236 = vand.u32 %v235, 4294901760
    %237 = vmatpush1.msra.mxu0 %v236
    %238 = vmatprep.subr.mxu0 0.0
    %v239 = vand.u32 %v40, 4294901760
    %v240 = vsub.f32 %v40, %v239
    %v241 = vand.u32 %v240, 4294901760
    %v242 = vsub.f32 %v240, %v241
    %v243 = vand.u32 %v242, 4294901760
    %244 = vmatpush1.msra.mxu0 %v243
    %245 = vmatprep.subr.mxu0 0.0
    %v246 = vand.u32 %v41, 4294901760
    %v247 = vsub.f32 %v41, %v246
    %v248 = vand.u32 %v247, 4294901760
    %v249 = vsub.f32 %v247, %v248
    %v250 = vand.u32 %v249, 4294901760
    %251 = vmatpush1.msra.mxu0 %v250
    %252 = vmatprep.subr.mxu0 0.0
    %v253 = vand.u32 %v42, 4294901760
    %v254 = vsub.f32 %v42, %v253
    %v255 = vand.u32 %v254, 4294901760
    %v256 = vsub.f32 %v254, %v255
    %v257 = vand.u32 %v256, 4294901760
    %258 = vmatpush1.msra.mxu0 %v257
    %259 = vmatprep.subr.mxu0 0.0
    %v260 = vand.u32 %v43, 4294901760
    %v261 = vsub.f32 %v43, %v260
    %v262 = vand.u32 %v261, 4294901760
    %v263 = vsub.f32 %v261, %v262
    %v264 = vand.u32 %v263, 4294901760
    %265 = vmatpush1.msra.mxu0 %v264
    %266 = vmatprep.subr.mxu0 0.0
    %v267 = vand.u32 %v44, 4294901760
    %v268 = vsub.f32 %v44, %v267
    %v269 = vand.u32 %v268, 4294901760
    %v270 = vsub.f32 %v268, %v269
    %v271 = vand.u32 %v270, 4294901760
    %272 = vmatpush1.msra.mxu0 %v271
    %273 = vmatprep.subr.mxu0 0.0
    %v274 = vand.u32 %v45, 4294901760
    %v275 = vsub.f32 %v45, %v274
    %v276 = vand.u32 %v275, 4294901760
    %v277 = vsub.f32 %v275, %v276
    %v278 = vand.u32 %v277, 4294901760
    %279 = vmatpush1.msra.mxu0 %v278
    %280 = vmatprep.subr.mxu0 0.0
    %v281 = vand.u32 %v46, 4294901760
    %v282 = vsub.f32 %v46, %v281
    %v283 = vand.u32 %v282, 4294901760
    %v284 = vsub.f32 %v282, %v283
    %v285 = vand.u32 %v284, 4294901760
    %286 = vmatpush1.msra.mxu0 %v285
    %287 = vmatprep.subr.mxu0 0.0
    %v288 = vand.u32 %v47, 4294901760
    %v289 = vsub.f32 %v47, %v288
    %v290 = vand.u32 %v289, 4294901760
    %v291 = vsub.f32 %v289, %v290
    %v292 = vand.u32 %v291, 4294901760
    %293 = vmatpush1.msra.mxu0 %v292
    %294 = vmatprep.subr.mxu0 0.0
    %v295 = vand.u32 %v48, 4294901760
    %v296 = vsub.f32 %v48, %v295
    %v297 = vand.u32 %v296, 4294901760
    %v298 = vsub.f32 %v296, %v297
    %v299 = vand.u32 %v298, 4294901760
    %300 = vmatpush1.msra.mxu0 %v299
    %301 = vmatprep.subr.mxu0 0.0
    %v302 = vand.u32 %v49, 4294901760
    %v303 = vsub.f32 %v49, %v302
    %v304 = vand.u32 %v303, 4294901760
    %v305 = vsub.f32 %v303, %v304
    %v306 = vand.u32 %v305, 4294901760
    %307 = vmatpush1.msra.mxu0 %v306
    %308 = vmatprep.subr.mxu0 0.0
    %v309 = vand.u32 %v50, 4294901760
    %v310 = vsub.f32 %v50, %v309
    %v311 = vand.u32 %v310, 4294901760
    %v312 = vsub.f32 %v310, %v311
    %v313 = vand.u32 %v312, 4294901760
    %314 = vmatpush1.msra.mxu0 %v313
    %315 = vmatprep.subr.mxu0 0.0
    %v316 = vand.u32 %v51, 4294901760
    %v317 = vsub.f32 %v51, %v316
    %v318 = vand.u32 %v317, 4294901760
    %v319 = vsub.f32 %v317, %v318
    %v320 = vand.u32 %v319, 4294901760
    %321 = vmatpush1.msra.mxu0 %v320
    %322 = vmatprep.subr.mxu0 0.0
    %v323 = vand.u32 %v52, 4294901760
    %v324 = vsub.f32 %v52, %v323
    %v325 = vand.u32 %v324, 4294901760
    %v326 = vsub.f32 %v324, %v325
    %v327 = vand.u32 %v326, 4294901760
    %328 = vmatpush1.msra.mxu0 %v327
    %329 = vmatprep.subr.mxu0 0.0
    %v330 = vand.u32 %v53, 4294901760
    %v331 = vsub.f32 %v53, %v330
    %v332 = vand.u32 %v331, 4294901760
    %v333 = vsub.f32 %v331, %v332
    %v334 = vand.u32 %v333, 4294901760
    %335 = vmatpush1.msra.mxu0 %v334
    %336 = vmatprep.subr.mxu0 0.0
    %v337 = vand.u32 %v54, 4294901760
    %v338 = vsub.f32 %v54, %v337
    %v339 = vand.u32 %v338, 4294901760
    %v340 = vsub.f32 %v338, %v339
    %v341 = vand.u32 %v340, 4294901760
    %342 = vmatpush1.msra.mxu0 %v341
    %343 = vmatprep.subr.mxu0 0.0
    %v344 = vand.u32 %v55, 4294901760
    %v345 = vsub.f32 %v55, %v344
    %v346 = vand.u32 %v345, 4294901760
    %v347 = vsub.f32 %v345, %v346
    %v348 = vand.u32 %v347, 4294901760
    %349 = vmatpush1.msra.mxu0 %v348
    %350 = vmatprep.subr.mxu0 0.0
    %v351 = vand.u32 %v56, 4294901760
    %v352 = vsub.f32 %v56, %v351
    %v353 = vand.u32 %v352, 4294901760
    %v354 = vsub.f32 %v352, %v353
    %v355 = vand.u32 %v354, 4294901760
    %356 = vmatpush1.msra.mxu0 %v355
    %357 = vmatprep.subr.mxu0 0.0
    %v358 = vand.u32 %v57, 4294901760
    %v359 = vsub.f32 %v57, %v358
    %v360 = vand.u32 %v359, 4294901760
    %v361 = vsub.f32 %v359, %v360
    %v362 = vand.u32 %v361, 4294901760
    %363 = vmatpush1.msra.mxu0 %v362
    %364 = vmatprep.subr.mxu0 0.0
    %v365 = vand.u32 %v58, 4294901760
    %v366 = vsub.f32 %v58, %v365
    %v367 = vand.u32 %v366, 4294901760
    %v368 = vsub.f32 %v366, %v367
    %v369 = vand.u32 %v368, 4294901760
    %370 = vmatpush1.msra.mxu0 %v369
    %371 = vmatprep.subr.mxu0 0.0
    %v372 = vand.u32 %v59, 4294901760
    %v373 = vsub.f32 %v59, %v372
    %v374 = vand.u32 %v373, 4294901760
    %v375 = vsub.f32 %v373, %v374
    %v376 = vand.u32 %v375, 4294901760
    %377 = vmatpush1.msra.mxu0 %v376
    %378 = vmatprep.subr.mxu0 0.0
    %v379 = vand.u32 %v60, 4294901760
    %v380 = vsub.f32 %v60, %v379
    %v381 = vand.u32 %v380, 4294901760
    %v382 = vsub.f32 %v380, %v381
    %v383 = vand.u32 %v382, 4294901760
    %384 = vmatpush1.msra.mxu0 %v383
    %385 = vmatprep.subr.mxu0 0.0
    %v386 = vand.u32 %v61, 4294901760
    %v387 = vsub.f32 %v61, %v386
    %v388 = vand.u32 %v387, 4294901760
    %v389 = vsub.f32 %v387, %v388
    %v390 = vand.u32 %v389, 4294901760
    %391 = vmatpush1.msra.mxu0 %v390
    %392 = vmatprep.subr.mxu0 0.0
    %v393 = vand.u32 %v62, 4294901760
    %v394 = vsub.f32 %v62, %v393
    %v395 = vand.u32 %v394, 4294901760
    %v396 = vsub.f32 %v394, %v395
    %v397 = vand.u32 %v396, 4294901760
    %398 = vmatpush1.msra.mxu0 %v397
    %v399 = vand.u32 %v30, 4294901760
    %400 = vmatprep.mubr.f32.mxu0 %v399
    %v401 = vand.u32 %v29, 4294901760
    %402 = vmatmul.mubr.f32.gmra.mrb[0].mxu0 %v401
    %v403 = vpop.f32.mrb[0].mxu0
    %v404 = vadd.f32 %v172, %v403
    %v405 = vpop.f32.mrb[0].mxu0
    %406 = vdwg.mxu0
    %407 = vmatprep.subr.mxu0 0.0
    %v408 = vand.u32 %v31, 4294901760
    %v409 = vsub.f32 %v31, %v408
    %410 = vmatpush1.msra.mxu0 %v409
    %411 = vmatprep.subr.mxu0 0.0
    %v412 = vand.u32 %v32, 4294901760
    %v413 = vsub.f32 %v32, %v412
    %414 = vmatpush1.msra.mxu0 %v413
    %415 = vmatprep.subr.mxu0 0.0
    %v416 = vand.u32 %v33, 4294901760
    %v417 = vsub.f32 %v33, %v416
    %418 = vmatpush1.msra.mxu0 %v417
    %419 = vmatprep.subr.mxu0 0.0
    %v420 = vand.u32 %v34, 4294901760
    %v421 = vsub.f32 %v34, %v420
    %422 = vmatpush1.msra.mxu0 %v421
    %423 = vmatprep.subr.mxu0 0.0
    %v424 = vand.u32 %v35, 4294901760
    %v425 = vsub.f32 %v35, %v424
    %426 = vmatpush1.msra.mxu0 %v425
    %427 = vmatprep.subr.mxu0 0.0
    %v428 = vand.u32 %v36, 4294901760
    %v429 = vsub.f32 %v36, %v428
    %430 = vmatpush1.msra.mxu0 %v429
    %431 = vmatprep.subr.mxu0 0.0
    %v432 = vand.u32 %v37, 4294901760
    %v433 = vsub.f32 %v37, %v432
    %434 = vmatpush1.msra.mxu0 %v433
    %435 = vmatprep.subr.mxu0 0.0
    %v436 = vand.u32 %v38, 4294901760
    %v437 = vsub.f32 %v38, %v436
    %438 = vmatpush1.msra.mxu0 %v437
    %439 = vmatprep.subr.mxu0 0.0
    %v440 = vand.u32 %v39, 4294901760
    %v441 = vsub.f32 %v39, %v440
    %442 = vmatpush1.msra.mxu0 %v441
    %443 = vmatprep.subr.mxu0 0.0
    %v444 = vand.u32 %v40, 4294901760
    %v445 = vsub.f32 %v40, %v444
    %446 = vmatpush1.msra.mxu0 %v445
    %447 = vmatprep.subr.mxu0 0.0
    %v448 = vand.u32 %v41, 4294901760
    %v449 = vsub.f32 %v41, %v448
    %450 = vmatpush1.msra.mxu0 %v449
    %451 = vmatprep.subr.mxu0 0.0
    %v452 = vand.u32 %v42, 4294901760
    %v453 = vsub.f32 %v42, %v452
    %454 = vmatpush1.msra.mxu0 %v453
    %455 = vmatprep.subr.mxu0 0.0
    %v456 = vand.u32 %v43, 4294901760
    %v457 = vsub.f32 %v43, %v456
    %458 = vmatpush1.msra.mxu0 %v457
    %459 = vmatprep.subr.mxu0 0.0
    %v460 = vand.u32 %v44, 4294901760
    %v461 = vsub.f32 %v44, %v460
    %462 = vmatpush1.msra.mxu0 %v461
    %463 = vmatprep.subr.mxu0 0.0
    %v464 = vand.u32 %v45, 4294901760
    %v465 = vsub.f32 %v45, %v464
    %466 = vmatpush1.msra.mxu0 %v465
    %467 = vmatprep.subr.mxu0 0.0
    %v468 = vand.u32 %v46, 4294901760
    %v469 = vsub.f32 %v46, %v468
    %470 = vmatpush1.msra.mxu0 %v469
    %471 = vmatprep.subr.mxu0 0.0
    %v472 = vand.u32 %v47, 4294901760
    %v473 = vsub.f32 %v47, %v472
    %474 = vmatpush1.msra.mxu0 %v473
    %475 = vmatprep.subr.mxu0 0.0
    %v476 = vand.u32 %v48, 4294901760
    %v477 = vsub.f32 %v48, %v476
    %478 = vmatpush1.msra.mxu0 %v477
    %479 = vmatprep.subr.mxu0 0.0
    %v480 = vand.u32 %v49, 4294901760
    %v481 = vsub.f32 %v49, %v480
    %482 = vmatpush1.msra.mxu0 %v481
    %483 = vmatprep.subr.mxu0 0.0
    %v484 = vand.u32 %v50, 4294901760
    %v485 = vsub.f32 %v50, %v484
    %486 = vmatpush1.msra.mxu0 %v485
    %487 = vmatprep.subr.mxu0 0.0
    %v488 = vand.u32 %v51, 4294901760
    %v489 = vsub.f32 %v51, %v488
    %490 = vmatpush1.msra.mxu0 %v489
    %491 = vmatprep.subr.mxu0 0.0
    %v492 = vand.u32 %v52, 4294901760
    %v493 = vsub.f32 %v52, %v492
    %494 = vmatpush1.msra.mxu0 %v493
    %495 = vmatprep.subr.mxu0 0.0
    %v496 = vand.u32 %v53, 4294901760
    %v497 = vsub.f32 %v53, %v496
    %498 = vmatpush1.msra.mxu0 %v497
    %499 = vmatprep.subr.mxu0 0.0
    %v500 = vand.u32 %v54, 4294901760
    %v501 = vsub.f32 %v54, %v500
    %502 = vmatpush1.msra.mxu0 %v501
    %503 = vmatprep.subr.mxu0 0.0
    %v504 = vand.u32 %v55, 4294901760
    %v505 = vsub.f32 %v55, %v504
    %506 = vmatpush1.msra.mxu0 %v505
    %507 = vmatprep.subr.mxu0 0.0
    %v508 = vand.u32 %v56, 4294901760
    %v509 = vsub.f32 %v56, %v508
    %510 = vmatpush1.msra.mxu0 %v509
    %511 = vmatprep.subr.mxu0 0.0
    %v512 = vand.u32 %v57, 4294901760
    %v513 = vsub.f32 %v57, %v512
    %514 = vmatpush1.msra.mxu0 %v513
    %515 = vmatprep.subr.mxu0 0.0
    %v516 = vand.u32 %v58, 4294901760
    %v517 = vsub.f32 %v58, %v516
    %518 = vmatpush1.msra.mxu0 %v517
    %519 = vmatprep.subr.mxu0 0.0
    %v520 = vand.u32 %v59, 4294901760
    %v521 = vsub.f32 %v59, %v520
    %522 = vmatpush1.msra.mxu0 %v521
    %523 = vmatprep.subr.mxu0 0.0
    %v524 = vand.u32 %v60, 4294901760
    %v525 = vsub.f32 %v60, %v524
    %526 = vmatpush1.msra.mxu0 %v525
    %527 = vmatprep.subr.mxu0 0.0
    %v528 = vand.u32 %v61, 4294901760
    %v529 = vsub.f32 %v61, %v528
    %530 = vmatpush1.msra.mxu0 %v529
    %531 = vmatprep.subr.mxu0 0.0
    %v532 = vand.u32 %v62, 4294901760
    %v533 = vsub.f32 %v62, %v532
    %534 = vmatpush1.msra.mxu0 %v533
    %v535 = vand.u32 %v30, 4294901760
    %v536 = vsub.f32 %v30, %v535
    %537 = vmatprep.mubr.f32.mxu0 %v536
    %v538 = vand.u32 %v29, 4294901760
    %v539 = vsub.f32 %v29, %v538
    %540 = vmatmul.mubr.f32.gmra.mrb[0].mxu0 %v539
    %v541 = vpop.f32.mrb[0].mxu0
    %v542 = vadd.f32 %v404, %v541
    %v543 = vpop.f32.mrb[0].mxu0
    %544 = vdwg.mxu0
    %545 = vmatprep.subr.mxu0 0.0
    %v546 = vand.u32 %v31, 4294901760
    %547 = vmatpush1.msra.mxu0 %v546
    %548 = vmatprep.subr.mxu0 0.0
    %v549 = vand.u32 %v32, 4294901760
    %550 = vmatpush1.msra.mxu0 %v549
    %551 = vmatprep.subr.mxu0 0.0
    %v552 = vand.u32 %v33, 4294901760
    %553 = vmatpush1.msra.mxu0 %v552
    %554 = vmatprep.subr.mxu0 0.0
    %v555 = vand.u32 %v34, 4294901760
    %556 = vmatpush1.msra.mxu0 %v555
    %557 = vmatprep.subr.mxu0 0.0
    %v558 = vand.u32 %v35, 4294901760
    %559 = vmatpush1.msra.mxu0 %v558
    %560 = vmatprep.subr.mxu0 0.0
    %v561 = vand.u32 %v36, 4294901760
    %562 = vmatpush1.msra.mxu0 %v561
    %563 = vmatprep.subr.mxu0 0.0
    %v564 = vand.u32 %v37, 4294901760
    %565 = vmatpush1.msra.mxu0 %v564
    %566 = vmatprep.subr.mxu0 0.0
    %v567 = vand.u32 %v38, 4294901760
    %568 = vmatpush1.msra.mxu0 %v567
    %569 = vmatprep.subr.mxu0 0.0
    %v570 = vand.u32 %v39, 4294901760
    %571 = vmatpush1.msra.mxu0 %v570
    %572 = vmatprep.subr.mxu0 0.0
    %v573 = vand.u32 %v40, 4294901760
    %574 = vmatpush1.msra.mxu0 %v573
    %575 = vmatprep.subr.mxu0 0.0
    %v576 = vand.u32 %v41, 4294901760
    %577 = vmatpush1.msra.mxu0 %v576
    %578 = vmatprep.subr.mxu0 0.0
    %v579 = vand.u32 %v42, 4294901760
    %580 = vmatpush1.msra.mxu0 %v579
    %581 = vmatprep.subr.mxu0 0.0
    %v582 = vand.u32 %v43, 4294901760
    %583 = vmatpush1.msra.mxu0 %v582
    %584 = vmatprep.subr.mxu0 0.0
    %v585 = vand.u32 %v44, 4294901760
    %586 = vmatpush1.msra.mxu0 %v585
    %587 = vmatprep.subr.mxu0 0.0
    %v588 = vand.u32 %v45, 4294901760
    %589 = vmatpush1.msra.mxu0 %v588
    %590 = vmatprep.subr.mxu0 0.0
    %v591 = vand.u32 %v46, 4294901760
    %592 = vmatpush1.msra.mxu0 %v591
    %593 = vmatprep.subr.mxu0 0.0
    %v594 = vand.u32 %v47, 4294901760
    %595 = vmatpush1.msra.mxu0 %v594
    %596 = vmatprep.subr.mxu0 0.0
    %v597 = vand.u32 %v48, 4294901760
    %598 = vmatpush1.msra.mxu0 %v597
    %599 = vmatprep.subr.mxu0 0.0
    %v600 = vand.u32 %v49, 4294901760
    %601 = vmatpush1.msra.mxu0 %v600
    %602 = vmatprep.subr.mxu0 0.0
    %v603 = vand.u32 %v50, 4294901760
    %604 = vmatpush1.msra.mxu0 %v603
    %605 = vmatprep.subr.mxu0 0.0
    %v606 = vand.u32 %v51, 4294901760
    %607 = vmatpush1.msra.mxu0 %v606
    %608 = vmatprep.subr.mxu0 0.0
    %v609 = vand.u32 %v52, 4294901760
    %610 = vmatpush1.msra.mxu0 %v609
    %611 = vmatprep.subr.mxu0 0.0
    %v612 = vand.u32 %v53, 4294901760
    %613 = vmatpush1.msra.mxu0 %v612
    %614 = vmatprep.subr.mxu0 0.0
    %v615 = vand.u32 %v54, 4294901760
    %616 = vmatpush1.msra.mxu0 %v615
    %617 = vmatprep.subr.mxu0 0.0
    %v618 = vand.u32 %v55, 4294901760
    %619 = vmatpush1.msra.mxu0 %v618
    %620 = vmatprep.subr.mxu0 0.0
    %v621 = vand.u32 %v56, 4294901760
    %622 = vmatpush1.msra.mxu0 %v621
    %623 = vmatprep.subr.mxu0 0.0
    %v624 = vand.u32 %v57, 4294901760
    %625 = vmatpush1.msra.mxu0 %v624
    %626 = vmatprep.subr.mxu0 0.0
    %v627 = vand.u32 %v58, 4294901760
    %628 = vmatpush1.msra.mxu0 %v627
    %629 = vmatprep.subr.mxu0 0.0
    %v630 = vand.u32 %v59, 4294901760
    %631 = vmatpush1.msra.mxu0 %v630
    %632 = vmatprep.subr.mxu0 0.0
    %v633 = vand.u32 %v60, 4294901760
    %634 = vmatpush1.msra.mxu0 %v633
    %635 = vmatprep.subr.mxu0 0.0
    %v636 = vand.u32 %v61, 4294901760
    %637 = vmatpush1.msra.mxu0 %v636
    %638 = vmatprep.subr.mxu0 0.0
    %v639 = vand.u32 %v62, 4294901760
    %640 = vmatpush1.msra.mxu0 %v639
    %v641 = vand.u32 %v30, 4294901760
    %v642 = vsub.f32 %v30, %v641
    %v643 = vand.u32 %v642, 4294901760
    %644 = vmatprep.mubr.f32.mxu0 %v643
    %v645 = vand.u32 %v29, 4294901760
    %v646 = vsub.f32 %v29, %v645
    %v647 = vand.u32 %v646, 4294901760
    %648 = vmatmul.mubr.f32.gmra.mrb[0].mxu0 %v647
    %v649 = vpop.f32.mrb[0].mxu0
    %v650 = vadd.f32 %v542, %v649
    %v651 = vpop.f32.mrb[0].mxu0
    %652 = vdwg.mxu0
    %653 = vmatprep.subr.mxu0 0.0
    %v654 = vand.u32 %v31, 4294901760
    %v655 = vsub.f32 %v31, %v654
    %v656 = vand.u32 %v655, 4294901760
    %657 = vmatpush1.msra.mxu0 %v656
    %658 = vmatprep.subr.mxu0 0.0
    %v659 = vand.u32 %v32, 4294901760
    %v660 = vsub.f32 %v32, %v659
    %v661 = vand.u32 %v660, 4294901760
    %662 = vmatpush1.msra.mxu0 %v661
    %663 = vmatprep.subr.mxu0 0.0
    %v664 = vand.u32 %v33, 4294901760
    %v665 = vsub.f32 %v33, %v664
    %v666 = vand.u32 %v665, 4294901760
    %667 = vmatpush1.msra.mxu0 %v666
    %668 = vmatprep.subr.mxu0 0.0
    %v669 = vand.u32 %v34, 4294901760
    %v670 = vsub.f32 %v34, %v669
    %v671 = vand.u32 %v670, 4294901760
    %672 = vmatpush1.msra.mxu0 %v671
    %673 = vmatprep.subr.mxu0 0.0
    %v674 = vand.u32 %v35, 4294901760
    %v675 = vsub.f32 %v35, %v674
    %v676 = vand.u32 %v675, 4294901760
    %677 = vmatpush1.msra.mxu0 %v676
    %678 = vmatprep.subr.mxu0 0.0
    %v679 = vand.u32 %v36, 4294901760
    %v680 = vsub.f32 %v36, %v679
    %v681 = vand.u32 %v680, 4294901760
    %682 = vmatpush1.msra.mxu0 %v681
    %683 = vmatprep.subr.mxu0 0.0
    %v684 = vand.u32 %v37, 4294901760
    %v685 = vsub.f32 %v37, %v684
    %v686 = vand.u32 %v685, 4294901760
    %687 = vmatpush1.msra.mxu0 %v686
    %688 = vmatprep.subr.mxu0 0.0
    %v689 = vand.u32 %v38, 4294901760
    %v690 = vsub.f32 %v38, %v689
    %v691 = vand.u32 %v690, 4294901760
    %692 = vmatpush1.msra.mxu0 %v691
    %693 = vmatprep.subr.mxu0 0.0
    %v694 = vand.u32 %v39, 4294901760
    %v695 = vsub.f32 %v39, %v694
    %v696 = vand.u32 %v695, 4294901760
    %697 = vmatpush1.msra.mxu0 %v696
    %698 = vmatprep.subr.mxu0 0.0
    %v699 = vand.u32 %v40, 4294901760
    %v700 = vsub.f32 %v40, %v699
    %v701 = vand.u32 %v700, 4294901760
    %702 = vmatpush1.msra.mxu0 %v701
    %703 = vmatprep.subr.mxu0 0.0
    %v704 = vand.u32 %v41, 4294901760
    %v705 = vsub.f32 %v41, %v704
    %v706 = vand.u32 %v705, 4294901760
    %707 = vmatpush1.msra.mxu0 %v706
    %708 = vmatprep.subr.mxu0 0.0
    %v709 = vand.u32 %v42, 4294901760
    %v710 = vsub.f32 %v42, %v709
    %v711 = vand.u32 %v710, 4294901760
    %712 = vmatpush1.msra.mxu0 %v711
    %713 = vmatprep.subr.mxu0 0.0
    %v714 = vand.u32 %v43, 4294901760
    %v715 = vsub.f32 %v43, %v714
    %v716 = vand.u32 %v715, 4294901760
    %717 = vmatpush1.msra.mxu0 %v716
    %718 = vmatprep.subr.mxu0 0.0
    %v719 = vand.u32 %v44, 4294901760
    %v720 = vsub.f32 %v44, %v719
    %v721 = vand.u32 %v720, 4294901760
    %722 = vmatpush1.msra.mxu0 %v721
    %723 = vmatprep.subr.mxu0 0.0
    %v724 = vand.u32 %v45, 4294901760
    %v725 = vsub.f32 %v45, %v724
    %v726 = vand.u32 %v725, 4294901760
    %727 = vmatpush1.msra.mxu0 %v726
    %728 = vmatprep.subr.mxu0 0.0
    %v729 = vand.u32 %v46, 4294901760
    %v730 = vsub.f32 %v46, %v729
    %v731 = vand.u32 %v730, 4294901760
    %732 = vmatpush1.msra.mxu0 %v731
    %733 = vmatprep.subr.mxu0 0.0
    %v734 = vand.u32 %v47, 4294901760
    %v735 = vsub.f32 %v47, %v734
    %v736 = vand.u32 %v735, 4294901760
    %737 = vmatpush1.msra.mxu0 %v736
    %738 = vmatprep.subr.mxu0 0.0
    %v739 = vand.u32 %v48, 4294901760
    %v740 = vsub.f32 %v48, %v739
    %v741 = vand.u32 %v740, 4294901760
    %742 = vmatpush1.msra.mxu0 %v741
    %743 = vmatprep.subr.mxu0 0.0
    %v744 = vand.u32 %v49, 4294901760
    %v745 = vsub.f32 %v49, %v744
    %v746 = vand.u32 %v745, 4294901760
    %747 = vmatpush1.msra.mxu0 %v746
    %748 = vmatprep.subr.mxu0 0.0
    %v749 = vand.u32 %v50, 4294901760
    %v750 = vsub.f32 %v50, %v749
    %v751 = vand.u32 %v750, 4294901760
    %752 = vmatpush1.msra.mxu0 %v751
    %753 = vmatprep.subr.mxu0 0.0
    %v754 = vand.u32 %v51, 4294901760
    %v755 = vsub.f32 %v51, %v754
    %v756 = vand.u32 %v755, 4294901760
    %757 = vmatpush1.msra.mxu0 %v756
    %758 = vmatprep.subr.mxu0 0.0
    %v759 = vand.u32 %v52, 4294901760
    %v760 = vsub.f32 %v52, %v759
    %v761 = vand.u32 %v760, 4294901760
    %762 = vmatpush1.msra.mxu0 %v761
    %763 = vmatprep.subr.mxu0 0.0
    %v764 = vand.u32 %v53, 4294901760
    %v765 = vsub.f32 %v53, %v764
    %v766 = vand.u32 %v765, 4294901760
    %767 = vmatpush1.msra.mxu0 %v766
    %768 = vmatprep.subr.mxu0 0.0
    %v769 = vand.u32 %v54, 4294901760
    %v770 = vsub.f32 %v54, %v769
    %v771 = vand.u32 %v770, 4294901760
    %772 = vmatpush1.msra.mxu0 %v771
    %773 = vmatprep.subr.mxu0 0.0
    %v774 = vand.u32 %v55, 4294901760
    %v775 = vsub.f32 %v55, %v774
    %v776 = vand.u32 %v775, 4294901760
    %777 = vmatpush1.msra.mxu0 %v776
    %778 = vmatprep.subr.mxu0 0.0
    %v779 = vand.u32 %v56, 4294901760
    %v780 = vsub.f32 %v56, %v779
    %v781 = vand.u32 %v780, 4294901760
    %782 = vmatpush1.msra.mxu0 %v781
    %783 = vmatprep.subr.mxu0 0.0
    %v784 = vand.u32 %v57, 4294901760
    %v785 = vsub.f32 %v57, %v784
    %v786 = vand.u32 %v785, 4294901760
    %787 = vmatpush1.msra.mxu0 %v786
    %788 = vmatprep.subr.mxu0 0.0
    %v789 = vand.u32 %v58, 4294901760
    %v790 = vsub.f32 %v58, %v789
    %v791 = vand.u32 %v790, 4294901760
    %792 = vmatpush1.msra.mxu0 %v791
    %793 = vmatprep.subr.mxu0 0.0
    %v794 = vand.u32 %v59, 4294901760
    %v795 = vsub.f32 %v59, %v794
    %v796 = vand.u32 %v795, 4294901760
    %797 = vmatpush1.msra.mxu0 %v796
    %798 = vmatprep.subr.mxu0 0.0
    %v799 = vand.u32 %v60, 4294901760
    %v800 = vsub.f32 %v60, %v799
    %v801 = vand.u32 %v800, 4294901760
    %802 = vmatpush1.msra.mxu0 %v801
    %803 = vmatprep.subr.mxu0 0.0
    %v804 = vand.u32 %v61, 4294901760
    %v805 = vsub.f32 %v61, %v804
    %v806 = vand.u32 %v805, 4294901760
    %807 = vmatpush1.msra.mxu0 %v806
    %808 = vmatprep.subr.mxu0 0.0
    %v809 = vand.u32 %v62, 4294901760
    %v810 = vsub.f32 %v62, %v809
    %v811 = vand.u32 %v810, 4294901760
    %812 = vmatpush1.msra.mxu0 %v811
    %v813 = vand.u32 %v30, 4294901760
    %814 = vmatprep.mubr.f32.mxu0 %v813
    %v815 = vand.u32 %v29, 4294901760
    %816 = vmatmul.mubr.f32.gmra.mrb[0].mxu0 %v815
    %v817 = vpop.f32.mrb[0].mxu0
    %v818 = vadd.f32 %v650, %v817
    %v819 = vpop.f32.mrb[0].mxu0
    %820 = vdwg.mxu0
    %821 = vmatprep.subr.mxu0 0.0
    %v822 = vand.u32 %v31, 4294901760
    %823 = vmatpush1.msra.mxu0 %v822
    %824 = vmatprep.subr.mxu0 0.0
    %v825 = vand.u32 %v32, 4294901760
    %826 = vmatpush1.msra.mxu0 %v825
    %827 = vmatprep.subr.mxu0 0.0
    %v828 = vand.u32 %v33, 4294901760
    %829 = vmatpush1.msra.mxu0 %v828
    %830 = vmatprep.subr.mxu0 0.0
    %v831 = vand.u32 %v34, 4294901760
    %832 = vmatpush1.msra.mxu0 %v831
    %833 = vmatprep.subr.mxu0 0.0
    %v834 = vand.u32 %v35, 4294901760
    %835 = vmatpush1.msra.mxu0 %v834
    %836 = vmatprep.subr.mxu0 0.0
    %v837 = vand.u32 %v36, 4294901760
    %838 = vmatpush1.msra.mxu0 %v837
    %839 = vmatprep.subr.mxu0 0.0
    %v840 = vand.u32 %v37, 4294901760
    %841 = vmatpush1.msra.mxu0 %v840
    %842 = vmatprep.subr.mxu0 0.0
    %v843 = vand.u32 %v38, 4294901760
    %844 = vmatpush1.msra.mxu0 %v843
    %845 = vmatprep.subr.mxu0 0.0
    %v846 = vand.u32 %v39, 4294901760
    %847 = vmatpush1.msra.mxu0 %v846
    %848 = vmatprep.subr.mxu0 0.0
    %v849 = vand.u32 %v40, 4294901760
    %850 = vmatpush1.msra.mxu0 %v849
    %851 = vmatprep.subr.mxu0 0.0
    %v852 = vand.u32 %v41, 4294901760
    %853 = vmatpush1.msra.mxu0 %v852
    %854 = vmatprep.subr.mxu0 0.0
    %v855 = vand.u32 %v42, 4294901760
    %856 = vmatpush1.msra.mxu0 %v855
    %857 = vmatprep.subr.mxu0 0.0
    %v858 = vand.u32 %v43, 4294901760
    %859 = vmatpush1.msra.mxu0 %v858
    %860 = vmatprep.subr.mxu0 0.0
    %v861 = vand.u32 %v44, 4294901760
    %862 = vmatpush1.msra.mxu0 %v861
    %863 = vmatprep.subr.mxu0 0.0
    %v864 = vand.u32 %v45, 4294901760
    %865 = vmatpush1.msra.mxu0 %v864
    %866 = vmatprep.subr.mxu0 0.0
    %v867 = vand.u32 %v46, 4294901760
    %868 = vmatpush1.msra.mxu0 %v867
    %869 = vmatprep.subr.mxu0 0.0
    %v870 = vand.u32 %v47, 4294901760
    %871 = vmatpush1.msra.mxu0 %v870
    %872 = vmatprep.subr.mxu0 0.0
    %v873 = vand.u32 %v48, 4294901760
    %874 = vmatpush1.msra.mxu0 %v873
    %875 = vmatprep.subr.mxu0 0.0
    %v876 = vand.u32 %v49, 4294901760
    %877 = vmatpush1.msra.mxu0 %v876
    %878 = vmatprep.subr.mxu0 0.0
    %v879 = vand.u32 %v50, 4294901760
    %880 = vmatpush1.msra.mxu0 %v879
    %881 = vmatprep.subr.mxu0 0.0
    %v882 = vand.u32 %v51, 4294901760
    %883 = vmatpush1.msra.mxu0 %v882
    %884 = vmatprep.subr.mxu0 0.0
    %v885 = vand.u32 %v52, 4294901760
    %886 = vmatpush1.msra.mxu0 %v885
    %887 = vmatprep.subr.mxu0 0.0
    %v888 = vand.u32 %v53, 4294901760
    %889 = vmatpush1.msra.mxu0 %v888
    %890 = vmatprep.subr.mxu0 0.0
    %v891 = vand.u32 %v54, 4294901760
    %892 = vmatpush1.msra.mxu0 %v891
    %893 = vmatprep.subr.mxu0 0.0
    %v894 = vand.u32 %v55, 4294901760
    %895 = vmatpush1.msra.mxu0 %v894
    %896 = vmatprep.subr.mxu0 0.0
    %v897 = vand.u32 %v56, 4294901760
    %898 = vmatpush1.msra.mxu0 %v897
    %899 = vmatprep.subr.mxu0 0.0
    %v900 = vand.u32 %v57, 4294901760
    %901 = vmatpush1.msra.mxu0 %v900
    %902 = vmatprep.subr.mxu0 0.0
    %v903 = vand.u32 %v58, 4294901760
    %904 = vmatpush1.msra.mxu0 %v903
    %905 = vmatprep.subr.mxu0 0.0
    %v906 = vand.u32 %v59, 4294901760
    %907 = vmatpush1.msra.mxu0 %v906
    %908 = vmatprep.subr.mxu0 0.0
    %v909 = vand.u32 %v60, 4294901760
    %910 = vmatpush1.msra.mxu0 %v909
    %911 = vmatprep.subr.mxu0 0.0
    %v912 = vand.u32 %v61, 4294901760
    %913 = vmatpush1.msra.mxu0 %v912
    %914 = vmatprep.subr.mxu0 0.0
    %v915 = vand.u32 %v62, 4294901760
    %916 = vmatpush1.msra.mxu0 %v915
    %v917 = vand.u32 %v30, 4294901760
    %918 = vmatprep.mubr.f32.mxu0 %v917
    %v919 = vand.u32 %v29, 4294901760
    %920 = vmatmul.mubr.f32.gmra.mrb[0].mxu0 %v919
    %v921 = vpop.f32.mrb[0].mxu0
    %v922 = vadd.f32 %v818, %v921
    %v923 = vpop.f32.mrb[0].mxu0
    %924 = vdwg.mxu0
    %v925 = vld [vmem:[%s1 + $0x100] sm:$0x3f]
    %v926 = vld [vmem:[%s1 + $0x108] sm:$0xff]
    %v927 = vld [vmem:[%s1 + $0x110] sm:$0xff]
    %v928 = vld [vmem:[%s1 + $0x118] sm:$0xff]
    %v929 = vld [vmem:[%s1 + $0x120] sm:$0xff]
    %vm930 = vcmask 261120
    %v932 = vsel %vm930, %v922, 0
    %934 = vmatprep.subr.mxu0 0.0
    %v935 = vand.u32 %v926, 4294901760
    %936 = vmatpush1.msra.mxu0 %v935
    %937 = vmatprep.subr.mxu0 0.0
    %v938 = vand.u32 %v927, 4294901760
    %939 = vmatpush1.msra.mxu0 %v938
    %940 = vmatprep.subr.mxu0 0.0
    %v941 = vand.u32 %v928, 4294901760
    %942 = vmatpush1.msra.mxu0 %v941
    %943 = vmatprep.subr.mxu0 0.0
    %v944 = vand.u32 %v929, 4294901760
    %945 = vmatpush1.msra.mxu0 %v944
    %946 = vmatprep.subr.mxu0 0.0
    %947 = vmatpush1.msra.mxu0 0.0
    %948 = vmatprep.subr.mxu0 0.0
    %949 = vmatpush1.msra.mxu0 0.0
    %950 = vmatprep.subr.mxu0 0.0
    %951 = vmatpush1.msra.mxu0 0.0
    %952 = vmatprep.subr.mxu0 0.0
    %953 = vmatpush1.msra.mxu0 0.0
    %954 = vmatprep.subr.mxu0 0.0
    %955 = vmatpush1.msra.mxu0 0.0
    %956 = vmatprep.subr.mxu0 0.0
    %957 = vmatpush1.msra.mxu0 0.0
    %958 = vmatprep.subr.mxu0 0.0
    %959 = vmatpush1.msra.mxu0 0.0
    %960 = vmatprep.subr.mxu0 0.0
    %961 = vmatpush1.msra.mxu0 0.0
    %962 = vmatprep.subr.mxu0 0.0
    %963 = vmatpush1.msra.mxu0 0.0
    %964 = vmatprep.subr.mxu0 0.0
    %965 = vmatpush1.msra.mxu0 0.0
    %966 = vmatprep.subr.mxu0 0.0
    %967 = vmatpush1.msra.mxu0 0.0
    %968 = vmatprep.subr.mxu0 0.0
    %969 = vmatpush1.msra.mxu0 0.0
    %970 = vmatprep.subr.mxu0 0.0
    %971 = vmatpush1.msra.mxu0 0.0
    %972 = vmatprep.subr.mxu0 0.0
    %973 = vmatpush1.msra.mxu0 0.0
    %974 = vmatprep.subr.mxu0 0.0
    %975 = vmatpush1.msra.mxu0 0.0
    %976 = vmatprep.subr.mxu0 0.0
    %977 = vmatpush1.msra.mxu0 0.0
    %978 = vmatprep.subr.mxu0 0.0
    %979 = vmatpush1.msra.mxu0 0.0
    %980 = vmatprep.subr.mxu0 0.0
    %981 = vmatpush1.msra.mxu0 0.0
    %982 = vmatprep.subr.mxu0 0.0
    %983 = vmatpush1.msra.mxu0 0.0
    %984 = vmatprep.subr.mxu0 0.0
    %985 = vmatpush1.msra.mxu0 0.0
    %986 = vmatprep.subr.mxu0 0.0
    %987 = vmatpush1.msra.mxu0 0.0
    %988 = vmatprep.subr.mxu0 0.0
    %989 = vmatpush1.msra.mxu0 0.0
    %990 = vmatprep.subr.mxu0 0.0
    %991 = vmatpush1.msra.mxu0 0.0
    %992 = vmatprep.subr.mxu0 0.0
    %993 = vmatpush1.msra.mxu0 0.0
    %994 = vmatprep.subr.mxu0 0.0
    %995 = vmatpush1.msra.mxu0 0.0
    %996 = vmatprep.subr.mxu0 0.0
    %997 = vmatpush1.msra.mxu0 0.0
    %998 = vmatprep.subr.mxu0 0.0
    %999 = vmatpush1.msra.mxu0 0.0
    %1000 = vmatprep.subr.mxu0 0.0
    %1001 = vmatpush1.msra.mxu0 0.0
    %1002 = vmatprep.mubr.f32.mxu0 0.0
    %v1003 = vand.u32 %v932, 4294901760
    %v1004 = vsub.f32 %v932, %v1003
    %v1005 = vand.u32 %v1004, 4294901760
    %v1006 = vsub.f32 %v1004, %v1005
    %v1007 = vand.u32 %v1006, 4294901760
    %1008 = vmatmul.mubr.f32.gmra.mrb[0].mxu0 %v1007
    %v1009 = vpop.f32.mrb[0].mxu0
    %v1010 = vadd.f32 0.0, %v1009
    %v1011 = vpop.f32.mrb[0].mxu0
    %1012 = vdwg.mxu0
    %1013 = vmatprep.subr.mxu0 0.0
    %v1014 = vand.u32 %v926, 4294901760
    %v1015 = vsub.f32 %v926, %v1014
    %v1016 = vand.u32 %v1015, 4294901760
    %v1017 = vsub.f32 %v1015, %v1016
    %v1018 = vand.u32 %v1017, 4294901760
    %1019 = vmatpush1.msra.mxu0 %v1018
    %1020 = vmatprep.subr.mxu0 0.0
    %v1021 = vand.u32 %v927, 4294901760
    %v1022 = vsub.f32 %v927, %v1021
    %v1023 = vand.u32 %v1022, 4294901760
    %v1024 = vsub.f32 %v1022, %v1023
    %v1025 = vand.u32 %v1024, 4294901760
    %1026 = vmatpush1.msra.mxu0 %v1025
    %1027 = vmatprep.subr.mxu0 0.0
    %v1028 = vand.u32 %v928, 4294901760
    %v1029 = vsub.f32 %v928, %v1028
    %v1030 = vand.u32 %v1029, 4294901760
    %v1031 = vsub.f32 %v1029, %v1030
    %v1032 = vand.u32 %v1031, 4294901760
    %1033 = vmatpush1.msra.mxu0 %v1032
    %1034 = vmatprep.subr.mxu0 0.0
    %v1035 = vand.u32 %v929, 4294901760
    %v1036 = vsub.f32 %v929, %v1035
    %v1037 = vand.u32 %v1036, 4294901760
    %v1038 = vsub.f32 %v1036, %v1037
    %v1039 = vand.u32 %v1038, 4294901760
    %1040 = vmatpush1.msra.mxu0 %v1039
    %1041 = vmatprep.subr.mxu0 0.0
    %1042 = vmatpush1.msra.mxu0 0.0
    %1043 = vmatprep.subr.mxu0 0.0
    %1044 = vmatpush1.msra.mxu0 0.0
    %1045 = vmatprep.subr.mxu0 0.0
    %1046 = vmatpush1.msra.mxu0 0.0
    %1047 = vmatprep.subr.mxu0 0.0
    %1048 = vmatpush1.msra.mxu0 0.0
    %1049 = vmatprep.subr.mxu0 0.0
    %1050 = vmatpush1.msra.mxu0 0.0
    %1051 = vmatprep.subr.mxu0 0.0
    %1052 = vmatpush1.msra.mxu0 0.0
    %1053 = vmatprep.subr.mxu0 0.0
    %1054 = vmatpush1.msra.mxu0 0.0
    %1055 = vmatprep.subr.mxu0 0.0
    %1056 = vmatpush1.msra.mxu0 0.0
    %1057 = vmatprep.subr.mxu0 0.0
    %1058 = vmatpush1.msra.mxu0 0.0
    %1059 = vmatprep.subr.mxu0 0.0
    %1060 = vmatpush1.msra.mxu0 0.0
    %1061 = vmatprep.subr.mxu0 0.0
    %1062 = vmatpush1.msra.mxu0 0.0
    %1063 = vmatprep.subr.mxu0 0.0
    %1064 = vmatpush1.msra.mxu0 0.0
    %1065 = vmatprep.subr.mxu0 0.0
    %1066 = vmatpush1.msra.mxu0 0.0
    %1067 = vmatprep.subr.mxu0 0.0
    %1068 = vmatpush1.msra.mxu0 0.0
    %1069 = vmatprep.subr.mxu0 0.0
    %1070 = vmatpush1.msra.mxu0 0.0
    %1071 = vmatprep.subr.mxu0 0.0
    %1072 = vmatpush1.msra.mxu0 0.0
    %1073 = vmatprep.subr.mxu0 0.0
    %1074 = vmatpush1.msra.mxu0 0.0
    %1075 = vmatprep.subr.mxu0 0.0
    %1076 = vmatpush1.msra.mxu0 0.0
    %1077 = vmatprep.subr.mxu0 0.0
    %1078 = vmatpush1.msra.mxu0 0.0
    %1079 = vmatprep.subr.mxu0 0.0
    %1080 = vmatpush1.msra.mxu0 0.0
    %1081 = vmatprep.subr.mxu0 0.0
    %1082 = vmatpush1.msra.mxu0 0.0
    %1083 = vmatprep.subr.mxu0 0.0
    %1084 = vmatpush1.msra.mxu0 0.0
    %1085 = vmatprep.subr.mxu0 0.0
    %1086 = vmatpush1.msra.mxu0 0.0
    %1087 = vmatprep.subr.mxu0 0.0
    %1088 = vmatpush1.msra.mxu0 0.0
    %1089 = vmatprep.subr.mxu0 0.0
    %1090 = vmatpush1.msra.mxu0 0.0
    %1091 = vmatprep.subr.mxu0 0.0
    %1092 = vmatpush1.msra.mxu0 0.0
    %1093 = vmatprep.subr.mxu0 0.0
    %1094 = vmatpush1.msra.mxu0 0.0
    %1095 = vmatprep.subr.mxu0 0.0
    %1096 = vmatpush1.msra.mxu0 0.0
    %1097 = vmatprep.mubr.f32.mxu0 0.0
    %v1098 = vand.u32 %v932, 4294901760
    %1099 = vmatmul.mubr.f32.gmra.mrb[0].mxu0 %v1098
    %v1100 = vpop.f32.mrb[0].mxu0
    %v1101 = vadd.f32 %v1010, %v1100
    %v1102 = vpop.f32.mrb[0].mxu0
    %1103 = vdwg.mxu0
    %1104 = vmatprep.subr.mxu0 0.0
    %v1105 = vand.u32 %v926, 4294901760
    %v1106 = vsub.f32 %v926, %v1105
    %1107 = vmatpush1.msra.mxu0 %v1106
    %1108 = vmatprep.subr.mxu0 0.0
    %v1109 = vand.u32 %v927, 4294901760
    %v1110 = vsub.f32 %v927, %v1109
    %1111 = vmatpush1.msra.mxu0 %v1110
    %1112 = vmatprep.subr.mxu0 0.0
    %v1113 = vand.u32 %v928, 4294901760
    %v1114 = vsub.f32 %v928, %v1113
    %1115 = vmatpush1.msra.mxu0 %v1114
    %1116 = vmatprep.subr.mxu0 0.0
    %v1117 = vand.u32 %v929, 4294901760
    %v1118 = vsub.f32 %v929, %v1117
    %1119 = vmatpush1.msra.mxu0 %v1118
    %1120 = vmatprep.subr.mxu0 0.0
    %1121 = vmatpush1.msra.mxu0 0.0
    %1122 = vmatprep.subr.mxu0 0.0
    %1123 = vmatpush1.msra.mxu0 0.0
    %1124 = vmatprep.subr.mxu0 0.0
    %1125 = vmatpush1.msra.mxu0 0.0
    %1126 = vmatprep.subr.mxu0 0.0
    %1127 = vmatpush1.msra.mxu0 0.0
    %1128 = vmatprep.subr.mxu0 0.0
    %1129 = vmatpush1.msra.mxu0 0.0
    %1130 = vmatprep.subr.mxu0 0.0
    %1131 = vmatpush1.msra.mxu0 0.0
    %1132 = vmatprep.subr.mxu0 0.0
    %1133 = vmatpush1.msra.mxu0 0.0
    %1134 = vmatprep.subr.mxu0 0.0
    %1135 = vmatpush1.msra.mxu0 0.0
    %1136 = vmatprep.subr.mxu0 0.0
    %1137 = vmatpush1.msra.mxu0 0.0
    %1138 = vmatprep.subr.mxu0 0.0
    %1139 = vmatpush1.msra.mxu0 0.0
    %1140 = vmatprep.subr.mxu0 0.0
    %1141 = vmatpush1.msra.mxu0 0.0
    %1142 = vmatprep.subr.mxu0 0.0
    %1143 = vmatpush1.msra.mxu0 0.0
    %1144 = vmatprep.subr.mxu0 0.0
    %1145 = vmatpush1.msra.mxu0 0.0
    %1146 = vmatprep.subr.mxu0 0.0
    %1147 = vmatpush1.msra.mxu0 0.0
    %1148 = vmatprep.subr.mxu0 0.0
    %1149 = vmatpush1.msra.mxu0 0.0
    %1150 = vmatprep.subr.mxu0 0.0
    %1151 = vmatpush1.msra.mxu0 0.0
    %1152 = vmatprep.subr.mxu0 0.0
    %1153 = vmatpush1.msra.mxu0 0.0
    %1154 = vmatprep.subr.mxu0 0.0
    %1155 = vmatpush1.msra.mxu0 0.0
    %1156 = vmatprep.subr.mxu0 0.0
    %1157 = vmatpush1.msra.mxu0 0.0
    %1158 = vmatprep.subr.mxu0 0.0
    %1159 = vmatpush1.msra.mxu0 0.0
    %1160 = vmatprep.subr.mxu0 0.0
    %1161 = vmatpush1.msra.mxu0 0.0
    %1162 = vmatprep.subr.mxu0 0.0
    %1163 = vmatpush1.msra.mxu0 0.0
    %1164 = vmatprep.subr.mxu0 0.0
    %1165 = vmatpush1.msra.mxu0 0.0
    %1166 = vmatprep.subr.mxu0 0.0
    %1167 = vmatpush1.msra.mxu0 0.0
    %1168 = vmatprep.subr.mxu0 0.0
    %1169 = vmatpush1.msra.mxu0 0.0
    %1170 = vmatprep.subr.mxu0 0.0
    %1171 = vmatpush1.msra.mxu0 0.0
    %1172 = vmatprep.subr.mxu0 0.0
    %1173 = vmatpush1.msra.mxu0 0.0
    %1174 = vmatprep.subr.mxu0 0.0
    %1175 = vmatpush1.msra.mxu0 0.0
    %1176 = vmatprep.mubr.f32.mxu0 0.0
    %v1177 = vand.u32 %v932, 4294901760
    %v1178 = vsub.f32 %v932, %v1177
    %1179 = vmatmul.mubr.f32.gmra.mrb[0].mxu0 %v1178
    %v1180 = vpop.f32.mrb[0].mxu0
    %v1181 = vadd.f32 %v1101, %v1180
    %v1182 = vpop.f32.mrb[0].mxu0
    %1183 = vdwg.mxu0
    %1184 = vmatprep.subr.mxu0 0.0
    %v1185 = vand.u32 %v926, 4294901760
    %1186 = vmatpush1.msra.mxu0 %v1185
    %1187 = vmatprep.subr.mxu0 0.0
    %v1188 = vand.u32 %v927, 4294901760
    %1189 = vmatpush1.msra.mxu0 %v1188
    %1190 = vmatprep.subr.mxu0 0.0
    %v1191 = vand.u32 %v928, 4294901760
    %1192 = vmatpush1.msra.mxu0 %v1191
    %1193 = vmatprep.subr.mxu0 0.0
    %v1194 = vand.u32 %v929, 4294901760
    %1195 = vmatpush1.msra.mxu0 %v1194
    %1196 = vmatprep.subr.mxu0 0.0
    %1197 = vmatpush1.msra.mxu0 0.0
    %1198 = vmatprep.subr.mxu0 0.0
    %1199 = vmatpush1.msra.mxu0 0.0
    %1200 = vmatprep.subr.mxu0 0.0
    %1201 = vmatpush1.msra.mxu0 0.0
    %1202 = vmatprep.subr.mxu0 0.0
    %1203 = vmatpush1.msra.mxu0 0.0
    %1204 = vmatprep.subr.mxu0 0.0
    %1205 = vmatpush1.msra.mxu0 0.0
    %1206 = vmatprep.subr.mxu0 0.0
    %1207 = vmatpush1.msra.mxu0 0.0
    %1208 = vmatprep.subr.mxu0 0.0
    %1209 = vmatpush1.msra.mxu0 0.0
    %1210 = vmatprep.subr.mxu0 0.0
    %1211 = vmatpush1.msra.mxu0 0.0
    %1212 = vmatprep.subr.mxu0 0.0
    %1213 = vmatpush1.msra.mxu0 0.0
    %1214 = vmatprep.subr.mxu0 0.0
    %1215 = vmatpush1.msra.mxu0 0.0
    %1216 = vmatprep.subr.mxu0 0.0
    %1217 = vmatpush1.msra.mxu0 0.0
    %1218 = vmatprep.subr.mxu0 0.0
    %1219 = vmatpush1.msra.mxu0 0.0
    %1220 = vmatprep.subr.mxu0 0.0
    %1221 = vmatpush1.msra.mxu0 0.0
    %1222 = vmatprep.subr.mxu0 0.0
    %1223 = vmatpush1.msra.mxu0 0.0
    %1224 = vmatprep.subr.mxu0 0.0
    %1225 = vmatpush1.msra.mxu0 0.0
    %1226 = vmatprep.subr.mxu0 0.0
    %1227 = vmatpush1.msra.mxu0 0.0
    %1228 = vmatprep.subr.mxu0 0.0
    %1229 = vmatpush1.msra.mxu0 0.0
    %1230 = vmatprep.subr.mxu0 0.0
    %1231 = vmatpush1.msra.mxu0 0.0
    %1232 = vmatprep.subr.mxu0 0.0
    %1233 = vmatpush1.msra.mxu0 0.0
    %1234 = vmatprep.subr.mxu0 0.0
    %1235 = vmatpush1.msra.mxu0 0.0
    %1236 = vmatprep.subr.mxu0 0.0
    %1237 = vmatpush1.msra.mxu0 0.0
    %1238 = vmatprep.subr.mxu0 0.0
    %1239 = vmatpush1.msra.mxu0 0.0
    %1240 = vmatprep.subr.mxu0 0.0
    %1241 = vmatpush1.msra.mxu0 0.0
    %1242 = vmatprep.subr.mxu0 0.0
    %1243 = vmatpush1.msra.mxu0 0.0
    %1244 = vmatprep.subr.mxu0 0.0
    %1245 = vmatpush1.msra.mxu0 0.0
    %1246 = vmatprep.subr.mxu0 0.0
    %1247 = vmatpush1.msra.mxu0 0.0
    %1248 = vmatprep.subr.mxu0 0.0
    %1249 = vmatpush1.msra.mxu0 0.0
    %1250 = vmatprep.subr.mxu0 0.0
    %1251 = vmatpush1.msra.mxu0 0.0
    %1252 = vmatprep.mubr.f32.mxu0 0.0
    %v1253 = vand.u32 %v932, 4294901760
    %v1254 = vsub.f32 %v932, %v1253
    %v1255 = vand.u32 %v1254, 4294901760
    %1256 = vmatmul.mubr.f32.gmra.mrb[0].mxu0 %v1255
    %v1257 = vpop.f32.mrb[0].mxu0
    %v1258 = vadd.f32 %v1181, %v1257
    %v1259 = vpop.f32.mrb[0].mxu0
    %1260 = vdwg.mxu0
    %1261 = vmatprep.subr.mxu0 0.0
    %v1262 = vand.u32 %v926, 4294901760
    %v1263 = vsub.f32 %v926, %v1262
    %v1264 = vand.u32 %v1263, 4294901760
    %1265 = vmatpush1.msra.mxu0 %v1264
    %1266 = vmatprep.subr.mxu0 0.0
    %v1267 = vand.u32 %v927, 4294901760
    %v1268 = vsub.f32 %v927, %v1267
    %v1269 = vand.u32 %v1268, 4294901760
    %1270 = vmatpush1.msra.mxu0 %v1269
    %1271 = vmatprep.subr.mxu0 0.0
    %v1272 = vand.u32 %v928, 4294901760
    %v1273 = vsub.f32 %v928, %v1272
    %v1274 = vand.u32 %v1273, 4294901760
    %1275 = vmatpush1.msra.mxu0 %v1274
    %1276 = vmatprep.subr.mxu0 0.0
    %v1277 = vand.u32 %v929, 4294901760
    %v1278 = vsub.f32 %v929, %v1277
    %v1279 = vand.u32 %v1278, 4294901760
    %1280 = vmatpush1.msra.mxu0 %v1279
    %1281 = vmatprep.subr.mxu0 0.0
    %1282 = vmatpush1.msra.mxu0 0.0
    %1283 = vmatprep.subr.mxu0 0.0
    %1284 = vmatpush1.msra.mxu0 0.0
    %1285 = vmatprep.subr.mxu0 0.0
    %1286 = vmatpush1.msra.mxu0 0.0
    %1287 = vmatprep.subr.mxu0 0.0
    %1288 = vmatpush1.msra.mxu0 0.0
    %1289 = vmatprep.subr.mxu0 0.0
    %1290 = vmatpush1.msra.mxu0 0.0
    %1291 = vmatprep.subr.mxu0 0.0
    %1292 = vmatpush1.msra.mxu0 0.0
    %1293 = vmatprep.subr.mxu0 0.0
    %1294 = vmatpush1.msra.mxu0 0.0
    %1295 = vmatprep.subr.mxu0 0.0
    %1296 = vmatpush1.msra.mxu0 0.0
    %1297 = vmatprep.subr.mxu0 0.0
    %1298 = vmatpush1.msra.mxu0 0.0
    %1299 = vmatprep.subr.mxu0 0.0
    %1300 = vmatpush1.msra.mxu0 0.0
    %1301 = vmatprep.subr.mxu0 0.0
    %1302 = vmatpush1.msra.mxu0 0.0
    %1303 = vmatprep.subr.mxu0 0.0
    %1304 = vmatpush1.msra.mxu0 0.0
    %1305 = vmatprep.subr.mxu0 0.0
    %1306 = vmatpush1.msra.mxu0 0.0
    %1307 = vmatprep.subr.mxu0 0.0
    %1308 = vmatpush1.msra.mxu0 0.0
    %1309 = vmatprep.subr.mxu0 0.0
    %1310 = vmatpush1.msra.mxu0 0.0
    %1311 = vmatprep.subr.mxu0 0.0
    %1312 = vmatpush1.msra.mxu0 0.0
    %1313 = vmatprep.subr.mxu0 0.0
    %1314 = vmatpush1.msra.mxu0 0.0
    %1315 = vmatprep.subr.mxu0 0.0
    %1316 = vmatpush1.msra.mxu0 0.0
    %1317 = vmatprep.subr.mxu0 0.0
    %1318 = vmatpush1.msra.mxu0 0.0
    %1319 = vmatprep.subr.mxu0 0.0
    %1320 = vmatpush1.msra.mxu0 0.0
    %1321 = vmatprep.subr.mxu0 0.0
    %1322 = vmatpush1.msra.mxu0 0.0
    %1323 = vmatprep.subr.mxu0 0.0
    %1324 = vmatpush1.msra.mxu0 0.0
    %1325 = vmatprep.subr.mxu0 0.0
    %1326 = vmatpush1.msra.mxu0 0.0
    %1327 = vmatprep.subr.mxu0 0.0
    %1328 = vmatpush1.msra.mxu0 0.0
    %1329 = vmatprep.subr.mxu0 0.0
    %1330 = vmatpush1.msra.mxu0 0.0
    %1331 = vmatprep.subr.mxu0 0.0
    %1332 = vmatpush1.msra.mxu0 0.0
    %1333 = vmatprep.subr.mxu0 0.0
    %1334 = vmatpush1.msra.mxu0 0.0
    %1335 = vmatprep.subr.mxu0 0.0
    %1336 = vmatpush1.msra.mxu0 0.0
    %1337 = vmatprep.mubr.f32.mxu0 0.0
    %v1338 = vand.u32 %v932, 4294901760
    %1339 = vmatmul.mubr.f32.gmra.mrb[0].mxu0 %v1338
    %v1340 = vpop.f32.mrb[0].mxu0
    %v1341 = vadd.f32 %v1258, %v1340
    %v1342 = vpop.f32.mrb[0].mxu0
    %1343 = vdwg.mxu0
    %1344 = vmatprep.subr.mxu0 0.0
    %v1345 = vand.u32 %v926, 4294901760
    %1346 = vmatpush1.msra.mxu0 %v1345
    %1347 = vmatprep.subr.mxu0 0.0
    %v1348 = vand.u32 %v927, 4294901760
    %1349 = vmatpush1.msra.mxu0 %v1348
    %1350 = vmatprep.subr.mxu0 0.0
    %v1351 = vand.u32 %v928, 4294901760
    %1352 = vmatpush1.msra.mxu0 %v1351
    %1353 = vmatprep.subr.mxu0 0.0
    %v1354 = vand.u32 %v929, 4294901760
    %1355 = vmatpush1.msra.mxu0 %v1354
    %1356 = vmatprep.subr.mxu0 0.0
    %1357 = vmatpush1.msra.mxu0 0.0
    %1358 = vmatprep.subr.mxu0 0.0
    %1359 = vmatpush1.msra.mxu0 0.0
    %1360 = vmatprep.subr.mxu0 0.0
    %1361 = vmatpush1.msra.mxu0 0.0
    %1362 = vmatprep.subr.mxu0 0.0
    %1363 = vmatpush1.msra.mxu0 0.0
    %1364 = vmatprep.subr.mxu0 0.0
    %1365 = vmatpush1.msra.mxu0 0.0
    %1366 = vmatprep.subr.mxu0 0.0
    %1367 = vmatpush1.msra.mxu0 0.0
    %1368 = vmatprep.subr.mxu0 0.0
    %1369 = vmatpush1.msra.mxu0 0.0
    %1370 = vmatprep.subr.mxu0 0.0
    %1371 = vmatpush1.msra.mxu0 0.0
    %1372 = vmatprep.subr.mxu0 0.0
    %1373 = vmatpush1.msra.mxu0 0.0
    %1374 = vmatprep.subr.mxu0 0.0
    %1375 = vmatpush1.msra.mxu0 0.0
    %1376 = vmatprep.subr.mxu0 0.0
    %1377 = vmatpush1.msra.mxu0 0.0
    %1378 = vmatprep.subr.mxu0 0.0
    %1379 = vmatpush1.msra.mxu0 0.0
    %1380 = vmatprep.subr.mxu0 0.0
    %1381 = vmatpush1.msra.mxu0 0.0
    %1382 = vmatprep.subr.mxu0 0.0
    %1383 = vmatpush1.msra.mxu0 0.0
    %1384 = vmatprep.subr.mxu0 0.0
    %1385 = vmatpush1.msra.mxu0 0.0
    %1386 = vmatprep.subr.mxu0 0.0
    %1387 = vmatpush1.msra.mxu0 0.0
    %1388 = vmatprep.subr.mxu0 0.0
    %1389 = vmatpush1.msra.mxu0 0.0
    %1390 = vmatprep.subr.mxu0 0.0
    %1391 = vmatpush1.msra.mxu0 0.0
    %1392 = vmatprep.subr.mxu0 0.0
    %1393 = vmatpush1.msra.mxu0 0.0
    %1394 = vmatprep.subr.mxu0 0.0
    %1395 = vmatpush1.msra.mxu0 0.0
    %1396 = vmatprep.subr.mxu0 0.0
    %1397 = vmatpush1.msra.mxu0 0.0
    %1398 = vmatprep.subr.mxu0 0.0
    %1399 = vmatpush1.msra.mxu0 0.0
    %1400 = vmatprep.subr.mxu0 0.0
    %1401 = vmatpush1.msra.mxu0 0.0
    %1402 = vmatprep.subr.mxu0 0.0
    %1403 = vmatpush1.msra.mxu0 0.0
    %1404 = vmatprep.subr.mxu0 0.0
    %1405 = vmatpush1.msra.mxu0 0.0
    %1406 = vmatprep.subr.mxu0 0.0
    %1407 = vmatpush1.msra.mxu0 0.0
    %1408 = vmatprep.subr.mxu0 0.0
    %1409 = vmatpush1.msra.mxu0 0.0
    %1410 = vmatprep.subr.mxu0 0.0
    %1411 = vmatpush1.msra.mxu0 0.0
    %1412 = vmatprep.mubr.f32.mxu0 0.0
    %v1413 = vand.u32 %v932, 4294901760
    %1414 = vmatmul.mubr.f32.gmra.mrb[0].mxu0 %v1413
    %v1415 = vpop.f32.mrb[0].mxu0
    %v1416 = vadd.f32 %v1341, %v1415
    %v1417 = vpop.f32.mrb[0].mxu0
    %1418 = vdwg.mxu0
    %vm1419 = vcmask 48128
    %v1421 = vsel %vm1419, %v17, 0
    %vm1423 = vcmask 1045504
    %v1425 = vsel %vm1423, %v925, 0
    %1427 = vmatprep.subr.mxu0 0.0
    %v1428 = vand.u32 %v1425, 4294901760
    %1429 = vmatpush1.msra.mxu0 %v1428
    %1430 = vmatprep.subr.mxu0 0.0
    %1431 = vmatpush1.msra.mxu0 0.0
    %1432 = vmatprep.subr.mxu0 0.0
    %1433 = vmatpush1.msra.mxu0 0.0
    %1434 = vmatprep.subr.mxu0 0.0
    %1435 = vmatpush1.msra.mxu0 0.0
    %1436 = vmatprep.subr.mxu0 0.0
    %1437 = vmatpush1.msra.mxu0 0.0
    %1438 = vmatprep.subr.mxu0 0.0
    %1439 = vmatpush1.msra.mxu0 0.0
    %1440 = vmatprep.subr.mxu0 0.0
    %1441 = vmatpush1.msra.mxu0 0.0
    %1442 = vmatprep.subr.mxu0 0.0
    %1443 = vmatpush1.msra.mxu0 0.0
    %1444 = vmatprep.subr.mxu0 0.0
    %1445 = vmatpush1.msra.mxu0 0.0
    %1446 = vmatprep.subr.mxu0 0.0
    %1447 = vmatpush1.msra.mxu0 0.0
    %1448 = vmatprep.subr.mxu0 0.0
    %1449 = vmatpush1.msra.mxu0 0.0
    %1450 = vmatprep.subr.mxu0 0.0
    %1451 = vmatpush1.msra.mxu0 0.0
    %1452 = vmatprep.subr.mxu0 0.0
    %1453 = vmatpush1.msra.mxu0 0.0
    %1454 = vmatprep.subr.mxu0 0.0
    %1455 = vmatpush1.msra.mxu0 0.0
    %1456 = vmatprep.subr.mxu0 0.0
    %1457 = vmatpush1.msra.mxu0 0.0
    %1458 = vmatprep.subr.mxu0 0.0
    %1459 = vmatpush1.msra.mxu0 0.0
    %1460 = vmatprep.subr.mxu0 0.0
    %1461 = vmatpush1.msra.mxu0 0.0
    %1462 = vmatprep.subr.mxu0 0.0
    %1463 = vmatpush1.msra.mxu0 0.0
    %1464 = vmatprep.subr.mxu0 0.0
    %1465 = vmatpush1.msra.mxu0 0.0
    %1466 = vmatprep.subr.mxu0 0.0
    %1467 = vmatpush1.msra.mxu0 0.0
    %1468 = vmatprep.subr.mxu0 0.0
    %1469 = vmatpush1.msra.mxu0 0.0
    %1470 = vmatprep.subr.mxu0 0.0
    %1471 = vmatpush1.msra.mxu0 0.0
    %1472 = vmatprep.subr.mxu0 0.0
    %1473 = vmatpush1.msra.mxu0 0.0
    %1474 = vmatprep.subr.mxu0 0.0
    %1475 = vmatpush1.msra.mxu0 0.0
    %1476 = vmatprep.subr.mxu0 0.0
    %1477 = vmatpush1.msra.mxu0 0.0
    %1478 = vmatprep.subr.mxu0 0.0
    %1479 = vmatpush1.msra.mxu0 0.0
    %1480 = vmatprep.subr.mxu0 0.0
    %1481 = vmatpush1.msra.mxu0 0.0
    %1482 = vmatprep.subr.mxu0 0.0
    %1483 = vmatpush1.msra.mxu0 0.0
    %1484 = vmatprep.subr.mxu0 0.0
    %1485 = vmatpush1.msra.mxu0 0.0
    %1486 = vmatprep.subr.mxu0 0.0
    %1487 = vmatpush1.msra.mxu0 0.0
    %1488 = vmatprep.subr.mxu0 0.0
    %1489 = vmatpush1.msra.mxu0 0.0
    %1490 = vmatprep.subr.mxu0 0.0
    %1491 = vmatpush1.msra.mxu0 0.0
    %1492 = vmatprep.mubr.f32.mxu0 0.0
    %v1493 = vand.u32 %v1421, 4294901760
    %v1494 = vsub.f32 %v1421, %v1493
    %v1495 = vand.u32 %v1494, 4294901760
    %v1496 = vsub.f32 %v1494, %v1495
    %v1497 = vand.u32 %v1496, 4294901760
    %1498 = vmatmul.mubr.f32.gmra.mrb[0].mxu0 %v1497
    %v1499 = vpop.f32.mrb[0].mxu0
    %v1500 = vadd.f32 %v1416, %v1499
    %v1501 = vpop.f32.mrb[0].mxu0
    %1502 = vdwg.mxu0
    %1503 = vmatprep.subr.mxu0 0.0
    %v1504 = vand.u32 %v1425, 4294901760
    %v1505 = vsub.f32 %v1425, %v1504
    %v1506 = vand.u32 %v1505, 4294901760
    %v1507 = vsub.f32 %v1505, %v1506
    %v1508 = vand.u32 %v1507, 4294901760
    %1509 = vmatpush1.msra.mxu0 %v1508
    %1510 = vmatprep.subr.mxu0 0.0
    %1511 = vmatpush1.msra.mxu0 0.0
    %1512 = vmatprep.subr.mxu0 0.0
    %1513 = vmatpush1.msra.mxu0 0.0
    %1514 = vmatprep.subr.mxu0 0.0
    %1515 = vmatpush1.msra.mxu0 0.0
    %1516 = vmatprep.subr.mxu0 0.0
    %1517 = vmatpush1.msra.mxu0 0.0
    %1518 = vmatprep.subr.mxu0 0.0
    %1519 = vmatpush1.msra.mxu0 0.0
    %1520 = vmatprep.subr.mxu0 0.0
    %1521 = vmatpush1.msra.mxu0 0.0
    %1522 = vmatprep.subr.mxu0 0.0
    %1523 = vmatpush1.msra.mxu0 0.0
    %1524 = vmatprep.subr.mxu0 0.0
    %1525 = vmatpush1.msra.mxu0 0.0
    %1526 = vmatprep.subr.mxu0 0.0
    %1527 = vmatpush1.msra.mxu0 0.0
    %1528 = vmatprep.subr.mxu0 0.0
    %1529 = vmatpush1.msra.mxu0 0.0
    %1530 = vmatprep.subr.mxu0 0.0
    %1531 = vmatpush1.msra.mxu0 0.0
    %1532 = vmatprep.subr.mxu0 0.0
    %1533 = vmatpush1.msra.mxu0 0.0
    %1534 = vmatprep.subr.mxu0 0.0
    %1535 = vmatpush1.msra.mxu0 0.0
    %1536 = vmatprep.subr.mxu0 0.0
    %1537 = vmatpush1.msra.mxu0 0.0
    %1538 = vmatprep.subr.mxu0 0.0
    %1539 = vmatpush1.msra.mxu0 0.0
    %1540 = vmatprep.subr.mxu0 0.0
    %1541 = vmatpush1.msra.mxu0 0.0
    %1542 = vmatprep.subr.mxu0 0.0
    %1543 = vmatpush1.msra.mxu0 0.0
    %1544 = vmatprep.subr.mxu0 0.0
    %1545 = vmatpush1.msra.mxu0 0.0
    %1546 = vmatprep.subr.mxu0 0.0
    %1547 = vmatpush1.msra.mxu0 0.0
    %1548 = vmatprep.subr.mxu0 0.0
    %1549 = vmatpush1.msra.mxu0 0.0
    %1550 = vmatprep.subr.mxu0 0.0
    %1551 = vmatpush1.msra.mxu0 0.0
    %1552 = vmatprep.subr.mxu0 0.0
    %1553 = vmatpush1.msra.mxu0 0.0
    %1554 = vmatprep.subr.mxu0 0.0
    %1555 = vmatpush1.msra.mxu0 0.0
    %1556 = vmatprep.subr.mxu0 0.0
    %1557 = vmatpush1.msra.mxu0 0.0
    %1558 = vmatprep.subr.mxu0 0.0
    %1559 = vmatpush1.msra.mxu0 0.0
    %1560 = vmatprep.subr.mxu0 0.0
    %1561 = vmatpush1.msra.mxu0 0.0
    %1562 = vmatprep.subr.mxu0 0.0
    %1563 = vmatpush1.msra.mxu0 0.0
    %1564 = vmatprep.subr.mxu0 0.0
    %1565 = vmatpush1.msra.mxu0 0.0
    %1566 = vmatprep.subr.mxu0 0.0
    %1567 = vmatpush1.msra.mxu0 0.0
    %1568 = vmatprep.subr.mxu0 0.0
    %1569 = vmatpush1.msra.mxu0 0.0
    %1570 = vmatprep.subr.mxu0 0.0
    %1571 = vmatpush1.msra.mxu0 0.0
    %1572 = vmatprep.mubr.f32.mxu0 0.0
    %v1573 = vand.u32 %v1421, 4294901760
    %1574 = vmatmul.mubr.f32.gmra.mrb[0].mxu0 %v1573
    %v1575 = vpop.f32.mrb[0].mxu0
    %v1576 = vadd.f32 %v1500, %v1575
    %v1577 = vpop.f32.mrb[0].mxu0
    %1578 = vdwg.mxu0
    %1579 = vmatprep.subr.mxu0 0.0
    %v1580 = vand.u32 %v1425, 4294901760
    %v1581 = vsub.f32 %v1425, %v1580
    %1582 = vmatpush1.msra.mxu0 %v1581
    %1583 = vmatprep.subr.mxu0 0.0
    %1584 = vmatpush1.msra.mxu0 0.0
    %1585 = vmatprep.subr.mxu0 0.0
    %1586 = vmatpush1.msra.mxu0 0.0
    %1587 = vmatprep.subr.mxu0 0.0
    %1588 = vmatpush1.msra.mxu0 0.0
    %1589 = vmatprep.subr.mxu0 0.0
    %1590 = vmatpush1.msra.mxu0 0.0
    %1591 = vmatprep.subr.mxu0 0.0
    %1592 = vmatpush1.msra.mxu0 0.0
    %1593 = vmatprep.subr.mxu0 0.0
    %1594 = vmatpush1.msra.mxu0 0.0
    %1595 = vmatprep.subr.mxu0 0.0
    %1596 = vmatpush1.msra.mxu0 0.0
    %1597 = vmatprep.subr.mxu0 0.0
    %1598 = vmatpush1.msra.mxu0 0.0
    %1599 = vmatprep.subr.mxu0 0.0
    %1600 = vmatpush1.msra.mxu0 0.0
    %1601 = vmatprep.subr.mxu0 0.0
    %1602 = vmatpush1.msra.mxu0 0.0
    %1603 = vmatprep.subr.mxu0 0.0
    %1604 = vmatpush1.msra.mxu0 0.0
    %1605 = vmatprep.subr.mxu0 0.0
    %1606 = vmatpush1.msra.mxu0 0.0
    %1607 = vmatprep.subr.mxu0 0.0
    %1608 = vmatpush1.msra.mxu0 0.0
    %1609 = vmatprep.subr.mxu0 0.0
    %1610 = vmatpush1.msra.mxu0 0.0
    %1611 = vmatprep.subr.mxu0 0.0
    %1612 = vmatpush1.msra.mxu0 0.0
    %1613 = vmatprep.subr.mxu0 0.0
    %1614 = vmatpush1.msra.mxu0 0.0
    %1615 = vmatprep.subr.mxu0 0.0
    %1616 = vmatpush1.msra.mxu0 0.0
    %1617 = vmatprep.subr.mxu0 0.0
    %1618 = vmatpush1.msra.mxu0 0.0
    %1619 = vmatprep.subr.mxu0 0.0
    %1620 = vmatpush1.msra.mxu0 0.0
    %1621 = vmatprep.subr.mxu0 0.0
    %1622 = vmatpush1.msra.mxu0 0.0
    %1623 = vmatprep.subr.mxu0 0.0
    %1624 = vmatpush1.msra.mxu0 0.0
    %1625 = vmatprep.subr.mxu0 0.0
    %1626 = vmatpush1.msra.mxu0 0.0
    %1627 = vmatprep.subr.mxu0 0.0
    %1628 = vmatpush1.msra.mxu0 0.0
    %1629 = vmatprep.subr.mxu0 0.0
    %1630 = vmatpush1.msra.mxu0 0.0
    %1631 = vmatprep.subr.mxu0 0.0
    %1632 = vmatpush1.msra.mxu0 0.0
    %1633 = vmatprep.subr.mxu0 0.0
    %1634 = vmatpush1.msra.mxu0 0.0
    %1635 = vmatprep.subr.mxu0 0.0
    %1636 = vmatpush1.msra.mxu0 0.0
    %1637 = vmatprep.subr.mxu0 0.0
    %1638 = vmatpush1.msra.mxu0 0.0
    %1639 = vmatprep.subr.mxu0 0.0
    %1640 = vmatpush1.msra.mxu0 0.0
    %1641 = vmatprep.subr.mxu0 0.0
    %1642 = vmatpush1.msra.mxu0 0.0
    %1643 = vmatprep.subr.mxu0 0.0
    %1644 = vmatpush1.msra.mxu0 0.0
    %1645 = vmatprep.mubr.f32.mxu0 0.0
    %v1646 = vand.u32 %v1421, 4294901760
    %v1647 = vsub.f32 %v1421, %v1646
    %1648 = vmatmul.mubr.f32.gmra.mrb[0].mxu0 %v1647
    %v1649 = vpop.f32.mrb[0].mxu0
    %v1650 = vadd.f32 %v1576, %v1649
    %v1651 = vpop.f32.mrb[0].mxu0
    %1652 = vdwg.mxu0
    %1653 = vmatprep.subr.mxu0 0.0
    %v1654 = vand.u32 %v1425, 4294901760
    %1655 = vmatpush1.msra.mxu0 %v1654
    %1656 = vmatprep.subr.mxu0 0.0
    %1657 = vmatpush1.msra.mxu0 0.0
    %1658 = vmatprep.subr.mxu0 0.0
    %1659 = vmatpush1.msra.mxu0 0.0
    %1660 = vmatprep.subr.mxu0 0.0
    %1661 = vmatpush1.msra.mxu0 0.0
    %1662 = vmatprep.subr.mxu0 0.0
    %1663 = vmatpush1.msra.mxu0 0.0
    %1664 = vmatprep.subr.mxu0 0.0
    %1665 = vmatpush1.msra.mxu0 0.0
    %1666 = vmatprep.subr.mxu0 0.0
    %1667 = vmatpush1.msra.mxu0 0.0
    %1668 = vmatprep.subr.mxu0 0.0
    %1669 = vmatpush1.msra.mxu0 0.0
    %1670 = vmatprep.subr.mxu0 0.0
    %1671 = vmatpush1.msra.mxu0 0.0
    %1672 = vmatprep.subr.mxu0 0.0
    %1673 = vmatpush1.msra.mxu0 0.0
    %1674 = vmatprep.subr.mxu0 0.0
    %1675 = vmatpush1.msra.mxu0 0.0
    %1676 = vmatprep.subr.mxu0 0.0
    %1677 = vmatpush1.msra.mxu0 0.0
    %1678 = vmatprep.subr.mxu0 0.0
    %1679 = vmatpush1.msra.mxu0 0.0
    %1680 = vmatprep.subr.mxu0 0.0
    %1681 = vmatpush1.msra.mxu0 0.0
    %1682 = vmatprep.subr.mxu0 0.0
    %1683 = vmatpush1.msra.mxu0 0.0
    %1684 = vmatprep.subr.mxu0 0.0
    %1685 = vmatpush1.msra.mxu0 0.0
    %1686 = vmatprep.subr.mxu0 0.0
    %1687 = vmatpush1.msra.mxu0 0.0
    %1688 = vmatprep.subr.mxu0 0.0
    %1689 = vmatpush1.msra.mxu0 0.0
    %1690 = vmatprep.subr.mxu0 0.0
    %1691 = vmatpush1.msra.mxu0 0.0
    %1692 = vmatprep.subr.mxu0 0.0
    %1693 = vmatpush1.msra.mxu0 0.0
    %1694 = vmatprep.subr.mxu0 0.0
    %1695 = vmatpush1.msra.mxu0 0.0
    %1696 = vmatprep.subr.mxu0 0.0
    %1697 = vmatpush1.msra.mxu0 0.0
    %1698 = vmatprep.subr.mxu0 0.0
    %1699 = vmatpush1.msra.mxu0 0.0
    %1700 = vmatprep.subr.mxu0 0.0
    %1701 = vmatpush1.msra.mxu0 0.0
    %1702 = vmatprep.subr.mxu0 0.0
    %1703 = vmatpush1.msra.mxu0 0.0
    %1704 = vmatprep.subr.mxu0 0.0
    %1705 = vmatpush1.msra.mxu0 0.0
    %1706 = vmatprep.subr.mxu0 0.0
    %1707 = vmatpush1.msra.mxu0 0.0
    %1708 = vmatprep.subr.mxu0 0.0
    %1709 = vmatpush1.msra.mxu0 0.0
    %1710 = vmatprep.subr.mxu0 0.0
    %1711 = vmatpush1.msra.mxu0 0.0
    %1712 = vmatprep.subr.mxu0 0.0
    %1713 = vmatpush1.msra.mxu0 0.0
    %1714 = vmatprep.subr.mxu0 0.0
    %1715 = vmatpush1.msra.mxu0 0.0
    %1716 = vmatprep.subr.mxu0 0.0
    %1717 = vmatpush1.msra.mxu0 0.0
    %1718 = vmatprep.mubr.f32.mxu0 0.0
    %v1719 = vand.u32 %v1421, 4294901760
    %v1720 = vsub.f32 %v1421, %v1719
    %v1721 = vand.u32 %v1720, 4294901760
    %1722 = vmatmul.mubr.f32.gmra.mrb[0].mxu0 %v1721
    %v1723 = vpop.f32.mrb[0].mxu0
    %v1724 = vadd.f32 %v1650, %v1723
    %v1725 = vpop.f32.mrb[0].mxu0
    %1726 = vdwg.mxu0
    %1727 = vmatprep.subr.mxu0 0.0
    %v1728 = vand.u32 %v1425, 4294901760
    %v1729 = vsub.f32 %v1425, %v1728
    %v1730 = vand.u32 %v1729, 4294901760
    %1731 = vmatpush1.msra.mxu0 %v1730
    %1732 = vmatprep.subr.mxu0 0.0
    %1733 = vmatpush1.msra.mxu0 0.0
    %1734 = vmatprep.subr.mxu0 0.0
    %1735 = vmatpush1.msra.mxu0 0.0
    %1736 = vmatprep.subr.mxu0 0.0
    %1737 = vmatpush1.msra.mxu0 0.0
    %1738 = vmatprep.subr.mxu0 0.0
    %1739 = vmatpush1.msra.mxu0 0.0
    %1740 = vmatprep.subr.mxu0 0.0
    %1741 = vmatpush1.msra.mxu0 0.0
    %1742 = vmatprep.subr.mxu0 0.0
    %1743 = vmatpush1.msra.mxu0 0.0
    %1744 = vmatprep.subr.mxu0 0.0
    %1745 = vmatpush1.msra.mxu0 0.0
    %1746 = vmatprep.subr.mxu0 0.0
    %1747 = vmatpush1.msra.mxu0 0.0
    %1748 = vmatprep.subr.mxu0 0.0
    %1749 = vmatpush1.msra.mxu0 0.0
    %1750 = vmatprep.subr.mxu0 0.0
    %1751 = vmatpush1.msra.mxu0 0.0
    %1752 = vmatprep.subr.mxu0 0.0
    %1753 = vmatpush1.msra.mxu0 0.0
    %1754 = vmatprep.subr.mxu0 0.0
    %1755 = vmatpush1.msra.mxu0 0.0
    %1756 = vmatprep.subr.mxu0 0.0
    %1757 = vmatpush1.msra.mxu0 0.0
    %1758 = vmatprep.subr.mxu0 0.0
    %1759 = vmatpush1.msra.mxu0 0.0
    %1760 = vmatprep.subr.mxu0 0.0
    %1761 = vmatpush1.msra.mxu0 0.0
    %1762 = vmatprep.subr.mxu0 0.0
    %1763 = vmatpush1.msra.mxu0 0.0
    %1764 = vmatprep.subr.mxu0 0.0
    %1765 = vmatpush1.msra.mxu0 0.0
    %1766 = vmatprep.subr.mxu0 0.0
    %1767 = vmatpush1.msra.mxu0 0.0
    %1768 = vmatprep.subr.mxu0 0.0
    %1769 = vmatpush1.msra.mxu0 0.0
    %1770 = vmatprep.subr.mxu0 0.0
    %1771 = vmatpush1.msra.mxu0 0.0
    %1772 = vmatprep.subr.mxu0 0.0
    %1773 = vmatpush1.msra.mxu0 0.0
    %1774 = vmatprep.subr.mxu0 0.0
    %1775 = vmatpush1.msra.mxu0 0.0
    %1776 = vmatprep.subr.mxu0 0.0
    %1777 = vmatpush1.msra.mxu0 0.0
    %1778 = vmatprep.subr.mxu0 0.0
    %1779 = vmatpush1.msra.mxu0 0.0
    %1780 = vmatprep.subr.mxu0 0.0
    %1781 = vmatpush1.msra.mxu0 0.0
    %1782 = vmatprep.subr.mxu0 0.0
    %1783 = vmatpush1.msra.mxu0 0.0
    %1784 = vmatprep.subr.mxu0 0.0
    %1785 = vmatpush1.msra.mxu0 0.0
    %1786 = vmatprep.subr.mxu0 0.0
    %1787 = vmatpush1.msra.mxu0 0.0
    %1788 = vmatprep.subr.mxu0 0.0
    %1789 = vmatpush1.msra.mxu0 0.0
    %1790 = vmatprep.subr.mxu0 0.0
    %1791 = vmatpush1.msra.mxu0 0.0
    %1792 = vmatprep.subr.mxu0 0.0
    %1793 = vmatpush1.msra.mxu0 0.0
    %1794 = vmatprep.mubr.f32.mxu0 0.0
    %v1795 = vand.u32 %v1421, 4294901760
    %1796 = vmatmul.mubr.f32.gmra.mrb[0].mxu0 %v1795
    %v1797 = vpop.f32.mrb[0].mxu0
    %v1798 = vadd.f32 %v1724, %v1797
    %v1799 = vpop.f32.mrb[0].mxu0
    %1800 = vdwg.mxu0
    %1801 = vmatprep.subr.mxu0 0.0
    %v1802 = vand.u32 %v1425, 4294901760
    %1803 = vmatpush1.msra.mxu0 %v1802
    %1804 = vmatprep.subr.mxu0 0.0
    %1805 = vmatpush1.msra.mxu0 0.0
    %1806 = vmatprep.subr.mxu0 0.0
    %1807 = vmatpush1.msra.mxu0 0.0
    %1808 = vmatprep.subr.mxu0 0.0
    %1809 = vmatpush1.msra.mxu0 0.0
    %1810 = vmatprep.subr.mxu0 0.0
    %1811 = vmatpush1.msra.mxu0 0.0
    %1812 = vmatprep.subr.mxu0 0.0
    %1813 = vmatpush1.msra.mxu0 0.0
    %1814 = vmatprep.subr.mxu0 0.0
    %1815 = vmatpush1.msra.mxu0 0.0
    %1816 = vmatprep.subr.mxu0 0.0
    %1817 = vmatpush1.msra.mxu0 0.0
    %1818 = vmatprep.subr.mxu0 0.0
    %1819 = vmatpush1.msra.mxu0 0.0
    %1820 = vmatprep.subr.mxu0 0.0
    %1821 = vmatpush1.msra.mxu0 0.0
    %1822 = vmatprep.subr.mxu0 0.0
    %1823 = vmatpush1.msra.mxu0 0.0
    %1824 = vmatprep.subr.mxu0 0.0
    %1825 = vmatpush1.msra.mxu0 0.0
    %1826 = vmatprep.subr.mxu0 0.0
    %1827 = vmatpush1.msra.mxu0 0.0
    %1828 = vmatprep.subr.mxu0 0.0
    %1829 = vmatpush1.msra.mxu0 0.0
    %1830 = vmatprep.subr.mxu0 0.0
    %1831 = vmatpush1.msra.mxu0 0.0
    %1832 = vmatprep.subr.mxu0 0.0
    %1833 = vmatpush1.msra.mxu0 0.0
    %1834 = vmatprep.subr.mxu0 0.0
    %1835 = vmatpush1.msra.mxu0 0.0
    %1836 = vmatprep.subr.mxu0 0.0
    %1837 = vmatpush1.msra.mxu0 0.0
    %1838 = vmatprep.subr.mxu0 0.0
    %1839 = vmatpush1.msra.mxu0 0.0
    %1840 = vmatprep.subr.mxu0 0.0
    %1841 = vmatpush1.msra.mxu0 0.0
    %1842 = vmatprep.subr.mxu0 0.0
    %1843 = vmatpush1.msra.mxu0 0.0
    %1844 = vmatprep.subr.mxu0 0.0
    %1845 = vmatpush1.msra.mxu0 0.0
    %1846 = vmatprep.subr.mxu0 0.0
    %1847 = vmatpush1.msra.mxu0 0.0
    %1848 = vmatprep.subr.mxu0 0.0
    %1849 = vmatpush1.msra.mxu0 0.0
    %1850 = vmatprep.subr.mxu0 0.0
    %1851 = vmatpush1.msra.mxu0 0.0
    %1852 = vmatprep.subr.mxu0 0.0
    %1853 = vmatpush1.msra.mxu0 0.0
    %1854 = vmatprep.subr.mxu0 0.0
    %1855 = vmatpush1.msra.mxu0 0.0
    %1856 = vmatprep.subr.mxu0 0.0
    %1857 = vmatpush1.msra.mxu0 0.0
    %1858 = vmatprep.subr.mxu0 0.0
    %1859 = vmatpush1.msra.mxu0 0.0
    %1860 = vmatprep.subr.mxu0 0.0
    %1861 = vmatpush1.msra.mxu0 0.0
    %1862 = vmatprep.subr.mxu0 0.0
    %1863 = vmatpush1.msra.mxu0 0.0
    %1864 = vmatprep.subr.mxu0 0.0
    %1865 = vmatpush1.msra.mxu0 0.0
    %1866 = vmatprep.mubr.f32.mxu0 0.0
    %v1867 = vand.u32 %v1421, 4294901760
    %1868 = vmatmul.mubr.f32.gmra.mrb[0].mxu0 %v1867
    %v1869 = vpop.f32.mrb[0].mxu0
    %v1870 = vadd.f32 %v1798, %v1869
    %v1871 = vpop.f32.mrb[0].mxu0
    %1872 = vdwg.mxu0
    %v1873 = vld [vmem:[%s2] sm:$0x1]
    %v1874 = vlaneseq
    %v1875 = vshrl.u32 %v1874, 7
    %v1876 = vsub.s32 0, %v1875
    %v1877 = vrot.slane %v1873, %v1876
    %v1878 = vadd.f32 %v1870, %v1877
    %v1879 = vld [vmem:[%s2 + $0x1] sm:$0x1]
    %v1880 = vld [vmem:[%s2 + $0x2] sm:$0x1]
    %v1881 = vsel %vm930, %v1878, 0.0
    %v1882 = vrot.slane %v1881, 4
    %v1883 = vadd.f32 %v1881, %v1882
    %v1884 = vrot.slane %v1883, 2
    %v1885 = vadd.f32 %v1883, %v1884
    %v1886 = vrot.slane %v1885, 1
    %v1887 = vadd.f32 %v1885, %v1886
    %v1888 = vrcp.pop 8.0
    %v1889 = vmul.f32 %v1887, %v1888
    %v1890 = vmul.f32 %v1878, %v1878
    %v1891 = vsel %vm930, %v1890, 0.0
    %v1892 = vrot.slane %v1891, 4
    %v1893 = vadd.f32 %v1891, %v1892
    %v1894 = vrot.slane %v1893, 2
    %v1895 = vadd.f32 %v1893, %v1894
    %v1896 = vrot.slane %v1895, 1
    %v1897 = vadd.f32 %v1895, %v1896
    %v1898 = vmul.f32 %v1897, %v1888
    %v1899 = vmul.f32 %v1889, %v1889
    %v1900 = vsub.f32 %v1898, %v1899
    %v1901 = vmax.f32 %v1900, 0.0
    %v1902 = vsub.f32 %v1878, %v1889
    %v1903 = vadd.f32 %v1901, 1e-05
    %v1904 = vrsqrt.pop %v1903
    %v1905 = vmul.f32 %v1902, %v1904
    %v1906 = vlaneseq
    %v1907 = vshrl.u32 %v1906, 7
    %v1908 = vsub.s32 0, %v1907
    %v1909 = vrot.slane %v1879, %v1908
    %v1910 = vmul.f32 %v1905, %v1909
    %v1911 = vlaneseq
    %v1912 = vshrl.u32 %v1911, 7
    %v1913 = vsub.s32 0, %v1912
    %v1914 = vrot.slane %v1880, %v1913
    %v1915 = vadd.f32 %v1910, %v1914
    %v1916 = vmax.f32 %v1915, 0.0
    %v1917 = vld [vmem:[%s1 + $0x128] sm:$0xff]
    %v1918 = vld [vmem:[%s1 + $0x130] sm:$0xff]
    %v1919 = vld [vmem:[%s1 + $0x138] sm:$0xff]
    %v1920 = vld [vmem:[%s1 + $0x140] sm:$0xff]
    %v1921 = vld [vmem:[%s2 + $0x3] sm:$0x1]
    %v1922 = vlaneseq
    %v1923 = vshrl.u32 %v1922, 7
    %v1924 = vsub.s32 0, %v1923
    %v1925 = vrot.slane %v1921, %v1924
    %v1927 = vsel %vm930, %v1916, 0
    %1929 = vmatprep.subr.mxu0 0.0
    %v1930 = vand.u32 %v1917, 4294901760
    %1931 = vmatpush1.msra.mxu0 %v1930
    %1932 = vmatprep.subr.mxu0 0.0
    %v1933 = vand.u32 %v1918, 4294901760
    %1934 = vmatpush1.msra.mxu0 %v1933
    %1935 = vmatprep.subr.mxu0 0.0
    %v1936 = vand.u32 %v1919, 4294901760
    %1937 = vmatpush1.msra.mxu0 %v1936
    %1938 = vmatprep.subr.mxu0 0.0
    %v1939 = vand.u32 %v1920, 4294901760
    %1940 = vmatpush1.msra.mxu0 %v1939
    %1941 = vmatprep.subr.mxu0 0.0
    %1942 = vmatpush1.msra.mxu0 0.0
    %1943 = vmatprep.subr.mxu0 0.0
    %1944 = vmatpush1.msra.mxu0 0.0
    %1945 = vmatprep.subr.mxu0 0.0
    %1946 = vmatpush1.msra.mxu0 0.0
    %1947 = vmatprep.subr.mxu0 0.0
    %1948 = vmatpush1.msra.mxu0 0.0
    %1949 = vmatprep.subr.mxu0 0.0
    %1950 = vmatpush1.msra.mxu0 0.0
    %1951 = vmatprep.subr.mxu0 0.0
    %1952 = vmatpush1.msra.mxu0 0.0
    %1953 = vmatprep.subr.mxu0 0.0
    %1954 = vmatpush1.msra.mxu0 0.0
    %1955 = vmatprep.subr.mxu0 0.0
    %1956 = vmatpush1.msra.mxu0 0.0
    %1957 = vmatprep.subr.mxu0 0.0
    %1958 = vmatpush1.msra.mxu0 0.0
    %1959 = vmatprep.subr.mxu0 0.0
    %1960 = vmatpush1.msra.mxu0 0.0
    %1961 = vmatprep.subr.mxu0 0.0
    %1962 = vmatpush1.msra.mxu0 0.0
    %1963 = vmatprep.subr.mxu0 0.0
    %1964 = vmatpush1.msra.mxu0 0.0
    %1965 = vmatprep.subr.mxu0 0.0
    %1966 = vmatpush1.msra.mxu0 0.0
    %1967 = vmatprep.subr.mxu0 0.0
    %1968 = vmatpush1.msra.mxu0 0.0
    %1969 = vmatprep.subr.mxu0 0.0
    %1970 = vmatpush1.msra.mxu0 0.0
    %1971 = vmatprep.subr.mxu0 0.0
    %1972 = vmatpush1.msra.mxu0 0.0
    %1973 = vmatprep.subr.mxu0 0.0
    %1974 = vmatpush1.msra.mxu0 0.0
    %1975 = vmatprep.subr.mxu0 0.0
    %1976 = vmatpush1.msra.mxu0 0.0
    %1977 = vmatprep.subr.mxu0 0.0
    %1978 = vmatpush1.msra.mxu0 0.0
    %1979 = vmatprep.subr.mxu0 0.0
    %1980 = vmatpush1.msra.mxu0 0.0
    %1981 = vmatprep.subr.mxu0 0.0
    %1982 = vmatpush1.msra.mxu0 0.0
    %1983 = vmatprep.subr.mxu0 0.0
    %1984 = vmatpush1.msra.mxu0 0.0
    %1985 = vmatprep.subr.mxu0 0.0
    %1986 = vmatpush1.msra.mxu0 0.0
    %1987 = vmatprep.subr.mxu0 0.0
    %1988 = vmatpush1.msra.mxu0 0.0
    %1989 = vmatprep.subr.mxu0 0.0
    %1990 = vmatpush1.msra.mxu0 0.0
    %1991 = vmatprep.subr.mxu0 0.0
    %1992 = vmatpush1.msra.mxu0 0.0
    %1993 = vmatprep.subr.mxu0 0.0
    %1994 = vmatpush1.msra.mxu0 0.0
    %1995 = vmatprep.subr.mxu0 0.0
    %1996 = vmatpush1.msra.mxu0 0.0
    %1997 = vmatprep.mubr.f32.mxu0 0.0
    %v1998 = vand.u32 %v1927, 4294901760
    %v1999 = vsub.f32 %v1927, %v1998
    %v2000 = vand.u32 %v1999, 4294901760
    %v2001 = vsub.f32 %v1999, %v2000
    %v2002 = vand.u32 %v2001, 4294901760
    %2003 = vmatmul.mubr.f32.gmra.mrb[0].mxu0 %v2002
    %v2004 = vpop.f32.mrb[0].mxu0
    %v2005 = vadd.f32 %v1925, %v2004
    %v2006 = vpop.f32.mrb[0].mxu0
    %2007 = vdwg.mxu0
    %2008 = vmatprep.subr.mxu0 0.0
    %v2009 = vand.u32 %v1917, 4294901760
    %v2010 = vsub.f32 %v1917, %v2009
    %v2011 = vand.u32 %v2010, 4294901760
    %v2012 = vsub.f32 %v2010, %v2011
    %v2013 = vand.u32 %v2012, 4294901760
    %2014 = vmatpush1.msra.mxu0 %v2013
    %2015 = vmatprep.subr.mxu0 0.0
    %v2016 = vand.u32 %v1918, 4294901760
    %v2017 = vsub.f32 %v1918, %v2016
    %v2018 = vand.u32 %v2017, 4294901760
    %v2019 = vsub.f32 %v2017, %v2018
    %v2020 = vand.u32 %v2019, 4294901760
    %2021 = vmatpush1.msra.mxu0 %v2020
    %2022 = vmatprep.subr.mxu0 0.0
    %v2023 = vand.u32 %v1919, 4294901760
    %v2024 = vsub.f32 %v1919, %v2023
    %v2025 = vand.u32 %v2024, 4294901760
    %v2026 = vsub.f32 %v2024, %v2025
    %v2027 = vand.u32 %v2026, 4294901760
    %2028 = vmatpush1.msra.mxu0 %v2027
    %2029 = vmatprep.subr.mxu0 0.0
    %v2030 = vand.u32 %v1920, 4294901760
    %v2031 = vsub.f32 %v1920, %v2030
    %v2032 = vand.u32 %v2031, 4294901760
    %v2033 = vsub.f32 %v2031, %v2032
    %v2034 = vand.u32 %v2033, 4294901760
    %2035 = vmatpush1.msra.mxu0 %v2034
    %2036 = vmatprep.subr.mxu0 0.0
    %2037 = vmatpush1.msra.mxu0 0.0
    %2038 = vmatprep.subr.mxu0 0.0
    %2039 = vmatpush1.msra.mxu0 0.0
    %2040 = vmatprep.subr.mxu0 0.0
    %2041 = vmatpush1.msra.mxu0 0.0
    %2042 = vmatprep.subr.mxu0 0.0
    %2043 = vmatpush1.msra.mxu0 0.0
    %2044 = vmatprep.subr.mxu0 0.0
    %2045 = vmatpush1.msra.mxu0 0.0
    %2046 = vmatprep.subr.mxu0 0.0
    %2047 = vmatpush1.msra.mxu0 0.0
    %2048 = vmatprep.subr.mxu0 0.0
    %2049 = vmatpush1.msra.mxu0 0.0
    %2050 = vmatprep.subr.mxu0 0.0
    %2051 = vmatpush1.msra.mxu0 0.0
    %2052 = vmatprep.subr.mxu0 0.0
    %2053 = vmatpush1.msra.mxu0 0.0
    %2054 = vmatprep.subr.mxu0 0.0
    %2055 = vmatpush1.msra.mxu0 0.0
    %2056 = vmatprep.subr.mxu0 0.0
    %2057 = vmatpush1.msra.mxu0 0.0
    %2058 = vmatprep.subr.mxu0 0.0
    %2059 = vmatpush1.msra.mxu0 0.0
    %2060 = vmatprep.subr.mxu0 0.0
    %2061 = vmatpush1.msra.mxu0 0.0
    %2062 = vmatprep.subr.mxu0 0.0
    %2063 = vmatpush1.msra.mxu0 0.0
    %2064 = vmatprep.subr.mxu0 0.0
    %2065 = vmatpush1.msra.mxu0 0.0
    %2066 = vmatprep.subr.mxu0 0.0
    %2067 = vmatpush1.msra.mxu0 0.0
    %2068 = vmatprep.subr.mxu0 0.0
    %2069 = vmatpush1.msra.mxu0 0.0
    %2070 = vmatprep.subr.mxu0 0.0
    %2071 = vmatpush1.msra.mxu0 0.0
    %2072 = vmatprep.subr.mxu0 0.0
    %2073 = vmatpush1.msra.mxu0 0.0
    %2074 = vmatprep.subr.mxu0 0.0
    %2075 = vmatpush1.msra.mxu0 0.0
    %2076 = vmatprep.subr.mxu0 0.0
    %2077 = vmatpush1.msra.mxu0 0.0
    %2078 = vmatprep.subr.mxu0 0.0
    %2079 = vmatpush1.msra.mxu0 0.0
    %2080 = vmatprep.subr.mxu0 0.0
    %2081 = vmatpush1.msra.mxu0 0.0
    %2082 = vmatprep.subr.mxu0 0.0
    %2083 = vmatpush1.msra.mxu0 0.0
    %2084 = vmatprep.subr.mxu0 0.0
    %2085 = vmatpush1.msra.mxu0 0.0
    %2086 = vmatprep.subr.mxu0 0.0
    %2087 = vmatpush1.msra.mxu0 0.0
    %2088 = vmatprep.subr.mxu0 0.0
    %2089 = vmatpush1.msra.mxu0 0.0
    %2090 = vmatprep.subr.mxu0 0.0
    %2091 = vmatpush1.msra.mxu0 0.0
    %2092 = vmatprep.mubr.f32.mxu0 0.0
    %v2093 = vand.u32 %v1927, 4294901760
    %2094 = vmatmul.mubr.f32.gmra.mrb[0].mxu0 %v2093
    %v2095 = vpop.f32.mrb[0].mxu0
    %v2096 = vadd.f32 %v2005, %v2095
    %v2097 = vpop.f32.mrb[0].mxu0
    %2098 = vdwg.mxu0
    %2099 = vmatprep.subr.mxu0 0.0
    %v2100 = vand.u32 %v1917, 4294901760
    %v2101 = vsub.f32 %v1917, %v2100
    %2102 = vmatpush1.msra.mxu0 %v2101
    %2103 = vmatprep.subr.mxu0 0.0
    %v2104 = vand.u32 %v1918, 4294901760
    %v2105 = vsub.f32 %v1918, %v2104
    %2106 = vmatpush1.msra.mxu0 %v2105
    %2107 = vmatprep.subr.mxu0 0.0
    %v2108 = vand.u32 %v1919, 4294901760
    %v2109 = vsub.f32 %v1919, %v2108
    %2110 = vmatpush1.msra.mxu0 %v2109
    %2111 = vmatprep.subr.mxu0 0.0
    %v2112 = vand.u32 %v1920, 4294901760
    %v2113 = vsub.f32 %v1920, %v2112
    %2114 = vmatpush1.msra.mxu0 %v2113
    %2115 = vmatprep.subr.mxu0 0.0
    %2116 = vmatpush1.msra.mxu0 0.0
    %2117 = vmatprep.subr.mxu0 0.0
    %2118 = vmatpush1.msra.mxu0 0.0
    %2119 = vmatprep.subr.mxu0 0.0
    %2120 = vmatpush1.msra.mxu0 0.0
    %2121 = vmatprep.subr.mxu0 0.0
    %2122 = vmatpush1.msra.mxu0 0.0
    %2123 = vmatprep.subr.mxu0 0.0
    %2124 = vmatpush1.msra.mxu0 0.0
    %2125 = vmatprep.subr.mxu0 0.0
    %2126 = vmatpush1.msra.mxu0 0.0
    %2127 = vmatprep.subr.mxu0 0.0
    %2128 = vmatpush1.msra.mxu0 0.0
    %2129 = vmatprep.subr.mxu0 0.0
    %2130 = vmatpush1.msra.mxu0 0.0
    %2131 = vmatprep.subr.mxu0 0.0
    %2132 = vmatpush1.msra.mxu0 0.0
    %2133 = vmatprep.subr.mxu0 0.0
    %2134 = vmatpush1.msra.mxu0 0.0
    %2135 = vmatprep.subr.mxu0 0.0
    %2136 = vmatpush1.msra.mxu0 0.0
    %2137 = vmatprep.subr.mxu0 0.0
    %2138 = vmatpush1.msra.mxu0 0.0
    %2139 = vmatprep.subr.mxu0 0.0
    %2140 = vmatpush1.msra.mxu0 0.0
    %2141 = vmatprep.subr.mxu0 0.0
    %2142 = vmatpush1.msra.mxu0 0.0
    %2143 = vmatprep.subr.mxu0 0.0
    %2144 = vmatpush1.msra.mxu0 0.0
    %2145 = vmatprep.subr.mxu0 0.0
    %2146 = vmatpush1.msra.mxu0 0.0
    %2147 = vmatprep.subr.mxu0 0.0
    %2148 = vmatpush1.msra.mxu0 0.0
    %2149 = vmatprep.subr.mxu0 0.0
    %2150 = vmatpush1.msra.mxu0 0.0
    %2151 = vmatprep.subr.mxu0 0.0
    %2152 = vmatpush1.msra.mxu0 0.0
    %2153 = vmatprep.subr.mxu0 0.0
    %2154 = vmatpush1.msra.mxu0 0.0
    %2155 = vmatprep.subr.mxu0 0.0
    %2156 = vmatpush1.msra.mxu0 0.0
    %2157 = vmatprep.subr.mxu0 0.0
    %2158 = vmatpush1.msra.mxu0 0.0
    %2159 = vmatprep.subr.mxu0 0.0
    %2160 = vmatpush1.msra.mxu0 0.0
    %2161 = vmatprep.subr.mxu0 0.0
    %2162 = vmatpush1.msra.mxu0 0.0
    %2163 = vmatprep.subr.mxu0 0.0
    %2164 = vmatpush1.msra.mxu0 0.0
    %2165 = vmatprep.subr.mxu0 0.0
    %2166 = vmatpush1.msra.mxu0 0.0
    %2167 = vmatprep.subr.mxu0 0.0
    %2168 = vmatpush1.msra.mxu0 0.0
    %2169 = vmatprep.subr.mxu0 0.0
    %2170 = vmatpush1.msra.mxu0 0.0
    %2171 = vmatprep.mubr.f32.mxu0 0.0
    %v2172 = vand.u32 %v1927, 4294901760
    %v2173 = vsub.f32 %v1927, %v2172
    %2174 = vmatmul.mubr.f32.gmra.mrb[0].mxu0 %v2173
    %v2175 = vpop.f32.mrb[0].mxu0
    %v2176 = vadd.f32 %v2096, %v2175
    %v2177 = vpop.f32.mrb[0].mxu0
    %2178 = vdwg.mxu0
    %2179 = vmatprep.subr.mxu0 0.0
    %v2180 = vand.u32 %v1917, 4294901760
    %2181 = vmatpush1.msra.mxu0 %v2180
    %2182 = vmatprep.subr.mxu0 0.0
    %v2183 = vand.u32 %v1918, 4294901760
    %2184 = vmatpush1.msra.mxu0 %v2183
    %2185 = vmatprep.subr.mxu0 0.0
    %v2186 = vand.u32 %v1919, 4294901760
    %2187 = vmatpush1.msra.mxu0 %v2186
    %2188 = vmatprep.subr.mxu0 0.0
    %v2189 = vand.u32 %v1920, 4294901760
    %2190 = vmatpush1.msra.mxu0 %v2189
    %2191 = vmatprep.subr.mxu0 0.0
    %2192 = vmatpush1.msra.mxu0 0.0
    %2193 = vmatprep.subr.mxu0 0.0
    %2194 = vmatpush1.msra.mxu0 0.0
    %2195 = vmatprep.subr.mxu0 0.0
    %2196 = vmatpush1.msra.mxu0 0.0
    %2197 = vmatprep.subr.mxu0 0.0
    %2198 = vmatpush1.msra.mxu0 0.0
    %2199 = vmatprep.subr.mxu0 0.0
    %2200 = vmatpush1.msra.mxu0 0.0
    %2201 = vmatprep.subr.mxu0 0.0
    %2202 = vmatpush1.msra.mxu0 0.0
    %2203 = vmatprep.subr.mxu0 0.0
    %2204 = vmatpush1.msra.mxu0 0.0
    %2205 = vmatprep.subr.mxu0 0.0
    %2206 = vmatpush1.msra.mxu0 0.0
    %2207 = vmatprep.subr.mxu0 0.0
    %2208 = vmatpush1.msra.mxu0 0.0
    %2209 = vmatprep.subr.mxu0 0.0
    %2210 = vmatpush1.msra.mxu0 0.0
    %2211 = vmatprep.subr.mxu0 0.0
    %2212 = vmatpush1.msra.mxu0 0.0
    %2213 = vmatprep.subr.mxu0 0.0
    %2214 = vmatpush1.msra.mxu0 0.0
    %2215 = vmatprep.subr.mxu0 0.0
    %2216 = vmatpush1.msra.mxu0 0.0
    %2217 = vmatprep.subr.mxu0 0.0
    %2218 = vmatpush1.msra.mxu0 0.0
    %2219 = vmatprep.subr.mxu0 0.0
    %2220 = vmatpush1.msra.mxu0 0.0
    %2221 = vmatprep.subr.mxu0 0.0
    %2222 = vmatpush1.msra.mxu0 0.0
    %2223 = vmatprep.subr.mxu0 0.0
    %2224 = vmatpush1.msra.mxu0 0.0
    %2225 = vmatprep.subr.mxu0 0.0
    %2226 = vmatpush1.msra.mxu0 0.0
    %2227 = vmatprep.subr.mxu0 0.0
    %2228 = vmatpush1.msra.mxu0 0.0
    %2229 = vmatprep.subr.mxu0 0.0
    %2230 = vmatpush1.msra.mxu0 0.0
    %2231 = vmatprep.subr.mxu0 0.0
    %2232 = vmatpush1.msra.mxu0 0.0
    %2233 = vmatprep.subr.mxu0 0.0
    %2234 = vmatpush1.msra.mxu0 0.0
    %2235 = vmatprep.subr.mxu0 0.0
    %2236 = vmatpush1.msra.mxu0 0.0
    %2237 = vmatprep.subr.mxu0 0.0
    %2238 = vmatpush1.msra.mxu0 0.0
    %2239 = vmatprep.subr.mxu0 0.0
    %2240 = vmatpush1.msra.mxu0 0.0
    %2241 = vmatprep.subr.mxu0 0.0
    %2242 = vmatpush1.msra.mxu0 0.0
    %2243 = vmatprep.subr.mxu0 0.0
    %2244 = vmatpush1.msra.mxu0 0.0
    %2245 = vmatprep.subr.mxu0 0.0
    %2246 = vmatpush1.msra.mxu0 0.0
    %2247 = vmatprep.mubr.f32.mxu0 0.0
    %v2248 = vand.u32 %v1927, 4294901760
    %v2249 = vsub.f32 %v1927, %v2248
    %v2250 = vand.u32 %v2249, 4294901760
    %2251 = vmatmul.mubr.f32.gmra.mrb[0].mxu0 %v2250
    %v2252 = vpop.f32.mrb[0].mxu0
    %v2253 = vadd.f32 %v2176, %v2252
    %v2254 = vpop.f32.mrb[0].mxu0
    %2255 = vdwg.mxu0
    %2256 = vmatprep.subr.mxu0 0.0
    %v2257 = vand.u32 %v1917, 4294901760
    %v2258 = vsub.f32 %v1917, %v2257
    %v2259 = vand.u32 %v2258, 4294901760
    %2260 = vmatpush1.msra.mxu0 %v2259
    %2261 = vmatprep.subr.mxu0 0.0
    %v2262 = vand.u32 %v1918, 4294901760
    %v2263 = vsub.f32 %v1918, %v2262
    %v2264 = vand.u32 %v2263, 4294901760
    %2265 = vmatpush1.msra.mxu0 %v2264
    %2266 = vmatprep.subr.mxu0 0.0
    %v2267 = vand.u32 %v1919, 4294901760
    %v2268 = vsub.f32 %v1919, %v2267
    %v2269 = vand.u32 %v2268, 4294901760
    %2270 = vmatpush1.msra.mxu0 %v2269
    %2271 = vmatprep.subr.mxu0 0.0
    %v2272 = vand.u32 %v1920, 4294901760
    %v2273 = vsub.f32 %v1920, %v2272
    %v2274 = vand.u32 %v2273, 4294901760
    %2275 = vmatpush1.msra.mxu0 %v2274
    %2276 = vmatprep.subr.mxu0 0.0
    %2277 = vmatpush1.msra.mxu0 0.0
    %2278 = vmatprep.subr.mxu0 0.0
    %2279 = vmatpush1.msra.mxu0 0.0
    %2280 = vmatprep.subr.mxu0 0.0
    %2281 = vmatpush1.msra.mxu0 0.0
    %2282 = vmatprep.subr.mxu0 0.0
    %2283 = vmatpush1.msra.mxu0 0.0
    %2284 = vmatprep.subr.mxu0 0.0
    %2285 = vmatpush1.msra.mxu0 0.0
    %2286 = vmatprep.subr.mxu0 0.0
    %2287 = vmatpush1.msra.mxu0 0.0
    %2288 = vmatprep.subr.mxu0 0.0
    %2289 = vmatpush1.msra.mxu0 0.0
    %2290 = vmatprep.subr.mxu0 0.0
    %2291 = vmatpush1.msra.mxu0 0.0
    %2292 = vmatprep.subr.mxu0 0.0
    %2293 = vmatpush1.msra.mxu0 0.0
    %2294 = vmatprep.subr.mxu0 0.0
    %2295 = vmatpush1.msra.mxu0 0.0
    %2296 = vmatprep.subr.mxu0 0.0
    %2297 = vmatpush1.msra.mxu0 0.0
    %2298 = vmatprep.subr.mxu0 0.0
    %2299 = vmatpush1.msra.mxu0 0.0
    %2300 = vmatprep.subr.mxu0 0.0
    %2301 = vmatpush1.msra.mxu0 0.0
    %2302 = vmatprep.subr.mxu0 0.0
    %2303 = vmatpush1.msra.mxu0 0.0
    %2304 = vmatprep.subr.mxu0 0.0
    %2305 = vmatpush1.msra.mxu0 0.0
    %2306 = vmatprep.subr.mxu0 0.0
    %2307 = vmatpush1.msra.mxu0 0.0
    %2308 = vmatprep.subr.mxu0 0.0
    %2309 = vmatpush1.msra.mxu0 0.0
    %2310 = vmatprep.subr.mxu0 0.0
    %2311 = vmatpush1.msra.mxu0 0.0
    %2312 = vmatprep.subr.mxu0 0.0
    %2313 = vmatpush1.msra.mxu0 0.0
    %2314 = vmatprep.subr.mxu0 0.0
    %2315 = vmatpush1.msra.mxu0 0.0
    %2316 = vmatprep.subr.mxu0 0.0
    %2317 = vmatpush1.msra.mxu0 0.0
    %2318 = vmatprep.subr.mxu0 0.0
    %2319 = vmatpush1.msra.mxu0 0.0
    %2320 = vmatprep.subr.mxu0 0.0
    %2321 = vmatpush1.msra.mxu0 0.0
    %2322 = vmatprep.subr.mxu0 0.0
    %2323 = vmatpush1.msra.mxu0 0.0
    %2324 = vmatprep.subr.mxu0 0.0
    %2325 = vmatpush1.msra.mxu0 0.0
    %2326 = vmatprep.subr.mxu0 0.0
    %2327 = vmatpush1.msra.mxu0 0.0
    %2328 = vmatprep.subr.mxu0 0.0
    %2329 = vmatpush1.msra.mxu0 0.0
    %2330 = vmatprep.subr.mxu0 0.0
    %2331 = vmatpush1.msra.mxu0 0.0
    %2332 = vmatprep.mubr.f32.mxu0 0.0
    %v2333 = vand.u32 %v1927, 4294901760
    %2334 = vmatmul.mubr.f32.gmra.mrb[0].mxu0 %v2333
    %v2335 = vpop.f32.mrb[0].mxu0
    %v2336 = vadd.f32 %v2253, %v2335
    %v2337 = vpop.f32.mrb[0].mxu0
    %2338 = vdwg.mxu0
    %2339 = vmatprep.subr.mxu0 0.0
    %v2340 = vand.u32 %v1917, 4294901760
    %2341 = vmatpush1.msra.mxu0 %v2340
    %2342 = vmatprep.subr.mxu0 0.0
    %v2343 = vand.u32 %v1918, 4294901760
    %2344 = vmatpush1.msra.mxu0 %v2343
    %2345 = vmatprep.subr.mxu0 0.0
    %v2346 = vand.u32 %v1919, 4294901760
    %2347 = vmatpush1.msra.mxu0 %v2346
    %2348 = vmatprep.subr.mxu0 0.0
    %v2349 = vand.u32 %v1920, 4294901760
    %2350 = vmatpush1.msra.mxu0 %v2349
    %2351 = vmatprep.subr.mxu0 0.0
    %2352 = vmatpush1.msra.mxu0 0.0
    %2353 = vmatprep.subr.mxu0 0.0
    %2354 = vmatpush1.msra.mxu0 0.0
    %2355 = vmatprep.subr.mxu0 0.0
    %2356 = vmatpush1.msra.mxu0 0.0
    %2357 = vmatprep.subr.mxu0 0.0
    %2358 = vmatpush1.msra.mxu0 0.0
    %2359 = vmatprep.subr.mxu0 0.0
    %2360 = vmatpush1.msra.mxu0 0.0
    %2361 = vmatprep.subr.mxu0 0.0
    %2362 = vmatpush1.msra.mxu0 0.0
    %2363 = vmatprep.subr.mxu0 0.0
    %2364 = vmatpush1.msra.mxu0 0.0
    %2365 = vmatprep.subr.mxu0 0.0
    %2366 = vmatpush1.msra.mxu0 0.0
    %2367 = vmatprep.subr.mxu0 0.0
    %2368 = vmatpush1.msra.mxu0 0.0
    %2369 = vmatprep.subr.mxu0 0.0
    %2370 = vmatpush1.msra.mxu0 0.0
    %2371 = vmatprep.subr.mxu0 0.0
    %2372 = vmatpush1.msra.mxu0 0.0
    %2373 = vmatprep.subr.mxu0 0.0
    %2374 = vmatpush1.msra.mxu0 0.0
    %2375 = vmatprep.subr.mxu0 0.0
    %2376 = vmatpush1.msra.mxu0 0.0
    %2377 = vmatprep.subr.mxu0 0.0
    %2378 = vmatpush1.msra.mxu0 0.0
    %2379 = vmatprep.subr.mxu0 0.0
    %2380 = vmatpush1.msra.mxu0 0.0
    %2381 = vmatprep.subr.mxu0 0.0
    %2382 = vmatpush1.msra.mxu0 0.0
    %2383 = vmatprep.subr.mxu0 0.0
    %2384 = vmatpush1.msra.mxu0 0.0
    %2385 = vmatprep.subr.mxu0 0.0
    %2386 = vmatpush1.msra.mxu0 0.0
    %2387 = vmatprep.subr.mxu0 0.0
    %2388 = vmatpush1.msra.mxu0 0.0
    %2389 = vmatprep.subr.mxu0 0.0
    %2390 = vmatpush1.msra.mxu0 0.0
    %2391 = vmatprep.subr.mxu0 0.0
    %2392 = vmatpush1.msra.mxu0 0.0
    %2393 = vmatprep.subr.mxu0 0.0
    %2394 = vmatpush1.msra.mxu0 0.0
    %2395 = vmatprep.subr.mxu0 0.0
    %2396 = vmatpush1.msra.mxu0 0.0
    %2397 = vmatprep.subr.mxu0 0.0
    %2398 = vmatpush1.msra.mxu0 0.0
    %2399 = vmatprep.subr.mxu0 0.0
    %2400 = vmatpush1.msra.mxu0 0.0
    %2401 = vmatprep.subr.mxu0 0.0
    %2402 = vmatpush1.msra.mxu0 0.0
    %2403 = vmatprep.subr.mxu0 0.0
    %2404 = vmatpush1.msra.mxu0 0.0
    %2405 = vmatprep.subr.mxu0 0.0
    %2406 = vmatpush1.msra.mxu0 0.0
    %2407 = vmatprep.mubr.f32.mxu0 0.0
    %v2408 = vand.u32 %v1927, 4294901760
    %2409 = vmatmul.mubr.f32.gmra.mrb[0].mxu0 %v2408
    %v2410 = vpop.f32.mrb[0].mxu0
    %v2411 = vadd.f32 %v2336, %v2410
    %v2412 = vpop.f32.mrb[0].mxu0
    %2413 = vdwg.mxu0
    %v2414 = vld [vmem:[%s2 + $0x4] sm:$0x1]
    %v2415 = vld [vmem:[%s2 + $0x5] sm:$0x1]
    %v2416 = vsel %vm930, %v2411, 0.0
    %v2417 = vrot.slane %v2416, 4
    %v2418 = vadd.f32 %v2416, %v2417
    %v2419 = vrot.slane %v2418, 2
    %v2420 = vadd.f32 %v2418, %v2419
    %v2421 = vrot.slane %v2420, 1
    %v2422 = vadd.f32 %v2420, %v2421
    %v2423 = vmul.f32 %v2422, %v1888
    %v2424 = vmul.f32 %v2411, %v2411
    %v2425 = vsel %vm930, %v2424, 0.0
    %v2426 = vrot.slane %v2425, 4
    %v2427 = vadd.f32 %v2425, %v2426
    %v2428 = vrot.slane %v2427, 2
    %v2429 = vadd.f32 %v2427, %v2428
    %v2430 = vrot.slane %v2429, 1
    %v2431 = vadd.f32 %v2429, %v2430
    %v2432 = vmul.f32 %v2431, %v1888
    %v2433 = vmul.f32 %v2423, %v2423
    %v2434 = vsub.f32 %v2432, %v2433
    %v2435 = vmax.f32 %v2434, 0.0
    %v2436 = vsub.f32 %v2411, %v2423
    %v2437 = vadd.f32 %v2435, 1e-05
    %v2438 = vrsqrt.pop %v2437
    %v2439 = vmul.f32 %v2436, %v2438
    %v2440 = vlaneseq
    %v2441 = vshrl.u32 %v2440, 7
    %v2442 = vsub.s32 0, %v2441
    %v2443 = vrot.slane %v2414, %v2442
    %v2444 = vmul.f32 %v2439, %v2443
    %v2445 = vlaneseq
    %v2446 = vshrl.u32 %v2445, 7
    %v2447 = vsub.s32 0, %v2446
    %v2448 = vrot.slane %v2415, %v2447
    %v2449 = vadd.f32 %v2444, %v2448
    %v2450 = vmax.f32 %v2449, 0.0
    %v2451 = vld [vmem:[%s1 + $0x148] sm:$0xff]
    %v2452 = vld [vmem:[%s1 + $0x150] sm:$0xff]
    %v2453 = vld [vmem:[%s1 + $0x158] sm:$0xff]
    %v2454 = vld [vmem:[%s1 + $0x160] sm:$0xff]
    %v2455 = vld [vmem:[%s2 + $0x6] sm:$0x1]
    %v2456 = vlaneseq
    %v2457 = vshrl.u32 %v2456, 7
    %v2458 = vsub.s32 0, %v2457
    %v2459 = vrot.slane %v2455, %v2458
    %v2461 = vsel %vm930, %v2450, 0
    %2463 = vmatprep.subr.mxu0 0.0
    %v2464 = vand.u32 %v2451, 4294901760
    %2465 = vmatpush1.msra.mxu0 %v2464
    %2466 = vmatprep.subr.mxu0 0.0
    %v2467 = vand.u32 %v2452, 4294901760
    %2468 = vmatpush1.msra.mxu0 %v2467
    %2469 = vmatprep.subr.mxu0 0.0
    %v2470 = vand.u32 %v2453, 4294901760
    %2471 = vmatpush1.msra.mxu0 %v2470
    %2472 = vmatprep.subr.mxu0 0.0
    %v2473 = vand.u32 %v2454, 4294901760
    %2474 = vmatpush1.msra.mxu0 %v2473
    %2475 = vmatprep.subr.mxu0 0.0
    %2476 = vmatpush1.msra.mxu0 0.0
    %2477 = vmatprep.subr.mxu0 0.0
    %2478 = vmatpush1.msra.mxu0 0.0
    %2479 = vmatprep.subr.mxu0 0.0
    %2480 = vmatpush1.msra.mxu0 0.0
    %2481 = vmatprep.subr.mxu0 0.0
    %2482 = vmatpush1.msra.mxu0 0.0
    %2483 = vmatprep.subr.mxu0 0.0
    %2484 = vmatpush1.msra.mxu0 0.0
    %2485 = vmatprep.subr.mxu0 0.0
    %2486 = vmatpush1.msra.mxu0 0.0
    %2487 = vmatprep.subr.mxu0 0.0
    %2488 = vmatpush1.msra.mxu0 0.0
    %2489 = vmatprep.subr.mxu0 0.0
    %2490 = vmatpush1.msra.mxu0 0.0
    %2491 = vmatprep.subr.mxu0 0.0
    %2492 = vmatpush1.msra.mxu0 0.0
    %2493 = vmatprep.subr.mxu0 0.0
    %2494 = vmatpush1.msra.mxu0 0.0
    %2495 = vmatprep.subr.mxu0 0.0
    %2496 = vmatpush1.msra.mxu0 0.0
    %2497 = vmatprep.subr.mxu0 0.0
    %2498 = vmatpush1.msra.mxu0 0.0
    %2499 = vmatprep.subr.mxu0 0.0
    %2500 = vmatpush1.msra.mxu0 0.0
    %2501 = vmatprep.subr.mxu0 0.0
    %2502 = vmatpush1.msra.mxu0 0.0
    %2503 = vmatprep.subr.mxu0 0.0
    %2504 = vmatpush1.msra.mxu0 0.0
    %2505 = vmatprep.subr.mxu0 0.0
    %2506 = vmatpush1.msra.mxu0 0.0
    %2507 = vmatprep.subr.mxu0 0.0
    %2508 = vmatpush1.msra.mxu0 0.0
    %2509 = vmatprep.subr.mxu0 0.0
    %2510 = vmatpush1.msra.mxu0 0.0
    %2511 = vmatprep.subr.mxu0 0.0
    %2512 = vmatpush1.msra.mxu0 0.0
    %2513 = vmatprep.subr.mxu0 0.0
    %2514 = vmatpush1.msra.mxu0 0.0
    %2515 = vmatprep.subr.mxu0 0.0
    %2516 = vmatpush1.msra.mxu0 0.0
    %2517 = vmatprep.subr.mxu0 0.0
    %2518 = vmatpush1.msra.mxu0 0.0
    %2519 = vmatprep.subr.mxu0 0.0
    %2520 = vmatpush1.msra.mxu0 0.0
    %2521 = vmatprep.subr.mxu0 0.0
    %2522 = vmatpush1.msra.mxu0 0.0
    %2523 = vmatprep.subr.mxu0 0.0
    %2524 = vmatpush1.msra.mxu0 0.0
    %2525 = vmatprep.subr.mxu0 0.0
    %2526 = vmatpush1.msra.mxu0 0.0
    %2527 = vmatprep.subr.mxu0 0.0
    %2528 = vmatpush1.msra.mxu0 0.0
    %2529 = vmatprep.subr.mxu0 0.0
    %2530 = vmatpush1.msra.mxu0 0.0
    %2531 = vmatprep.mubr.f32.mxu0 0.0
    %v2532 = vand.u32 %v2461, 4294901760
    %v2533 = vsub.f32 %v2461, %v2532
    %v2534 = vand.u32 %v2533, 4294901760
    %v2535 = vsub.f32 %v2533, %v2534
    %v2536 = vand.u32 %v2535, 4294901760
    %2537 = vmatmul.mubr.f32.gmra.mrb[0].mxu0 %v2536
    %v2538 = vpop.f32.mrb[0].mxu0
    %v2539 = vadd.f32 %v2459, %v2538
    %v2540 = vpop.f32.mrb[0].mxu0
    %2541 = vdwg.mxu0
    %2542 = vmatprep.subr.mxu0 0.0
    %v2543 = vand.u32 %v2451, 4294901760
    %v2544 = vsub.f32 %v2451, %v2543
    %v2545 = vand.u32 %v2544, 4294901760
    %v2546 = vsub.f32 %v2544, %v2545
    %v2547 = vand.u32 %v2546, 4294901760
    %2548 = vmatpush1.msra.mxu0 %v2547
    %2549 = vmatprep.subr.mxu0 0.0
    %v2550 = vand.u32 %v2452, 4294901760
    %v2551 = vsub.f32 %v2452, %v2550
    %v2552 = vand.u32 %v2551, 4294901760
    %v2553 = vsub.f32 %v2551, %v2552
    %v2554 = vand.u32 %v2553, 4294901760
    %2555 = vmatpush1.msra.mxu0 %v2554
    %2556 = vmatprep.subr.mxu0 0.0
    %v2557 = vand.u32 %v2453, 4294901760
    %v2558 = vsub.f32 %v2453, %v2557
    %v2559 = vand.u32 %v2558, 4294901760
    %v2560 = vsub.f32 %v2558, %v2559
    %v2561 = vand.u32 %v2560, 4294901760
    %2562 = vmatpush1.msra.mxu0 %v2561
    %2563 = vmatprep.subr.mxu0 0.0
    %v2564 = vand.u32 %v2454, 4294901760
    %v2565 = vsub.f32 %v2454, %v2564
    %v2566 = vand.u32 %v2565, 4294901760
    %v2567 = vsub.f32 %v2565, %v2566
    %v2568 = vand.u32 %v2567, 4294901760
    %2569 = vmatpush1.msra.mxu0 %v2568
    %2570 = vmatprep.subr.mxu0 0.0
    %2571 = vmatpush1.msra.mxu0 0.0
    %2572 = vmatprep.subr.mxu0 0.0
    %2573 = vmatpush1.msra.mxu0 0.0
    %2574 = vmatprep.subr.mxu0 0.0
    %2575 = vmatpush1.msra.mxu0 0.0
    %2576 = vmatprep.subr.mxu0 0.0
    %2577 = vmatpush1.msra.mxu0 0.0
    %2578 = vmatprep.subr.mxu0 0.0
    %2579 = vmatpush1.msra.mxu0 0.0
    %2580 = vmatprep.subr.mxu0 0.0
    %2581 = vmatpush1.msra.mxu0 0.0
    %2582 = vmatprep.subr.mxu0 0.0
    %2583 = vmatpush1.msra.mxu0 0.0
    %2584 = vmatprep.subr.mxu0 0.0
    %2585 = vmatpush1.msra.mxu0 0.0
    %2586 = vmatprep.subr.mxu0 0.0
    %2587 = vmatpush1.msra.mxu0 0.0
    %2588 = vmatprep.subr.mxu0 0.0
    %2589 = vmatpush1.msra.mxu0 0.0
    %2590 = vmatprep.subr.mxu0 0.0
    %2591 = vmatpush1.msra.mxu0 0.0
    %2592 = vmatprep.subr.mxu0 0.0
    %2593 = vmatpush1.msra.mxu0 0.0
    %2594 = vmatprep.subr.mxu0 0.0
    %2595 = vmatpush1.msra.mxu0 0.0
    %2596 = vmatprep.subr.mxu0 0.0
    %2597 = vmatpush1.msra.mxu0 0.0
    %2598 = vmatprep.subr.mxu0 0.0
    %2599 = vmatpush1.msra.mxu0 0.0
    %2600 = vmatprep.subr.mxu0 0.0
    %2601 = vmatpush1.msra.mxu0 0.0
    %2602 = vmatprep.subr.mxu0 0.0
    %2603 = vmatpush1.msra.mxu0 0.0
    %2604 = vmatprep.subr.mxu0 0.0
    %2605 = vmatpush1.msra.mxu0 0.0
    %2606 = vmatprep.subr.mxu0 0.0
    %2607 = vmatpush1.msra.mxu0 0.0
    %2608 = vmatprep.subr.mxu0 0.0
    %2609 = vmatpush1.msra.mxu0 0.0
    %2610 = vmatprep.subr.mxu0 0.0
    %2611 = vmatpush1.msra.mxu0 0.0
    %2612 = vmatprep.subr.mxu0 0.0
    %2613 = vmatpush1.msra.mxu0 0.0
    %2614 = vmatprep.subr.mxu0 0.0
    %2615 = vmatpush1.msra.mxu0 0.0
    %2616 = vmatprep.subr.mxu0 0.0
    %2617 = vmatpush1.msra.mxu0 0.0
    %2618 = vmatprep.subr.mxu0 0.0
    %2619 = vmatpush1.msra.mxu0 0.0
    %2620 = vmatprep.subr.mxu0 0.0
    %2621 = vmatpush1.msra.mxu0 0.0
    %2622 = vmatprep.subr.mxu0 0.0
    %2623 = vmatpush1.msra.mxu0 0.0
    %2624 = vmatprep.subr.mxu0 0.0
    %2625 = vmatpush1.msra.mxu0 0.0
    %2626 = vmatprep.mubr.f32.mxu0 0.0
    %v2627 = vand.u32 %v2461, 4294901760
    %2628 = vmatmul.mubr.f32.gmra.mrb[0].mxu0 %v2627
    %v2629 = vpop.f32.mrb[0].mxu0
    %v2630 = vadd.f32 %v2539, %v2629
    %v2631 = vpop.f32.mrb[0].mxu0
    %2632 = vdwg.mxu0
    %2633 = vmatprep.subr.mxu0 0.0
    %v2634 = vand.u32 %v2451, 4294901760
    %v2635 = vsub.f32 %v2451, %v2634
    %2636 = vmatpush1.msra.mxu0 %v2635
    %2637 = vmatprep.subr.mxu0 0.0
    %v2638 = vand.u32 %v2452, 4294901760
    %v2639 = vsub.f32 %v2452, %v2638
    %2640 = vmatpush1.msra.mxu0 %v2639
    %2641 = vmatprep.subr.mxu0 0.0
    %v2642 = vand.u32 %v2453, 4294901760
    %v2643 = vsub.f32 %v2453, %v2642
    %2644 = vmatpush1.msra.mxu0 %v2643
    %2645 = vmatprep.subr.mxu0 0.0
    %v2646 = vand.u32 %v2454, 4294901760
    %v2647 = vsub.f32 %v2454, %v2646
    %2648 = vmatpush1.msra.mxu0 %v2647
    %2649 = vmatprep.subr.mxu0 0.0
    %2650 = vmatpush1.msra.mxu0 0.0
    %2651 = vmatprep.subr.mxu0 0.0
    %2652 = vmatpush1.msra.mxu0 0.0
    %2653 = vmatprep.subr.mxu0 0.0
    %2654 = vmatpush1.msra.mxu0 0.0
    %2655 = vmatprep.subr.mxu0 0.0
    %2656 = vmatpush1.msra.mxu0 0.0
    %2657 = vmatprep.subr.mxu0 0.0
    %2658 = vmatpush1.msra.mxu0 0.0
    %2659 = vmatprep.subr.mxu0 0.0
    %2660 = vmatpush1.msra.mxu0 0.0
    %2661 = vmatprep.subr.mxu0 0.0
    %2662 = vmatpush1.msra.mxu0 0.0
    %2663 = vmatprep.subr.mxu0 0.0
    %2664 = vmatpush1.msra.mxu0 0.0
    %2665 = vmatprep.subr.mxu0 0.0
    %2666 = vmatpush1.msra.mxu0 0.0
    %2667 = vmatprep.subr.mxu0 0.0
    %2668 = vmatpush1.msra.mxu0 0.0
    %2669 = vmatprep.subr.mxu0 0.0
    %2670 = vmatpush1.msra.mxu0 0.0
    %2671 = vmatprep.subr.mxu0 0.0
    %2672 = vmatpush1.msra.mxu0 0.0
    %2673 = vmatprep.subr.mxu0 0.0
    %2674 = vmatpush1.msra.mxu0 0.0
    %2675 = vmatprep.subr.mxu0 0.0
    %2676 = vmatpush1.msra.mxu0 0.0
    %2677 = vmatprep.subr.mxu0 0.0
    %2678 = vmatpush1.msra.mxu0 0.0
    %2679 = vmatprep.subr.mxu0 0.0
    %2680 = vmatpush1.msra.mxu0 0.0
    %2681 = vmatprep.subr.mxu0 0.0
    %2682 = vmatpush1.msra.mxu0 0.0
    %2683 = vmatprep.subr.mxu0 0.0
    %2684 = vmatpush1.msra.mxu0 0.0
    %2685 = vmatprep.subr.mxu0 0.0
    %2686 = vmatpush1.msra.mxu0 0.0
    %2687 = vmatprep.subr.mxu0 0.0
    %2688 = vmatpush1.msra.mxu0 0.0
    %2689 = vmatprep.subr.mxu0 0.0
    %2690 = vmatpush1.msra.mxu0 0.0
    %2691 = vmatprep.subr.mxu0 0.0
    %2692 = vmatpush1.msra.mxu0 0.0
    %2693 = vmatprep.subr.mxu0 0.0
    %2694 = vmatpush1.msra.mxu0 0.0
    %2695 = vmatprep.subr.mxu0 0.0
    %2696 = vmatpush1.msra.mxu0 0.0
    %2697 = vmatprep.subr.mxu0 0.0
    %2698 = vmatpush1.msra.mxu0 0.0
    %2699 = vmatprep.subr.mxu0 0.0
    %2700 = vmatpush1.msra.mxu0 0.0
    %2701 = vmatprep.subr.mxu0 0.0
    %2702 = vmatpush1.msra.mxu0 0.0
    %2703 = vmatprep.subr.mxu0 0.0
    %2704 = vmatpush1.msra.mxu0 0.0
    %2705 = vmatprep.mubr.f32.mxu0 0.0
    %v2706 = vand.u32 %v2461, 4294901760
    %v2707 = vsub.f32 %v2461, %v2706
    %2708 = vmatmul.mubr.f32.gmra.mrb[0].mxu0 %v2707
    %v2709 = vpop.f32.mrb[0].mxu0
    %v2710 = vadd.f32 %v2630, %v2709
    %v2711 = vpop.f32.mrb[0].mxu0
    %2712 = vdwg.mxu0
    %2713 = vmatprep.subr.mxu0 0.0
    %v2714 = vand.u32 %v2451, 4294901760
    %2715 = vmatpush1.msra.mxu0 %v2714
    %2716 = vmatprep.subr.mxu0 0.0
    %v2717 = vand.u32 %v2452, 4294901760
    %2718 = vmatpush1.msra.mxu0 %v2717
    %2719 = vmatprep.subr.mxu0 0.0
    %v2720 = vand.u32 %v2453, 4294901760
    %2721 = vmatpush1.msra.mxu0 %v2720
    %2722 = vmatprep.subr.mxu0 0.0
    %v2723 = vand.u32 %v2454, 4294901760
    %2724 = vmatpush1.msra.mxu0 %v2723
    %2725 = vmatprep.subr.mxu0 0.0
    %2726 = vmatpush1.msra.mxu0 0.0
    %2727 = vmatprep.subr.mxu0 0.0
    %2728 = vmatpush1.msra.mxu0 0.0
    %2729 = vmatprep.subr.mxu0 0.0
    %2730 = vmatpush1.msra.mxu0 0.0
    %2731 = vmatprep.subr.mxu0 0.0
    %2732 = vmatpush1.msra.mxu0 0.0
    %2733 = vmatprep.subr.mxu0 0.0
    %2734 = vmatpush1.msra.mxu0 0.0
    %2735 = vmatprep.subr.mxu0 0.0
    %2736 = vmatpush1.msra.mxu0 0.0
    %2737 = vmatprep.subr.mxu0 0.0
    %2738 = vmatpush1.msra.mxu0 0.0
    %2739 = vmatprep.subr.mxu0 0.0
    %2740 = vmatpush1.msra.mxu0 0.0
    %2741 = vmatprep.subr.mxu0 0.0
    %2742 = vmatpush1.msra.mxu0 0.0
    %2743 = vmatprep.subr.mxu0 0.0
    %2744 = vmatpush1.msra.mxu0 0.0
    %2745 = vmatprep.subr.mxu0 0.0
    %2746 = vmatpush1.msra.mxu0 0.0
    %2747 = vmatprep.subr.mxu0 0.0
    %2748 = vmatpush1.msra.mxu0 0.0
    %2749 = vmatprep.subr.mxu0 0.0
    %2750 = vmatpush1.msra.mxu0 0.0
    %2751 = vmatprep.subr.mxu0 0.0
    %2752 = vmatpush1.msra.mxu0 0.0
    %2753 = vmatprep.subr.mxu0 0.0
    %2754 = vmatpush1.msra.mxu0 0.0
    %2755 = vmatprep.subr.mxu0 0.0
    %2756 = vmatpush1.msra.mxu0 0.0
    %2757 = vmatprep.subr.mxu0 0.0
    %2758 = vmatpush1.msra.mxu0 0.0
    %2759 = vmatprep.subr.mxu0 0.0
    %2760 = vmatpush1.msra.mxu0 0.0
    %2761 = vmatprep.subr.mxu0 0.0
    %2762 = vmatpush1.msra.mxu0 0.0
    %2763 = vmatprep.subr.mxu0 0.0
    %2764 = vmatpush1.msra.mxu0 0.0
    %2765 = vmatprep.subr.mxu0 0.0
    %2766 = vmatpush1.msra.mxu0 0.0
    %2767 = vmatprep.subr.mxu0 0.0
    %2768 = vmatpush1.msra.mxu0 0.0
    %2769 = vmatprep.subr.mxu0 0.0
    %2770 = vmatpush1.msra.mxu0 0.0
    %2771 = vmatprep.subr.mxu0 0.0
    %2772 = vmatpush1.msra.mxu0 0.0
    %2773 = vmatprep.subr.mxu0 0.0
    %2774 = vmatpush1.msra.mxu0 0.0
    %2775 = vmatprep.subr.mxu0 0.0
    %2776 = vmatpush1.msra.mxu0 0.0
    %2777 = vmatprep.subr.mxu0 0.0
    %2778 = vmatpush1.msra.mxu0 0.0
    %2779 = vmatprep.subr.mxu0 0.0
    %2780 = vmatpush1.msra.mxu0 0.0
    %2781 = vmatprep.mubr.f32.mxu0 0.0
    %v2782 = vand.u32 %v2461, 4294901760
    %v2783 = vsub.f32 %v2461, %v2782
    %v2784 = vand.u32 %v2783, 4294901760
    %2785 = vmatmul.mubr.f32.gmra.mrb[0].mxu0 %v2784
    %v2786 = vpop.f32.mrb[0].mxu0
    %v2787 = vadd.f32 %v2710, %v2786
    %v2788 = vpop.f32.mrb[0].mxu0
    %2789 = vdwg.mxu0
    %2790 = vmatprep.subr.mxu0 0.0
    %v2791 = vand.u32 %v2451, 4294901760
    %v2792 = vsub.f32 %v2451, %v2791
    %v2793 = vand.u32 %v2792, 4294901760
    %2794 = vmatpush1.msra.mxu0 %v2793
    %2795 = vmatprep.subr.mxu0 0.0
    %v2796 = vand.u32 %v2452, 4294901760
    %v2797 = vsub.f32 %v2452, %v2796
    %v2798 = vand.u32 %v2797, 4294901760
    %2799 = vmatpush1.msra.mxu0 %v2798
    %2800 = vmatprep.subr.mxu0 0.0
    %v2801 = vand.u32 %v2453, 4294901760
    %v2802 = vsub.f32 %v2453, %v2801
    %v2803 = vand.u32 %v2802, 4294901760
    %2804 = vmatpush1.msra.mxu0 %v2803
    %2805 = vmatprep.subr.mxu0 0.0
    %v2806 = vand.u32 %v2454, 4294901760
    %v2807 = vsub.f32 %v2454, %v2806
    %v2808 = vand.u32 %v2807, 4294901760
    %2809 = vmatpush1.msra.mxu0 %v2808
    %2810 = vmatprep.subr.mxu0 0.0
    %2811 = vmatpush1.msra.mxu0 0.0
    %2812 = vmatprep.subr.mxu0 0.0
    %2813 = vmatpush1.msra.mxu0 0.0
    %2814 = vmatprep.subr.mxu0 0.0
    %2815 = vmatpush1.msra.mxu0 0.0
    %2816 = vmatprep.subr.mxu0 0.0
    %2817 = vmatpush1.msra.mxu0 0.0
    %2818 = vmatprep.subr.mxu0 0.0
    %2819 = vmatpush1.msra.mxu0 0.0
    %2820 = vmatprep.subr.mxu0 0.0
    %2821 = vmatpush1.msra.mxu0 0.0
    %2822 = vmatprep.subr.mxu0 0.0
    %2823 = vmatpush1.msra.mxu0 0.0
    %2824 = vmatprep.subr.mxu0 0.0
    %2825 = vmatpush1.msra.mxu0 0.0
    %2826 = vmatprep.subr.mxu0 0.0
    %2827 = vmatpush1.msra.mxu0 0.0
    %2828 = vmatprep.subr.mxu0 0.0
    %2829 = vmatpush1.msra.mxu0 0.0
    %2830 = vmatprep.subr.mxu0 0.0
    %2831 = vmatpush1.msra.mxu0 0.0
    %2832 = vmatprep.subr.mxu0 0.0
    %2833 = vmatpush1.msra.mxu0 0.0
    %2834 = vmatprep.subr.mxu0 0.0
    %2835 = vmatpush1.msra.mxu0 0.0
    %2836 = vmatprep.subr.mxu0 0.0
    %2837 = vmatpush1.msra.mxu0 0.0
    %2838 = vmatprep.subr.mxu0 0.0
    %2839 = vmatpush1.msra.mxu0 0.0
    %2840 = vmatprep.subr.mxu0 0.0
    %2841 = vmatpush1.msra.mxu0 0.0
    %2842 = vmatprep.subr.mxu0 0.0
    %2843 = vmatpush1.msra.mxu0 0.0
    %2844 = vmatprep.subr.mxu0 0.0
    %2845 = vmatpush1.msra.mxu0 0.0
    %2846 = vmatprep.subr.mxu0 0.0
    %2847 = vmatpush1.msra.mxu0 0.0
    %2848 = vmatprep.subr.mxu0 0.0
    %2849 = vmatpush1.msra.mxu0 0.0
    %2850 = vmatprep.subr.mxu0 0.0
    %2851 = vmatpush1.msra.mxu0 0.0
    %2852 = vmatprep.subr.mxu0 0.0
    %2853 = vmatpush1.msra.mxu0 0.0
    %2854 = vmatprep.subr.mxu0 0.0
    %2855 = vmatpush1.msra.mxu0 0.0
    %2856 = vmatprep.subr.mxu0 0.0
    %2857 = vmatpush1.msra.mxu0 0.0
    %2858 = vmatprep.subr.mxu0 0.0
    %2859 = vmatpush1.msra.mxu0 0.0
    %2860 = vmatprep.subr.mxu0 0.0
    %2861 = vmatpush1.msra.mxu0 0.0
    %2862 = vmatprep.subr.mxu0 0.0
    %2863 = vmatpush1.msra.mxu0 0.0
    %2864 = vmatprep.subr.mxu0 0.0
    %2865 = vmatpush1.msra.mxu0 0.0
    %2866 = vmatprep.mubr.f32.mxu0 0.0
    %v2867 = vand.u32 %v2461, 4294901760
    %2868 = vmatmul.mubr.f32.gmra.mrb[0].mxu0 %v2867
    %v2869 = vpop.f32.mrb[0].mxu0
    %v2870 = vadd.f32 %v2787, %v2869
    %v2871 = vpop.f32.mrb[0].mxu0
    %2872 = vdwg.mxu0
    %2873 = vmatprep.subr.mxu0 0.0
    %v2874 = vand.u32 %v2451, 4294901760
    %2875 = vmatpush1.msra.mxu0 %v2874
    %2876 = vmatprep.subr.mxu0 0.0
    %v2877 = vand.u32 %v2452, 4294901760
    %2878 = vmatpush1.msra.mxu0 %v2877
    %2879 = vmatprep.subr.mxu0 0.0
    %v2880 = vand.u32 %v2453, 4294901760
    %2881 = vmatpush1.msra.mxu0 %v2880
    %2882 = vmatprep.subr.mxu0 0.0
    %v2883 = vand.u32 %v2454, 4294901760
    %2884 = vmatpush1.msra.mxu0 %v2883
    %2885 = vmatprep.subr.mxu0 0.0
    %2886 = vmatpush1.msra.mxu0 0.0
    %2887 = vmatprep.subr.mxu0 0.0
    %2888 = vmatpush1.msra.mxu0 0.0
    %2889 = vmatprep.subr.mxu0 0.0
    %2890 = vmatpush1.msra.mxu0 0.0
    %2891 = vmatprep.subr.mxu0 0.0
    %2892 = vmatpush1.msra.mxu0 0.0
    %2893 = vmatprep.subr.mxu0 0.0
    %2894 = vmatpush1.msra.mxu0 0.0
    %2895 = vmatprep.subr.mxu0 0.0
    %2896 = vmatpush1.msra.mxu0 0.0
    %2897 = vmatprep.subr.mxu0 0.0
    %2898 = vmatpush1.msra.mxu0 0.0
    %2899 = vmatprep.subr.mxu0 0.0
    %2900 = vmatpush1.msra.mxu0 0.0
    %2901 = vmatprep.subr.mxu0 0.0
    %2902 = vmatpush1.msra.mxu0 0.0
    %2903 = vmatprep.subr.mxu0 0.0
    %2904 = vmatpush1.msra.mxu0 0.0
    %2905 = vmatprep.subr.mxu0 0.0
    %2906 = vmatpush1.msra.mxu0 0.0
    %2907 = vmatprep.subr.mxu0 0.0
    %2908 = vmatpush1.msra.mxu0 0.0
    %2909 = vmatprep.subr.mxu0 0.0
    %2910 = vmatpush1.msra.mxu0 0.0
    %2911 = vmatprep.subr.mxu0 0.0
    %2912 = vmatpush1.msra.mxu0 0.0
    %2913 = vmatprep.subr.mxu0 0.0
    %2914 = vmatpush1.msra.mxu0 0.0
    %2915 = vmatprep.subr.mxu0 0.0
    %2916 = vmatpush1.msra.mxu0 0.0
    %2917 = vmatprep.subr.mxu0 0.0
    %2918 = vmatpush1.msra.mxu0 0.0
    %2919 = vmatprep.subr.mxu0 0.0
    %2920 = vmatpush1.msra.mxu0 0.0
    %2921 = vmatprep.subr.mxu0 0.0
    %2922 = vmatpush1.msra.mxu0 0.0
    %2923 = vmatprep.subr.mxu0 0.0
    %2924 = vmatpush1.msra.mxu0 0.0
    %2925 = vmatprep.subr.mxu0 0.0
    %2926 = vmatpush1.msra.mxu0 0.0
    %2927 = vmatprep.subr.mxu0 0.0
    %2928 = vmatpush1.msra.mxu0 0.0
    %2929 = vmatprep.subr.mxu0 0.0
    %2930 = vmatpush1.msra.mxu0 0.0
    %2931 = vmatprep.subr.mxu0 0.0
    %2932 = vmatpush1.msra.mxu0 0.0
    %2933 = vmatprep.subr.mxu0 0.0
    %2934 = vmatpush1.msra.mxu0 0.0
    %2935 = vmatprep.subr.mxu0 0.0
    %2936 = vmatpush1.msra.mxu0 0.0
    %2937 = vmatprep.subr.mxu0 0.0
    %2938 = vmatpush1.msra.mxu0 0.0
    %2939 = vmatprep.subr.mxu0 0.0
    %2940 = vmatpush1.msra.mxu0 0.0
    %2941 = vmatprep.mubr.f32.mxu0 0.0
    %v2942 = vand.u32 %v2461, 4294901760
    %2943 = vmatmul.mubr.f32.gmra.mrb[0].mxu0 %v2942
    %v2944 = vpop.f32.mrb[0].mxu0
    %v2945 = vadd.f32 %v2870, %v2944
    %v2946 = vpop.f32.mrb[0].mxu0
    %2947 = vdwg.mxu0
    %v2948 = vmin.f32 %v2945, 20.0
    %v2949 = vmul.f32 %v2948, 1.442695
    %v2950 = vpow.pop %v2949
    %v2951 = vadd.f32 %v2950, 1.0
    %vm2952 = vcmp.eq.f32.partialorder %v2951, 1.0
    %v2953 = vlog2.pop %v2951
    %v2954 = vmul.f32 %v2953, 0.6931472
    %v2955 = vsub.f32 %v2951, 1.0
    %v2956 = vrcp.pop %v2955
    %v2957 = vmul.f32 %v2955, %v2956
    %v2958 = vsub.f32 2.0, %v2957
    %v2959 = vmul.f32 %v2956, %v2958
    %v2960 = vmul.f32 %v2950, %v2959
    %v2961 = vmul.f32 %v2954, %v2960
    %v2962 = vsel %vm2952, %v2950, %v2961
    %vm2963 = vcmp.gt.f32.partialorder %v2945, 20.0
    %v2964 = vsel %vm2963, %v2945, %v2962
    %v2965 = vmax.f32 %v2964, 1.19e-07
    %vm2966 = vcmask 31744
    %2967 = vst.msk [vmem:[%s3] sm:$0xff] %vm2966, %v2965
    %2969 = vrot.lane.b32.xlu0 %v2965, 126
    %v2970 = vpop.permute.xlu0 %2969
    %v2972 = vadd.f32 %v2965, %v2970
    %v2973 = vadd.f32 %v2965, 5.5
    %v2974 = vadd.f32 %v2965, 0.5
    %v2975 = vlog2.pop %v2973
    %v2976 = vmul.f32 %v2975, 0.6931472
    %v2977 = vmul.f32 %v2974, %v2976
    %v2978 = vsub.f32 %v2973, %v2977
    %v2979 = vadd.f32 %v2965, 1.0
    %v2980 = vrcp.pop %v2979
    %v2981 = vmul.f32 %v2979, %v2980
    %v2982 = vsub.f32 2.0, %v2981
    %v2983 = vmul.f32 %v2980, %v2982
    %v2984 = vmul.f32 %v2983, 76.18009
    %v2985 = vadd.f32 %v2965, 2.0
    %v2986 = vrcp.pop %v2985
    %v2987 = vmul.f32 %v2985, %v2986
    %v2988 = vsub.f32 2.0, %v2987
    %v2989 = vmul.f32 %v2986, %v2988
    %v2990 = vmul.f32 %v2989, -86.50532
    %v2991 = vadd.f32 %v2965, 3.0
    %v2992 = vrcp.pop %v2991
    %v2993 = vmul.f32 %v2991, %v2992
    %v2994 = vsub.f32 2.0, %v2993
    %v2995 = vmul.f32 %v2992, %v2994
    %v2996 = vmul.f32 %v2995, 24.0141
    %v2997 = vadd.f32 %v2965, 4.0
    %v2998 = vrcp.pop %v2997
    %v2999 = vmul.f32 %v2997, %v2998
    %v3000 = vsub.f32 2.0, %v2999
    %v3001 = vmul.f32 %v2998, %v3000
    %v3002 = vmul.f32 %v3001, -1.2317395
    %v3003 = vadd.f32 %v2965, 5.0
    %v3004 = vrcp.pop %v3003
    %v3005 = vmul.f32 %v3003, %v3004
    %v3006 = vsub.f32 2.0, %v3005
    %v3007 = vmul.f32 %v3004, %v3006
    %v3008 = vmul.f32 %v3007, 0.001208651
    %v3009 = vadd.f32 %v2965, 6.0
    %v3010 = vrcp.pop %v3009
    %v3011 = vmul.f32 %v3009, %v3010
    %v3012 = vsub.f32 2.0, %v3011
    %v3013 = vmul.f32 %v3010, %v3012
    %v3014 = vmul.f32 %v3013, -5.3952394e-06
    %v3015 = vadd.f32 %v2984, %v2990
    %v3016 = vadd.f32 %v2996, %v3002
    %v3017 = vadd.f32 %v3015, %v3016
    %v3018 = vadd.f32 %v3017, 1.0
    %v3019 = vadd.f32 %v3008, %v3014
    %v3020 = vadd.f32 %v3018, %v3019
    %v3021 = vsub.f32 0.0, %v2978
    %v3022 = vmul.f32 %v3020, 2.5066283
    %v3023 = vlog2.pop %v3022
    %v3024 = vmul.f32 %v3023, 0.6931472
    %v3025 = vadd.f32 %v3021, %v3024
    %v3026 = vlog2.pop %v2965
    %v3027 = vmul.f32 %v3026, 0.6931472
    %v3028 = vsub.f32 %v3025, %v3027
    %v3029 = vadd.f32 %v2972, 5.5
    %v3030 = vadd.f32 %v2972, 0.5
    %v3031 = vlog2.pop %v3029
    %v3032 = vmul.f32 %v3031, 0.6931472
    %v3033 = vmul.f32 %v3030, %v3032
    %v3034 = vsub.f32 %v3029, %v3033
    %v3035 = vadd.f32 %v2972, 1.0
    %v3036 = vrcp.pop %v3035
    %v3037 = vmul.f32 %v3035, %v3036
    %v3038 = vsub.f32 2.0, %v3037
    %v3039 = vmul.f32 %v3036, %v3038
    %v3040 = vmul.f32 %v3039, 76.18009
    %v3041 = vadd.f32 %v2972, 2.0
    %v3042 = vrcp.pop %v3041
    %v3043 = vmul.f32 %v3041, %v3042
    %v3044 = vsub.f32 2.0, %v3043
    %v3045 = vmul.f32 %v3042, %v3044
    %v3046 = vmul.f32 %v3045, -86.50532
    %v3047 = vadd.f32 %v2972, 3.0
    %v3048 = vrcp.pop %v3047
    %v3049 = vmul.f32 %v3047, %v3048
    %v3050 = vsub.f32 2.0, %v3049
    %v3051 = vmul.f32 %v3048, %v3050
    %v3052 = vmul.f32 %v3051, 24.0141
    %v3053 = vadd.f32 %v2972, 4.0
    %v3054 = vrcp.pop %v3053
    %v3055 = vmul.f32 %v3053, %v3054
    %v3056 = vsub.f32 2.0, %v3055
    %v3057 = vmul.f32 %v3054, %v3056
    %v3058 = vmul.f32 %v3057, -1.2317395
    %v3059 = vadd.f32 %v2972, 5.0
    %v3060 = vrcp.pop %v3059
    %v3061 = vmul.f32 %v3059, %v3060
    %v3062 = vsub.f32 2.0, %v3061
    %v3063 = vmul.f32 %v3060, %v3062
    %v3064 = vmul.f32 %v3063, 0.001208651
    %v3065 = vadd.f32 %v2972, 6.0
    %v3066 = vrcp.pop %v3065
    %v3067 = vmul.f32 %v3065, %v3066
    %v3068 = vsub.f32 2.0, %v3067
    %v3069 = vmul.f32 %v3066, %v3068
    %v3070 = vmul.f32 %v3069, -5.3952394e-06
    %v3071 = vadd.f32 %v3040, %v3046
    %v3072 = vadd.f32 %v3052, %v3058
    %v3073 = vadd.f32 %v3071, %v3072
    %v3074 = vadd.f32 %v3073, 1.0
    %v3075 = vadd.f32 %v3064, %v3070
    %v3076 = vadd.f32 %v3074, %v3075
    %v3077 = vsub.f32 0.0, %v3034
    %v3078 = vmul.f32 %v3076, 2.5066283
    %v3079 = vlog2.pop %v3078
    %v3080 = vmul.f32 %v3079, 0.6931472
    %v3081 = vadd.f32 %v3077, %v3080
    %v3082 = vlog2.pop %v2972
    %v3083 = vmul.f32 %v3082, 0.6931472
    %v3084 = vsub.f32 %v3081, %v3083
    %v3085 = vmax.f32 %v17, 1.19e-07
    %v3086 = vmin.f32 %v3085, 0.9999999
    %vm3087 = vcmp.lt.s32.totalorder %v20, 2
    %v3088 = vlog2.pop %v3086
    %v3089 = vmul.f32 %v3088, 0.6931472
    %v3090 = vsub.f32 1.0, %v3086
    %v3091 = vlog2.pop %v3090
    %v3092 = vmul.f32 %v3091, 0.6931472
    %3094 = vset.pattern.permute.xlu0 0
    %3095 = vperm.xlu0 %3094, %v3089
    %v3096 = vpop.permute.xlu0 %3095
    %3099 = vset.pattern.permute.xlu0 0
    %3100 = vperm.xlu0 %3099, %v3092
    %v3101 = vpop.permute.xlu0 %3100
    %v3103 = vsel %vm3087, %v3096, %v3101
    %v3104 = vsub.f32 %v2965, 1.0
    %v3105 = vmul.f32 %v3104, %v3103
    %v3106 = vsub.f32 %v3105, %v3028
    %v3107 = vsel %vm2966, %v3106, 0.0
    %3108 = vadd.xlane.f32.xlu0 %v3107
    %v3109 = vpop.xlane.xlu0 %3108
    %v3110 = vrot.slane %v3109, 4
    %v3111 = vadd.f32 %v3109, %v3110
    %v3112 = vrot.slane %v3111, 2
    %v3113 = vadd.f32 %v3111, %v3112
    %v3114 = vrot.slane %v3113, 1
    %v3115 = vadd.f32 %v3113, %v3114
    %s3116 = vtos %v3115
    %v3117 = vstv %s3116
    %vm3118 = vcmask 15360
    %v3119 = vsel %vm3118, %v3084, 0.0
    %3120 = vadd.xlane.f32.xlu0 %v3119
    %v3121 = vpop.xlane.xlu0 %3120
    %v3122 = vrot.slane %v3121, 4
    %v3123 = vadd.f32 %v3121, %v3122
    %v3124 = vrot.slane %v3123, 2
    %v3125 = vadd.f32 %v3123, %v3124
    %v3126 = vrot.slane %v3125, 1
    %v3127 = vadd.f32 %v3125, %v3126
    %s3128 = vtos %v3127
    %v3129 = vstv %s3128
    %v3130 = vadd.f32 %v3117, %v3129
    %v3131 = vsub.f32 0.0, %v3130
    %v3132 = vmul.f32 %v3131, 0.0625
    %vm3133 = vcmask 0
    %3134 = vst.msk [vmem:[#allocation2] sm:$0x1] %vm3133, %v3132
    // Predicated region
    $region14: #{beta_forward.1} parent=1 // pred_check
      _
    $region15: #{beta_forward.1} parent=1 // pred_check_branch
      %3136 = sbr.rel (0) target = $region17
    $region16: #{beta_forward.1} parent=1 // pred_region
      _
    $region17: #{beta_forward.1} parent=1 // pred_fallthru
      _
    // Predicated region
    $region18: #{beta_forward.1} parent=1 // pred_check
      _
    $region19: #{beta_forward.1} parent=1 // pred_check_branch
      %3138 = sbr.rel (0) target = $region21
    $region20: #{beta_forward.1} parent=1 // pred_region
      %s3140 = ssub.s32 16, 16
      %3141 = vsyncadd [#allocation3], %s3140
      %s3143 = sshll.u32 [#allocation2], 4
      %s3144 = int_to_ptr.vmem [resolvable:$true] %s3143
      %3146 = dma.vmem_to_hbm [thread:$0]  %s3144, 16, %s4, [#allocation3]
    $region21: #{beta_forward.1} parent=1 // pred_fallthru
      _
    // Predicated region
    $region22: #{beta_forward.1} parent=1 // pred_check
      _
    $region23: #{beta_forward.1} parent=1 // pred_check_branch
      %3148 = sbr.rel (0) target = $region25
    $region24: #{beta_forward.1} parent=1 // pred_region
      _
    $region25: #{beta_forward.1} parent=1 // pred_fallthru
      _
    // Predicated region
    $region26: #{beta_forward.1} parent=1 // pred_check
      _
    $region27: #{beta_forward.1} parent=1 // pred_check_branch
      %3150 = sbr.rel (0) target = $region29
    $region28: #{beta_forward.1} parent=1 // pred_region
      %3151 = dma.done [#allocation3], 16
    $region29: #{beta_forward.1} parent=1 // pred_fallthru
      _
    %3152 = vsyncpa [#allocation3], 1

</llo_original>
